<compile_context>
chip_gen: v7x
topology: tpu7x:2x2x1
jax: 0.10.0
libtpu: 0.0.40
codegen_flags: <defaults>
</compile_context>

<pallas_src>
import functools
import math

import jax
import jax.numpy as jnp
import numpy as np
from jax.experimental import pallas as pl
from jax.experimental.pallas import tpu as pltpu

# -----------------------------------------------------------------------------
# Irreps description (synthetic, deterministic): "4x0e + 4x1e + 2x2e"
#   num_irreps = 4 + 4 + 2 = 10 ; dim = 4*1 + 4*3 + 2*5 = 26
# -----------------------------------------------------------------------------
IRREPS = [(4, 0), (4, 1), (2, 2)]  # (multiplicity, l)
DROP_PROB = 0.5

_LANE = 128
_HBM_STEP_TARGET = 4 << 20    # ~4 MiB of x+out+mask HBM traffic per grid step
_VMEM_TILE_BUDGET = 12 << 20  # budget for the double-buffered row tiles


def _round_up(x, m):
    return ((x + m - 1) // m) * m


def irreps_meta(irreps):
    num_irreps = sum(mul for mul, _ in irreps)
    dim = sum(mul * (2 * l + 1) for mul, l in irreps)
    return num_irreps, dim


def _base_expansion(irreps):
    """E[i, d] = 1 iff feature dim d belongs to irrep instance i."""
    num_irreps, dim = irreps_meta(irreps)
    e = np.zeros((num_irreps, dim), dtype=np.float32)
    row, col = 0, 0
    for mul, l in irreps:
        width = 2 * l + 1
        for _ in range(mul):
            e[row, col:col + width] = 1.0
            row += 1
            col += width
    return e


def _folded_expansion(irreps, fold):
    """Block-diagonal expansion for `fold` consecutive rows folded into lanes."""
    e = _base_expansion(irreps)
    ni, dim = e.shape
    ef = np.zeros((fold * ni, fold * dim), dtype=np.float32)
    for j in range(fold):
        ef[j * ni:(j + 1) * ni, j * dim:(j + 1) * dim] = e
    return ef


# -----------------------------------------------------------------------------
# Kernel: one row-tile per grid step.
#   mask_ref   : (T, WM)  bf16   per-irrep keep bits (0/1)
#   x_ref      : (T, WX)  x.dtype
#   expand_ref : (WM, WX) bf16   resident irrep->component expansion (0/1)
#   out_ref    : (T, WX)  x.dtype
# -----------------------------------------------------------------------------
def _equivariant_dropout_kernel(mask_ref, x_ref, expand_ref, out_ref, *, scale):
    # Broadcast the per-irrep keep bit to every (2l+1) component on the MXU
    # (free filler in this HBM-bound kernel); result is exactly 0.0 / 1.0.
    keep_full = jnp.dot(mask_ref[...], expand_ref[...],
                        preferred_element_type=jnp.float32)
    # 1/(1-p) applied once in f32 (not bf16-exact for arbitrary p).
    mask_full = keep_full * jnp.float32(scale)
    out_ref[...] = (x_ref[...].astype(jnp.float32) * mask_full).astype(out_ref.dtype)


def _pick_tile_rows(n_rows, row_hbm_bytes, row_vmem_bytes, align):
    t_vmem = max(1, _VMEM_TILE_BUDGET // (2 * row_vmem_bytes))
    t_hbm = max(1, _HBM_STEP_TARGET // max(1, row_hbm_bytes))
    t = min(t_vmem, t_hbm)
    # Keep >= 2 grid steps (both v7x TensorCores busy) when N allows it.
    if n_rows >= 2 * align:
        t = min(t, _round_up((n_rows + 1) // 2, align))
    t = max(align, (t // align) * align)
    if t >= n_rows:
        return n_rows   # full extent: exempt from the sublane-multiple rule
    return t


def _dropout_2d(mask2d, x2d, expand, *, scale, tile_rows, vmem_limit_bytes):
    n, wx = x2d.shape
    wm = mask2d.shape[1]
    grid = (pl.cdiv(n, tile_rows),)
    kernel = functools.partial(_equivariant_dropout_kernel, scale=scale)

    x_bytes = jnp.dtype(x2d.dtype).itemsize
    m_bytes = jnp.dtype(mask2d.dtype).itemsize
    e_bytes = jnp.dtype(expand.dtype).itemsize
    cost = pl.CostEstimate(
        flops=2 * n * wm * wx + 2 * n * wx,
        transcendentals=0,
        bytes_accessed=(n * wx * x_bytes * 2            # x in + out
                        + n * wm * m_bytes              # keep bits
                        + expand.shape[0] * expand.shape[1] * e_bytes),
    )
    return pl.pallas_call(
        kernel,
        out_shape=jax.ShapeDtypeStruct((n, wx), x2d.dtype),
        grid=grid,
        in_specs=[
            pl.BlockSpec((tile_rows, wm), lambda i: (i, 0)),   # keep bits
            pl.BlockSpec((tile_rows, wx), lambda i: (i, 0)),   # x tile
            pl.BlockSpec(expand.shape, lambda i: (0, 0)),      # expansion (resident)
        ],
        out_specs=pl.BlockSpec((tile_rows, wx), lambda i: (i, 0)),
        compiler_params=pltpu.CompilerParams(
            dimension_semantics=("parallel",),                 # megacore on v7x
            vmem_limit_bytes=int(vmem_limit_bytes),
        ),
        cost_estimate=cost,
    )(mask2d, x2d, expand)


def equivariant_dropout(x, key, *, irreps=IRREPS, drop_prob=DROP_PROB,
                        training=True):
    """Forward pass of EquivariantDropout.  x: (N, irreps.dim)."""
    if (not training) or drop_prob == 0.0:
        return x
    if drop_prob >= 1.0:                     # torch.nn.Dropout(1.0) -> zeros
        return jnp.zeros_like(x)

    num_irreps, dim = irreps_meta(irreps)
    n_rows, xdim = x.shape
    assert xdim == dim, (xdim, dim)
    if n_rows == 0:
        return x
    scale = 1.0 / (1.0 - float(drop_prob))

    # torch.nn.Dropout on a ones-mask: 0 w.p. p, else 1/(1-p). Keep bits are
    # exact in bf16; the scale is applied in f32 inside the kernel.
    # TODO(synk): draw the keep bits in-kernel (pltpu.prng_seed seeded per
    # program_id + pltpu.prng_random_bits) once the in-kernel PRNG path is
    # qualified; that removes this (N, num_irreps) HBM stream entirely.
    keep = jax.random.bernoulli(key, 1.0 - drop_prob, (n_rows, num_irreps))
    keep = keep.astype(jnp.bfloat16)

    # Lane-dense fold: merge `fold` consecutive rows into the lane axis so the
    # last dim becomes an exact multiple of 128 with zero padding bytes.
    fold = _LANE // math.gcd(dim, _LANE)
    exp_fold_bytes = (fold * num_irreps) * (fold * dim) * 2
    use_fold = (fold > 1 and n_rows % fold == 0 and exp_fold_bytes <= (4 << 20))

    if use_fold:
        expand_np = _folded_expansion(irreps, fold)
        x2 = x.reshape(n_rows // fold, fold * dim)            # free reshape
        m2 = keep.reshape(n_rows // fold, fold * num_irreps)  # free reshape
    else:
        # Unpadded layout: block last dims equal the full array dims (exempt
        # from the 128 rule); HBM traffic stays exactly N*dim in + out.
        expand_np = _base_expansion(irreps)
        x2, m2 = x, keep
    expand = jnp.asarray(expand_np, dtype=jnp.bfloat16)       # 0/1: bf16-exact

    n2, wx = x2.shape
    wm = m2.shape[1]
    x_bytes = jnp.dtype(x.dtype).itemsize
    # HBM bytes per (folded) row vs VMEM bytes per row (lane-padded tiles).
    row_hbm = 2 * wx * x_bytes + wm * 2
    row_vmem = 2 * _round_up(wx, _LANE) * x_bytes + _round_up(wm, _LANE) * 2
    align = max(8 * max(1, 4 // x_bytes), 16)   # sublane multiple (bf16 mask)
    tile_rows = _pick_tile_rows(n2, row_hbm, row_vmem, align)

    # VMEM limit: double-buffered tiles + resident expansion + f32 matmul
    # intermediate + headroom.  Never claims all of v7x's 64 MiB physical VMEM.
    inter = tile_rows * _round_up(wx, _LANE) * 4 * (1 if x_bytes == 4 else 2)
    vmem_limit = (2 * tile_rows * row_vmem
                  + 2 * expand.size * jnp.dtype(expand.dtype).itemsize
                  + inter + (8 << 20))
    vmem_limit = min(vmem_limit, 48 << 20)

    out2 = _dropout_2d(m2, x2, expand, scale=scale, tile_rows=tile_rows,
                       vmem_limit_bytes=vmem_limit)
    return out2.reshape(n_rows, dim)


# -----------------------------------------------------------------------------
# Reference (pure numpy / jax.random, identical mask draw)
# -----------------------------------------------------------------------------
def _reference(x, key, irreps, drop_prob):
    num_irreps, dim = irreps_meta(irreps)
    keep = np.asarray(
        jax.random.bernoulli(key, 1.0 - drop_prob, (x.shape[0], num_irreps)),
        dtype=np.float32)
    e = _base_expansion(irreps)
    mask_full = (keep * np.float32(1.0 / (1.0 - drop_prob))) @ e
    return np.asarray(x) * mask_full


if __name__ == "__main__":
    num_irreps, dim = irreps_meta(IRREPS)          # 10, 26
    root = jax.random.PRNGKey(0)

    # batch=128 exercises the lane-dense folded path (128 % 64 == 0);
    # batch=37 exercises the unpadded fallback path with a ragged last block.
    for batch in (128, 37):
        kx, kmask, root = jax.random.split(root, 3)
        x = jax.random.normal(kx, (batch, dim), dtype=jnp.float32)

        out = equivariant_dropout(x, kmask, irreps=IRREPS,
                                  drop_prob=DROP_PROB, training=True)
        out = jax.block_until_ready(out)

        assert out.shape == x.shape and out.dtype == x.dtype
        ref = _reference(x, kmask, IRREPS, DROP_PROB)
        np.testing.assert_allclose(np.asarray(out), ref, rtol=1e-5, atol=1e-6)
        assert np.all(np.isfinite(np.asarray(out)))

        # Every output element is either 0 (dropped irrep) or x * 1/(1-p).
        s = 1.0 / (1.0 - DROP_PROB)
        xr = np.asarray(x)
        ratio = np.asarray(out) / np.where(np.abs(xr) > 1e-12, xr, 1.0)
        assert np.all(np.isclose(ratio, 0.0, atol=1e-5) |
                      np.isclose(ratio, s, atol=1e-4))

    # eval mode / p == 0 are identity passthroughs
    x_eval = jax.random.normal(jax.random.PRNGKey(1), (5, dim), dtype=jnp.float32)
    assert equivariant_dropout(x_eval, root, training=False) is x_eval
    assert equivariant_dropout(x_eval, root, drop_prob=0.0) is x_eval

    print("KERNEL_OK")
</pallas_src>

<mosaic_0001>
module attributes {stable_mosaic.version = 11 : i64} {
  func.func @_equivariant_dropout_kernel(%arg0: i32, %arg1: memref<2x640xbf16, #tpu.memory_space<vmem>>, %arg2: memref<2x1664xf32, #tpu.memory_space<vmem>>, %arg3: memref<640x1664xbf16, #tpu.memory_space<vmem>>, %arg4: memref<2x1664xf32, #tpu.memory_space<vmem>>) attributes {dimension_semantics = [#tpu.dimension_semantics<parallel>], iteration_bounds = array<i64: 1>, scalar_prefetch = 0 : i64, scratch_operands = 0 : i64, tpu.core_type = #tpu.core_type<tc>, window_params = [{transform_indices = @transform_0, window_bounds = array<i64: 2, 640>}, {transform_indices = @transform_1, window_bounds = array<i64: 2, 1664>}, {pipeline_mode = #tpu.pipeline_mode<synchronous>, transform_indices = @transform_2, window_bounds = array<i64: 640, 1664>}, {transform_indices = @transform_3, window_bounds = array<i64: 2, 1664>}]} {
    %c0 = arith.constant 0 : index
    %c0_0 = arith.constant 0 : index
    %0 = vector.load %arg1[%c0, %c0_0] : memref<2x640xbf16, #tpu.memory_space<vmem>>, vector<2x640xbf16>
    %c0_1 = arith.constant 0 : index
    %c0_2 = arith.constant 0 : index
    %1 = vector.load %arg3[%c0_1, %c0_2] : memref<640x1664xbf16, #tpu.memory_space<vmem>>, vector<640x1664xbf16>
    %cst = arith.constant dense<0.000000e+00> : vector<2x1664xf32>
    %2 = tpu.matmul %0, %1, %cst {dimension_numbers = #tpu.dot_dimension_numbers<[1], [0], [0], [1], [0, 0, 1, 1], [], []>} : vector<2x640xbf16>, vector<640x1664xbf16>, vector<2x1664xf32> -> vector<2x1664xf32>
    %cst_3 = arith.constant 2.000000e+00 : f32
    %3 = vector.broadcast %cst_3 : f32 to vector<2x1664xf32>
    %4 = arith.mulf %2, %3 : vector<2x1664xf32>
    %c0_4 = arith.constant 0 : index
    %c0_5 = arith.constant 0 : index
    %5 = vector.load %arg2[%c0_4, %c0_5] : memref<2x1664xf32, #tpu.memory_space<vmem>>, vector<2x1664xf32>
    %6 = arith.mulf %5, %4 : vector<2x1664xf32>
    %c0_6 = arith.constant 0 : index
    %c0_7 = arith.constant 0 : index
    %7 = vector.load %arg4[%c0_6, %c0_7] : memref<2x1664xf32, #tpu.memory_space<vmem>>, vector<2x1664xf32>
    tpu.vector_store %arg4[%c0_6, %c0_7], %6 {strides = array<i32>} : memref<2x1664xf32, #tpu.memory_space<vmem>>, vector<2x1664xf32>,
    return
  }
  func.func @transform_0(%arg0: i32) -> (i32, i32) {
    %c0_i32 = arith.constant 0 : i32
    %c0_i32_0 = arith.constant 0 : i32
    return %arg0, %c0_i32 : i32, i32
  }
  func.func @transform_1(%arg0: i32) -> (i32, i32) {
    %c0_i32 = arith.constant 0 : i32
    %c0_i32_0 = arith.constant 0 : i32
    return %arg0, %c0_i32 : i32, i32
  }
  func.func @transform_2(%arg0: i32) -> (i32, i32) {
    %c0_i32 = arith.constant 0 : i32
    %c0_i32_0 = arith.constant 0 : i32
    %c0_i32_1 = arith.constant 0 : i32
    return %c0_i32, %c0_i32_0 : i32, i32
  }
  func.func @transform_3(%arg0: i32) -> (i32, i32) {
    %c0_i32 = arith.constant 0 : i32
    %c0_i32_0 = arith.constant 0 : i32
    return %arg0, %c0_i32 : i32, i32
  }
}

</mosaic_0001>

<llo_original>
// kernel: tpu_custom_call.1
$region0: #{tpu_custom_call.1}
  #allocation0 [shape = 'u32[]', space=smem, size = 0x4, offset = 0x4, fixed_abs, tag = 'smem constant byte address 0x4 - core index']
  #allocation1 [shape = 'u32[144,128]{1,0:T(1,128)}', space=vmem, size = 0x12000, scoped, tag = 'internal scratch']
  %s0 = inlined_call_operand.hbm [shape: bf16[2,640], index: 0, kind: input, shape index: {}]
  %s1 = inlined_call_operand.hbm [shape: f32[2,1664], index: 1, kind: input, shape index: {}]
  %s2 = inlined_call_operand.hbm [shape: bf16[640,1664], index: 2, kind: input, shape index: {}]
  %s3 = inlined_call_operand.hbm [shape: f32[2,1664], index: 3, kind: output, shape index: {}]
  %s4 = sld [smem:[#allocation0]]
  $region34: #{tpu_custom_call.1} parent=0
    _
  %s6 = ssub.s32 1, %s4
  %s7 = scalar_select 0, %s6, %s4
  $region1: #{tpu_custom_call.1} parent=0
    #allocation2 [shape = 'u8[2560]{0}', space=vmem, size = 0xc00, scoped, tag = 'input window, operand 0, single buffered']
    #allocation3 [shape = 's32[1]{0}', space=sflag, size = 0x4, scoped, tag = 'scoped memory for tpu_custom_call.1']
    #allocation4 [shape = 's32[1]{0}', space=sflag, size = 0x4, scoped, tag = 'scoped memory for tpu_custom_call.1']
    #allocation5 [shape = 'u8[13312]{0}', space=vmem, size = 0x3400, scoped, tag = 'input window, operand 1, single buffered']
    #allocation6 [shape = 's32[1]{0}', space=sflag, size = 0x4, scoped, tag = 'scoped memory for tpu_custom_call.1']
    #allocation7 [shape = 'u8[2129920]{0}', space=vmem, size = 0x208000, scoped, tag = 'input window, operand 2, single buffered']
    #allocation8 [shape = 'u8[13312]{0}', space=vmem, size = 0x3400, scoped, tag = 'output window, operand 0, single buffered']
    %8 = vsyncpa [#allocation3], 0
    %9 = vsyncpa [#allocation6], 0
    %10 = vsyncpa [#allocation4], 0
    // Predicated region
    $region2: #{tpu_custom_call.1} parent=1 // pred_check
      _
    $region3: #{tpu_custom_call.1} parent=1 // pred_check_branch
      %12 = sbr.rel (0) target = $region5
    $region4: #{tpu_custom_call.1} parent=1 // pred_region
      %s14 = ssub.s32 80, 80
      %15 = vsyncadd [#allocation3], %s14
      %s17 = sshll.u32 [#allocation2], 4
      %s18 = int_to_ptr.vmem [resolvable:$true] %s17
      %20 = dma.hbm_to_vmem [thread:$0]  %s0, 80, %s18, [#allocation3]
    $region5: #{tpu_custom_call.1} parent=1 // pred_fallthru
      _
    // Predicated region
    $region6: #{tpu_custom_call.1} parent=1 // pred_check
      _
    $region7: #{tpu_custom_call.1} parent=1 // pred_check_branch
      %22 = sbr.rel (0) target = $region9
    $region8: #{tpu_custom_call.1} parent=1 // pred_region
      %s24 = ssub.s32 416, 416
      %25 = vsyncadd [#allocation6], %s24
      %s27 = sshll.u32 [#allocation5], 4
      %s28 = int_to_ptr.vmem [resolvable:$true] %s27
      %30 = dma.hbm_to_vmem [thread:$0]  %s1, 416, %s28, [#allocation6]
    $region9: #{tpu_custom_call.1} parent=1 // pred_fallthru
      _
    // Predicated region
    $region10: #{tpu_custom_call.1} parent=1 // pred_check
      _
    $region11: #{tpu_custom_call.1} parent=1 // pred_check_branch
      %32 = sbr.rel (0) target = $region13
    $region12: #{tpu_custom_call.1} parent=1 // pred_region
      %s34 = ssub.s32 66560, 66560
      %35 = vsyncadd [#allocation6], %s34
      %s36 = sshll.u32 [#allocation7], 4
      %s37 = int_to_ptr.vmem [resolvable:$true] %s36
      %42 = dma.hbm_to_vmem [thread:$0]  %s2, 66560, %s37, [#allocation6], 832, 832, 52
    $region13: #{tpu_custom_call.1} parent=1 // pred_fallthru
      _
    // Predicated region
    $region14: #{tpu_custom_call.1} parent=1 // pred_check
      _
    $region15: #{tpu_custom_call.1} parent=1 // pred_check_branch
      %44 = sbr.rel (0) target = $region17
    $region16: #{tpu_custom_call.1} parent=1 // pred_region
      %45 = dma.done [#allocation3], 80
    $region17: #{tpu_custom_call.1} parent=1 // pred_fallthru
      _
    // Predicated region
    $region18: #{tpu_custom_call.1} parent=1 // pred_check
      _
    $region19: #{tpu_custom_call.1} parent=1 // pred_check_branch
      %47 = sbr.rel (0) target = $region21
    $region20: #{tpu_custom_call.1} parent=1 // pred_region
      %48 = dma.done [#allocation6], 416
    $region21: #{tpu_custom_call.1} parent=1 // pred_fallthru
      _
    // Predicated region
    $region22: #{tpu_custom_call.1} parent=1 // pred_check
      _
    $region23: #{tpu_custom_call.1} parent=1 // pred_check_branch
      %50 = sbr.rel (0) target = $region25
    $region24: #{tpu_custom_call.1} parent=1 // pred_region
      %51 = dma.done [#allocation6], 66560
    $region25: #{tpu_custom_call.1} parent=1 // pred_fallthru
      _
    %v53 = vld [vmem:[#allocation2] sm:$0x1f]
    %v54 = vld [vmem:[#allocation7] sm:$0xff]
    %v55 = vld [vmem:[#allocation7 + $0x8] sm:$0xff]
    %v56 = vld [vmem:[#allocation7 + $0x10] sm:$0xff]
    %v57 = vld [vmem:[#allocation7 + $0x18] sm:$0xff]
    %v58 = vld [vmem:[#allocation7 + $0x20] sm:$0xff]
    %v59 = vld [vmem:[#allocation7 + $0x28] sm:$0xff]
    %v60 = vld [vmem:[#allocation7 + $0x30] sm:$0xf]
    %v61 = vld [vmem:[#allocation7 + $0x34] sm:$0xff]
    %v62 = vld [vmem:[#allocation7 + $0x3c] sm:$0xff]
    %v63 = vld [vmem:[#allocation7 + $0x44] sm:$0xff]
    %v64 = vld [vmem:[#allocation7 + $0x4c] sm:$0xff]
    %v65 = vld [vmem:[#allocation7 + $0x54] sm:$0xff]
    %v66 = vld [vmem:[#allocation7 + $0x5c] sm:$0xff]
    %v67 = vld [vmem:[#allocation7 + $0x64] sm:$0xf]
    %v68 = vld [vmem:[#allocation7 + $0x68] sm:$0xff]
    %v69 = vld [vmem:[#allocation7 + $0x70] sm:$0xff]
    %v70 = vld [vmem:[#allocation7 + $0x78] sm:$0xff]
    %v71 = vld [vmem:[#allocation7 + $0x80] sm:$0xff]
    %v72 = vld [vmem:[#allocation7 + $0x88] sm:$0xff]
    %v73 = vld [vmem:[#allocation7 + $0x90] sm:$0xff]
    %v74 = vld [vmem:[#allocation7 + $0x98] sm:$0xf]
    %v75 = vld [vmem:[#allocation7 + $0x9c] sm:$0xff]
    %v76 = vld [vmem:[#allocation7 + $0xa4] sm:$0xff]
    %v77 = vld [vmem:[#allocation7 + $0xac] sm:$0xff]
    %v78 = vld [vmem:[#allocation7 + $0xb4] sm:$0xff]
    %v79 = vld [vmem:[#allocation7 + $0xbc] sm:$0xff]
    %v80 = vld [vmem:[#allocation7 + $0xc4] sm:$0xff]
    %v81 = vld [vmem:[#allocation7 + $0xcc] sm:$0xf]
    %v82 = vld [vmem:[#allocation7 + $0xd0] sm:$0xff]
    %v83 = vld [vmem:[#allocation7 + $0xd8] sm:$0xff]
    %v84 = vld [vmem:[#allocation7 + $0xe0] sm:$0xff]
    %v85 = vld [vmem:[#allocation7 + $0xe8] sm:$0xff]
    %v86 = vld [vmem:[#allocation7 + $0xf0] sm:$0xff]
    %v87 = vld [vmem:[#allocation7 + $0xf8] sm:$0xff]
    %v88 = vld [vmem:[#allocation7 + $0x100] sm:$0xf]
    %v89 = vld [vmem:[#allocation7 + $0x104] sm:$0xff]
    %v90 = vld [vmem:[#allocation7 + $0x10c] sm:$0xff]
    %v91 = vld [vmem:[#allocation7 + $0x114] sm:$0xff]
    %v92 = vld [vmem:[#allocation7 + $0x11c] sm:$0xff]
    %v93 = vld [vmem:[#allocation7 + $0x124] sm:$0xff]
    %v94 = vld [vmem:[#allocation7 + $0x12c] sm:$0xff]
    %v95 = vld [vmem:[#allocation7 + $0x134] sm:$0xf]
    %v96 = vld [vmem:[#allocation7 + $0x138] sm:$0xff]
    %v97 = vld [vmem:[#allocation7 + $0x140] sm:$0xff]
    %v98 = vld [vmem:[#allocation7 + $0x148] sm:$0xff]
    %v99 = vld [vmem:[#allocation7 + $0x150] sm:$0xff]
    %v100 = vld [vmem:[#allocation7 + $0x158] sm:$0xff]
    %v101 = vld [vmem:[#allocation7 + $0x160] sm:$0xff]
    %v102 = vld [vmem:[#allocation7 + $0x168] sm:$0xf]
    %v103 = vld [vmem:[#allocation7 + $0x16c] sm:$0xff]
    %v104 = vld [vmem:[#allocation7 + $0x174] sm:$0xff]
    %v105 = vld [vmem:[#allocation7 + $0x17c] sm:$0xff]
    %v106 = vld [vmem:[#allocation7 + $0x184] sm:$0xff]
    %v107 = vld [vmem:[#allocation7 + $0x18c] sm:$0xff]
    %v108 = vld [vmem:[#allocation7 + $0x194] sm:$0xff]
    %v109 = vld [vmem:[#allocation7 + $0x19c] sm:$0xf]
    %v110 = vld [vmem:[#allocation7 + $0x1a0] sm:$0xff]
    %v111 = vld [vmem:[#allocation7 + $0x1a8] sm:$0xff]
    %v112 = vld [vmem:[#allocation7 + $0x1b0] sm:$0xff]
    %v113 = vld [vmem:[#allocation7 + $0x1b8] sm:$0xff]
    %v114 = vld [vmem:[#allocation7 + $0x1c0] sm:$0xff]
    %v115 = vld [vmem:[#allocation7 + $0x1c8] sm:$0xff]
    %v116 = vld [vmem:[#allocation7 + $0x1d0] sm:$0xf]
    %v117 = vld [vmem:[#allocation7 + $0x1d4] sm:$0xff]
    %v118 = vld [vmem:[#allocation7 + $0x1dc] sm:$0xff]
    %v119 = vld [vmem:[#allocation7 + $0x1e4] sm:$0xff]
    %v120 = vld [vmem:[#allocation7 + $0x1ec] sm:$0xff]
    %v121 = vld [vmem:[#allocation7 + $0x1f4] sm:$0xff]
    %v122 = vld [vmem:[#allocation7 + $0x1fc] sm:$0xff]
    %v123 = vld [vmem:[#allocation7 + $0x204] sm:$0xf]
    %v124 = vld [vmem:[#allocation7 + $0x208] sm:$0xff]
    %v125 = vld [vmem:[#allocation7 + $0x210] sm:$0xff]
    %v126 = vld [vmem:[#allocation7 + $0x218] sm:$0xff]
    %v127 = vld [vmem:[#allocation7 + $0x220] sm:$0xff]
    %v128 = vld [vmem:[#allocation7 + $0x228] sm:$0xff]
    %v129 = vld [vmem:[#allocation7 + $0x230] sm:$0xff]
    %v130 = vld [vmem:[#allocation7 + $0x238] sm:$0xf]
    %v131 = vld [vmem:[#allocation7 + $0x23c] sm:$0xff]
    %v132 = vld [vmem:[#allocation7 + $0x244] sm:$0xff]
    %v133 = vld [vmem:[#allocation7 + $0x24c] sm:$0xff]
    %v134 = vld [vmem:[#allocation7 + $0x254] sm:$0xff]
    %v135 = vld [vmem:[#allocation7 + $0x25c] sm:$0xff]
    %v136 = vld [vmem:[#allocation7 + $0x264] sm:$0xff]
    %v137 = vld [vmem:[#allocation7 + $0x26c] sm:$0xf]
    %v138 = vld [vmem:[#allocation7 + $0x270] sm:$0xff]
    %v139 = vld [vmem:[#allocation7 + $0x278] sm:$0xff]
    %v140 = vld [vmem:[#allocation7 + $0x280] sm:$0xff]
    %v141 = vld [vmem:[#allocation7 + $0x288] sm:$0xff]
    %v142 = vld [vmem:[#allocation7 + $0x290] sm:$0xff]
    %v143 = vld [vmem:[#allocation7 + $0x298] sm:$0xff]
    %v144 = vld [vmem:[#allocation7 + $0x2a0] sm:$0xf]
    %v145 = vld [vmem:[#allocation7 + $0x2a4] sm:$0xff]
    %v146 = vld [vmem:[#allocation7 + $0x2ac] sm:$0xff]
    %v147 = vld [vmem:[#allocation7 + $0x2b4] sm:$0xff]
    %v148 = vld [vmem:[#allocation7 + $0x2bc] sm:$0xff]
    %v149 = vld [vmem:[#allocation7 + $0x2c4] sm:$0xff]
    %v150 = vld [vmem:[#allocation7 + $0x2cc] sm:$0xff]
    %v151 = vld [vmem:[#allocation7 + $0x2d4] sm:$0xf]
    %v152 = vld [vmem:[#allocation7 + $0x2d8] sm:$0xff]
    %v153 = vld [vmem:[#allocation7 + $0x2e0] sm:$0xff]
    %v154 = vld [vmem:[#allocation7 + $0x2e8] sm:$0xff]
    %v155 = vld [vmem:[#allocation7 + $0x2f0] sm:$0xff]
    %v156 = vld [vmem:[#allocation7 + $0x2f8] sm:$0xff]
    %v157 = vld [vmem:[#allocation7 + $0x300] sm:$0xff]
    %v158 = vld [vmem:[#allocation7 + $0x308] sm:$0xf]
    %v159 = vld [vmem:[#allocation7 + $0x30c] sm:$0xff]
    %v160 = vld [vmem:[#allocation7 + $0x314] sm:$0xff]
    %v161 = vld [vmem:[#allocation7 + $0x31c] sm:$0xff]
    %v162 = vld [vmem:[#allocation7 + $0x324] sm:$0xff]
    %v163 = vld [vmem:[#allocation7 + $0x32c] sm:$0xff]
    %v164 = vld [vmem:[#allocation7 + $0x334] sm:$0xff]
    %v165 = vld [vmem:[#allocation7 + $0x33c] sm:$0xf]
    %v166 = vld [vmem:[#allocation7 + $0x340] sm:$0xff]
    %v167 = vld [vmem:[#allocation7 + $0x348] sm:$0xff]
    %v168 = vld [vmem:[#allocation7 + $0x350] sm:$0xff]
    %v169 = vld [vmem:[#allocation7 + $0x358] sm:$0xff]
    %v170 = vld [vmem:[#allocation7 + $0x360] sm:$0xff]
    %v171 = vld [vmem:[#allocation7 + $0x368] sm:$0xff]
    %v172 = vld [vmem:[#allocation7 + $0x370] sm:$0xf]
    %v173 = vld [vmem:[#allocation7 + $0x374] sm:$0xff]
    %v174 = vld [vmem:[#allocation7 + $0x37c] sm:$0xff]
    %v175 = vld [vmem:[#allocation7 + $0x384] sm:$0xff]
    %v176 = vld [vmem:[#allocation7 + $0x38c] sm:$0xff]
    %v177 = vld [vmem:[#allocation7 + $0x394] sm:$0xff]
    %v178 = vld [vmem:[#allocation7 + $0x39c] sm:$0xff]
    %v179 = vld [vmem:[#allocation7 + $0x3a4] sm:$0xf]
    %v180 = vld [vmem:[#allocation7 + $0x3a8] sm:$0xff]
    %v181 = vld [vmem:[#allocation7 + $0x3b0] sm:$0xff]
    %v182 = vld [vmem:[#allocation7 + $0x3b8] sm:$0xff]
    %v183 = vld [vmem:[#allocation7 + $0x3c0] sm:$0xff]
    %v184 = vld [vmem:[#allocation7 + $0x3c8] sm:$0xff]
    %v185 = vld [vmem:[#allocation7 + $0x3d0] sm:$0xff]
    %v186 = vld [vmem:[#allocation7 + $0x3d8] sm:$0xf]
    %v187 = vld [vmem:[#allocation7 + $0x3dc] sm:$0xff]
    %v188 = vld [vmem:[#allocation7 + $0x3e4] sm:$0xff]
    %v189 = vld [vmem:[#allocation7 + $0x3ec] sm:$0xff]
    %v190 = vld [vmem:[#allocation7 + $0x3f4] sm:$0xff]
    %v191 = vld [vmem:[#allocation7 + $0x3fc] sm:$0xff]
    %v192 = vld [vmem:[#allocation7 + $0x404] sm:$0xff]
    %v193 = vld [vmem:[#allocation7 + $0x40c] sm:$0xf]
    %v194 = vld [vmem:[#allocation7 + $0x410] sm:$0xff]
    %v195 = vld [vmem:[#allocation7 + $0x418] sm:$0xff]
    %v196 = vld [vmem:[#allocation7 + $0x420] sm:$0xff]
    %v197 = vld [vmem:[#allocation7 + $0x428] sm:$0xff]
    %v198 = vld [vmem:[#allocation7 + $0x430] sm:$0xff]
    %v199 = vld [vmem:[#allocation7 + $0x438] sm:$0xff]
    %v200 = vld [vmem:[#allocation7 + $0x440] sm:$0xf]
    %v201 = vld [vmem:[#allocation7 + $0x444] sm:$0xff]
    %v202 = vld [vmem:[#allocation7 + $0x44c] sm:$0xff]
    %v203 = vld [vmem:[#allocation7 + $0x454] sm:$0xff]
    %v204 = vld [vmem:[#allocation7 + $0x45c] sm:$0xff]
    %v205 = vld [vmem:[#allocation7 + $0x464] sm:$0xff]
    %v206 = vld [vmem:[#allocation7 + $0x46c] sm:$0xff]
    %v207 = vld [vmem:[#allocation7 + $0x474] sm:$0xf]
    %v208 = vld [vmem:[#allocation7 + $0x478] sm:$0xff]
    %v209 = vld [vmem:[#allocation7 + $0x480] sm:$0xff]
    %v210 = vld [vmem:[#allocation7 + $0x488] sm:$0xff]
    %v211 = vld [vmem:[#allocation7 + $0x490] sm:$0xff]
    %v212 = vld [vmem:[#allocation7 + $0x498] sm:$0xff]
    %v213 = vld [vmem:[#allocation7 + $0x4a0] sm:$0xff]
    %v214 = vld [vmem:[#allocation7 + $0x4a8] sm:$0xf]
    %v215 = vld [vmem:[#allocation7 + $0x4ac] sm:$0xff]
    %v216 = vld [vmem:[#allocation7 + $0x4b4] sm:$0xff]
    %v217 = vld [vmem:[#allocation7 + $0x4bc] sm:$0xff]
    %v218 = vld [vmem:[#allocation7 + $0x4c4] sm:$0xff]
    %v219 = vld [vmem:[#allocation7 + $0x4cc] sm:$0xff]
    %v220 = vld [vmem:[#allocation7 + $0x4d4] sm:$0xff]
    %v221 = vld [vmem:[#allocation7 + $0x4dc] sm:$0xf]
    %v222 = vld [vmem:[#allocation7 + $0x4e0] sm:$0xff]
    %v223 = vld [vmem:[#allocation7 + $0x4e8] sm:$0xff]
    %v224 = vld [vmem:[#allocation7 + $0x4f0] sm:$0xff]
    %v225 = vld [vmem:[#allocation7 + $0x4f8] sm:$0xff]
    %v226 = vld [vmem:[#allocation7 + $0x500] sm:$0xff]
    %v227 = vld [vmem:[#allocation7 + $0x508] sm:$0xff]
    %v228 = vld [vmem:[#allocation7 + $0x510] sm:$0xf]
    %v229 = vld [vmem:[#allocation7 + $0x514] sm:$0xff]
    %v230 = vld [vmem:[#allocation7 + $0x51c] sm:$0xff]
    %v231 = vld [vmem:[#allocation7 + $0x524] sm:$0xff]
    %v232 = vld [vmem:[#allocation7 + $0x52c] sm:$0xff]
    %v233 = vld [vmem:[#allocation7 + $0x534] sm:$0xff]
    %v234 = vld [vmem:[#allocation7 + $0x53c] sm:$0xff]
    %v235 = vld [vmem:[#allocation7 + $0x544] sm:$0xf]
    %v236 = vld [vmem:[#allocation7 + $0x548] sm:$0xff]
    %v237 = vld [vmem:[#allocation7 + $0x550] sm:$0xff]
    %v238 = vld [vmem:[#allocation7 + $0x558] sm:$0xff]
    %v239 = vld [vmem:[#allocation7 + $0x560] sm:$0xff]
    %v240 = vld [vmem:[#allocation7 + $0x568] sm:$0xff]
    %v241 = vld [vmem:[#allocation7 + $0x570] sm:$0xff]
    %v242 = vld [vmem:[#allocation7 + $0x578] sm:$0xf]
    %v243 = vld [vmem:[#allocation7 + $0x57c] sm:$0xff]
    %v244 = vld [vmem:[#allocation7 + $0x584] sm:$0xff]
    %v245 = vld [vmem:[#allocation7 + $0x58c] sm:$0xff]
    %v246 = vld [vmem:[#allocation7 + $0x594] sm:$0xff]
    %v247 = vld [vmem:[#allocation7 + $0x59c] sm:$0xff]
    %v248 = vld [vmem:[#allocation7 + $0x5a4] sm:$0xff]
    %v249 = vld [vmem:[#allocation7 + $0x5ac] sm:$0xf]
    %v250 = vld [vmem:[#allocation7 + $0x5b0] sm:$0xff]
    %v251 = vld [vmem:[#allocation7 + $0x5b8] sm:$0xff]
    %v252 = vld [vmem:[#allocation7 + $0x5c0] sm:$0xff]
    %v253 = vld [vmem:[#allocation7 + $0x5c8] sm:$0xff]
    %v254 = vld [vmem:[#allocation7 + $0x5d0] sm:$0xff]
    %v255 = vld [vmem:[#allocation7 + $0x5d8] sm:$0xff]
    %v256 = vld [vmem:[#allocation7 + $0x5e0] sm:$0xf]
    %v257 = vld [vmem:[#allocation7 + $0x5e4] sm:$0xff]
    %v258 = vld [vmem:[#allocation7 + $0x5ec] sm:$0xff]
    %v259 = vld [vmem:[#allocation7 + $0x5f4] sm:$0xff]
    %v260 = vld [vmem:[#allocation7 + $0x5fc] sm:$0xff]
    %v261 = vld [vmem:[#allocation7 + $0x604] sm:$0xff]
    %v262 = vld [vmem:[#allocation7 + $0x60c] sm:$0xff]
    %v263 = vld [vmem:[#allocation7 + $0x614] sm:$0xf]
    %v264 = vld [vmem:[#allocation7 + $0x618] sm:$0xff]
    %v265 = vld [vmem:[#allocation7 + $0x620] sm:$0xff]
    %v266 = vld [vmem:[#allocation7 + $0x628] sm:$0xff]
    %v267 = vld [vmem:[#allocation7 + $0x630] sm:$0xff]
    %v268 = vld [vmem:[#allocation7 + $0x638] sm:$0xff]
    %v269 = vld [vmem:[#allocation7 + $0x640] sm:$0xff]
    %v270 = vld [vmem:[#allocation7 + $0x648] sm:$0xf]
    %v271 = vld [vmem:[#allocation7 + $0x64c] sm:$0xff]
    %v272 = vld [vmem:[#allocation7 + $0x654] sm:$0xff]
    %v273 = vld [vmem:[#allocation7 + $0x65c] sm:$0xff]
    %v274 = vld [vmem:[#allocation7 + $0x664] sm:$0xff]
    %v275 = vld [vmem:[#allocation7 + $0x66c] sm:$0xff]
    %v276 = vld [vmem:[#allocation7 + $0x674] sm:$0xff]
    %v277 = vld [vmem:[#allocation7 + $0x67c] sm:$0xf]
    %v278 = vld [vmem:[#allocation7 + $0x680] sm:$0xff]
    %v279 = vld [vmem:[#allocation7 + $0x688] sm:$0xff]
    %v280 = vld [vmem:[#allocation7 + $0x690] sm:$0xff]
    %v281 = vld [vmem:[#allocation7 + $0x698] sm:$0xff]
    %v282 = vld [vmem:[#allocation7 + $0x6a0] sm:$0xff]
    %v283 = vld [vmem:[#allocation7 + $0x6a8] sm:$0xff]
    %v284 = vld [vmem:[#allocation7 + $0x6b0] sm:$0xf]
    %v285 = vld [vmem:[#allocation7 + $0x6b4] sm:$0xff]
    %v286 = vld [vmem:[#allocation7 + $0x6bc] sm:$0xff]
    %v287 = vld [vmem:[#allocation7 + $0x6c4] sm:$0xff]
    %v288 = vld [vmem:[#allocation7 + $0x6cc] sm:$0xff]
    %v289 = vld [vmem:[#allocation7 + $0x6d4] sm:$0xff]
    %v290 = vld [vmem:[#allocation7 + $0x6dc] sm:$0xff]
    %v291 = vld [vmem:[#allocation7 + $0x6e4] sm:$0xf]
    %v292 = vld [vmem:[#allocation7 + $0x6e8] sm:$0xff]
    %v293 = vld [vmem:[#allocation7 + $0x6f0] sm:$0xff]
    %v294 = vld [vmem:[#allocation7 + $0x6f8] sm:$0xff]
    %v295 = vld [vmem:[#allocation7 + $0x700] sm:$0xff]
    %v296 = vld [vmem:[#allocation7 + $0x708] sm:$0xff]
    %v297 = vld [vmem:[#allocation7 + $0x710] sm:$0xff]
    %v298 = vld [vmem:[#allocation7 + $0x718] sm:$0xf]
    %v299 = vld [vmem:[#allocation7 + $0x71c] sm:$0xff]
    %v300 = vld [vmem:[#allocation7 + $0x724] sm:$0xff]
    %v301 = vld [vmem:[#allocation7 + $0x72c] sm:$0xff]
    %v302 = vld [vmem:[#allocation7 + $0x734] sm:$0xff]
    %v303 = vld [vmem:[#allocation7 + $0x73c] sm:$0xff]
    %v304 = vld [vmem:[#allocation7 + $0x744] sm:$0xff]
    %v305 = vld [vmem:[#allocation7 + $0x74c] sm:$0xf]
    %v306 = vld [vmem:[#allocation7 + $0x750] sm:$0xff]
    %v307 = vld [vmem:[#allocation7 + $0x758] sm:$0xff]
    %v308 = vld [vmem:[#allocation7 + $0x760] sm:$0xff]
    %v309 = vld [vmem:[#allocation7 + $0x768] sm:$0xff]
    %v310 = vld [vmem:[#allocation7 + $0x770] sm:$0xff]
    %v311 = vld [vmem:[#allocation7 + $0x778] sm:$0xff]
    %v312 = vld [vmem:[#allocation7 + $0x780] sm:$0xf]
    %v313 = vld [vmem:[#allocation7 + $0x784] sm:$0xff]
    %v314 = vld [vmem:[#allocation7 + $0x78c] sm:$0xff]
    %v315 = vld [vmem:[#allocation7 + $0x794] sm:$0xff]
    %v316 = vld [vmem:[#allocation7 + $0x79c] sm:$0xff]
    %v317 = vld [vmem:[#allocation7 + $0x7a4] sm:$0xff]
    %v318 = vld [vmem:[#allocation7 + $0x7ac] sm:$0xff]
    %v319 = vld [vmem:[#allocation7 + $0x7b4] sm:$0xf]
    %v320 = vld [vmem:[#allocation7 + $0x7b8] sm:$0xff]
    %v321 = vld [vmem:[#allocation7 + $0x7c0] sm:$0xff]
    %v322 = vld [vmem:[#allocation7 + $0x7c8] sm:$0xff]
    %v323 = vld [vmem:[#allocation7 + $0x7d0] sm:$0xff]
    %v324 = vld [vmem:[#allocation7 + $0x7d8] sm:$0xff]
    %v325 = vld [vmem:[#allocation7 + $0x7e0] sm:$0xff]
    %v326 = vld [vmem:[#allocation7 + $0x7e8] sm:$0xf]
    %v327 = vld [vmem:[#allocation7 + $0x7ec] sm:$0xff]
    %v328 = vld [vmem:[#allocation7 + $0x7f4] sm:$0xff]
    %v329 = vld [vmem:[#allocation7 + $0x7fc] sm:$0xff]
    %v330 = vld [vmem:[#allocation7 + $0x804] sm:$0xff]
    %v331 = vld [vmem:[#allocation7 + $0x80c] sm:$0xff]
    %v332 = vld [vmem:[#allocation7 + $0x814] sm:$0xff]
    %v333 = vld [vmem:[#allocation7 + $0x81c] sm:$0xf]
    %v334 = vld [vmem:[#allocation7 + $0x820] sm:$0xff]
    %v335 = vld [vmem:[#allocation7 + $0x828] sm:$0xff]
    %v336 = vld [vmem:[#allocation7 + $0x830] sm:$0xff]
    %v337 = vld [vmem:[#allocation7 + $0x838] sm:$0xff]
    %v338 = vld [vmem:[#allocation7 + $0x840] sm:$0xff]
    %v339 = vld [vmem:[#allocation7 + $0x848] sm:$0xff]
    %v340 = vld [vmem:[#allocation7 + $0x850] sm:$0xf]
    %v341 = vld [vmem:[#allocation7 + $0x854] sm:$0xff]
    %v342 = vld [vmem:[#allocation7 + $0x85c] sm:$0xff]
    %v343 = vld [vmem:[#allocation7 + $0x864] sm:$0xff]
    %v344 = vld [vmem:[#allocation7 + $0x86c] sm:$0xff]
    %v345 = vld [vmem:[#allocation7 + $0x874] sm:$0xff]
    %v346 = vld [vmem:[#allocation7 + $0x87c] sm:$0xff]
    %v347 = vld [vmem:[#allocation7 + $0x884] sm:$0xf]
    %v348 = vld [vmem:[#allocation7 + $0x888] sm:$0xff]
    %v349 = vld [vmem:[#allocation7 + $0x890] sm:$0xff]
    %v350 = vld [vmem:[#allocation7 + $0x898] sm:$0xff]
    %v351 = vld [vmem:[#allocation7 + $0x8a0] sm:$0xff]
    %v352 = vld [vmem:[#allocation7 + $0x8a8] sm:$0xff]
    %v353 = vld [vmem:[#allocation7 + $0x8b0] sm:$0xff]
    %v354 = vld [vmem:[#allocation7 + $0x8b8] sm:$0xf]
    %v355 = vld [vmem:[#allocation7 + $0x8bc] sm:$0xff]
    %v356 = vld [vmem:[#allocation7 + $0x8c4] sm:$0xff]
    %v357 = vld [vmem:[#allocation7 + $0x8cc] sm:$0xff]
    %v358 = vld [vmem:[#allocation7 + $0x8d4] sm:$0xff]
    %v359 = vld [vmem:[#allocation7 + $0x8dc] sm:$0xff]
    %v360 = vld [vmem:[#allocation7 + $0x8e4] sm:$0xff]
    %v361 = vld [vmem:[#allocation7 + $0x8ec] sm:$0xf]
    %v362 = vld [vmem:[#allocation7 + $0x8f0] sm:$0xff]
    %v363 = vld [vmem:[#allocation7 + $0x8f8] sm:$0xff]
    %v364 = vld [vmem:[#allocation7 + $0x900] sm:$0xff]
    %v365 = vld [vmem:[#allocation7 + $0x908] sm:$0xff]
    %v366 = vld [vmem:[#allocation7 + $0x910] sm:$0xff]
    %v367 = vld [vmem:[#allocation7 + $0x918] sm:$0xff]
    %v368 = vld [vmem:[#allocation7 + $0x920] sm:$0xf]
    %v369 = vld [vmem:[#allocation7 + $0x924] sm:$0xff]
    %v370 = vld [vmem:[#allocation7 + $0x92c] sm:$0xff]
    %v371 = vld [vmem:[#allocation7 + $0x934] sm:$0xff]
    %v372 = vld [vmem:[#allocation7 + $0x93c] sm:$0xff]
    %v373 = vld [vmem:[#allocation7 + $0x944] sm:$0xff]
    %v374 = vld [vmem:[#allocation7 + $0x94c] sm:$0xff]
    %v375 = vld [vmem:[#allocation7 + $0x954] sm:$0xf]
    %v376 = vld [vmem:[#allocation7 + $0x958] sm:$0xff]
    %v377 = vld [vmem:[#allocation7 + $0x960] sm:$0xff]
    %v378 = vld [vmem:[#allocation7 + $0x968] sm:$0xff]
    %v379 = vld [vmem:[#allocation7 + $0x970] sm:$0xff]
    %v380 = vld [vmem:[#allocation7 + $0x978] sm:$0xff]
    %v381 = vld [vmem:[#allocation7 + $0x980] sm:$0xff]
    %v382 = vld [vmem:[#allocation7 + $0x988] sm:$0xf]
    %v383 = vld [vmem:[#allocation7 + $0x98c] sm:$0xff]
    %v384 = vld [vmem:[#allocation7 + $0x994] sm:$0xff]
    %v385 = vld [vmem:[#allocation7 + $0x99c] sm:$0xff]
    %v386 = vld [vmem:[#allocation7 + $0x9a4] sm:$0xff]
    %v387 = vld [vmem:[#allocation7 + $0x9ac] sm:$0xff]
    %v388 = vld [vmem:[#allocation7 + $0x9b4] sm:$0xff]
    %v389 = vld [vmem:[#allocation7 + $0x9bc] sm:$0xf]
    %v390 = vld [vmem:[#allocation7 + $0x9c0] sm:$0xff]
    %v391 = vld [vmem:[#allocation7 + $0x9c8] sm:$0xff]
    %v392 = vld [vmem:[#allocation7 + $0x9d0] sm:$0xff]
    %v393 = vld [vmem:[#allocation7 + $0x9d8] sm:$0xff]
    %v394 = vld [vmem:[#allocation7 + $0x9e0] sm:$0xff]
    %v395 = vld [vmem:[#allocation7 + $0x9e8] sm:$0xff]
    %v396 = vld [vmem:[#allocation7 + $0x9f0] sm:$0xf]
    %v397 = vld [vmem:[#allocation7 + $0x9f4] sm:$0xff]
    %v398 = vld [vmem:[#allocation7 + $0x9fc] sm:$0xff]
    %v399 = vld [vmem:[#allocation7 + $0xa04] sm:$0xff]
    %v400 = vld [vmem:[#allocation7 + $0xa0c] sm:$0xff]
    %v401 = vld [vmem:[#allocation7 + $0xa14] sm:$0xff]
    %v402 = vld [vmem:[#allocation7 + $0xa1c] sm:$0xff]
    %v403 = vld [vmem:[#allocation7 + $0xa24] sm:$0xf]
    %v404 = vld [vmem:[#allocation7 + $0xa28] sm:$0xff]
    %v405 = vld [vmem:[#allocation7 + $0xa30] sm:$0xff]
    %v406 = vld [vmem:[#allocation7 + $0xa38] sm:$0xff]
    %v407 = vld [vmem:[#allocation7 + $0xa40] sm:$0xff]
    %v408 = vld [vmem:[#allocation7 + $0xa48] sm:$0xff]
    %v409 = vld [vmem:[#allocation7 + $0xa50] sm:$0xff]
    %v410 = vld [vmem:[#allocation7 + $0xa58] sm:$0xf]
    %v411 = vld [vmem:[#allocation7 + $0xa5c] sm:$0xff]
    %v412 = vld [vmem:[#allocation7 + $0xa64] sm:$0xff]
    %v413 = vld [vmem:[#allocation7 + $0xa6c] sm:$0xff]
    %v414 = vld [vmem:[#allocation7 + $0xa74] sm:$0xff]
    %v415 = vld [vmem:[#allocation7 + $0xa7c] sm:$0xff]
    %v416 = vld [vmem:[#allocation7 + $0xa84] sm:$0xff]
    %v417 = vld [vmem:[#allocation7 + $0xa8c] sm:$0xf]
    %v418 = vld [vmem:[#allocation7 + $0xa90] sm:$0xff]
    %v419 = vld [vmem:[#allocation7 + $0xa98] sm:$0xff]
    %v420 = vld [vmem:[#allocation7 + $0xaa0] sm:$0xff]
    %v421 = vld [vmem:[#allocation7 + $0xaa8] sm:$0xff]
    %v422 = vld [vmem:[#allocation7 + $0xab0] sm:$0xff]
    %v423 = vld [vmem:[#allocation7 + $0xab8] sm:$0xff]
    %v424 = vld [vmem:[#allocation7 + $0xac0] sm:$0xf]
    %v425 = vld [vmem:[#allocation7 + $0xac4] sm:$0xff]
    %v426 = vld [vmem:[#allocation7 + $0xacc] sm:$0xff]
    %v427 = vld [vmem:[#allocation7 + $0xad4] sm:$0xff]
    %v428 = vld [vmem:[#allocation7 + $0xadc] sm:$0xff]
    %v429 = vld [vmem:[#allocation7 + $0xae4] sm:$0xff]
    %v430 = vld [vmem:[#allocation7 + $0xaec] sm:$0xff]
    %v431 = vld [vmem:[#allocation7 + $0xaf4] sm:$0xf]
    %v432 = vld [vmem:[#allocation7 + $0xaf8] sm:$0xff]
    %v433 = vld [vmem:[#allocation7 + $0xb00] sm:$0xff]
    %v434 = vld [vmem:[#allocation7 + $0xb08] sm:$0xff]
    %v435 = vld [vmem:[#allocation7 + $0xb10] sm:$0xff]
    %v436 = vld [vmem:[#allocation7 + $0xb18] sm:$0xff]
    %v437 = vld [vmem:[#allocation7 + $0xb20] sm:$0xff]
    %v438 = vld [vmem:[#allocation7 + $0xb28] sm:$0xf]
    %v439 = vld [vmem:[#allocation7 + $0xb2c] sm:$0xff]
    %v440 = vld [vmem:[#allocation7 + $0xb34] sm:$0xff]
    %v441 = vld [vmem:[#allocation7 + $0xb3c] sm:$0xff]
    %v442 = vld [vmem:[#allocation7 + $0xb44] sm:$0xff]
    %v443 = vld [vmem:[#allocation7 + $0xb4c] sm:$0xff]
    %v444 = vld [vmem:[#allocation7 + $0xb54] sm:$0xff]
    %v445 = vld [vmem:[#allocation7 + $0xb5c] sm:$0xf]
    %v446 = vld [vmem:[#allocation7 + $0xb60] sm:$0xff]
    %v447 = vld [vmem:[#allocation7 + $0xb68] sm:$0xff]
    %v448 = vld [vmem:[#allocation7 + $0xb70] sm:$0xff]
    %v449 = vld [vmem:[#allocation7 + $0xb78] sm:$0xff]
    %v450 = vld [vmem:[#allocation7 + $0xb80] sm:$0xff]
    %v451 = vld [vmem:[#allocation7 + $0xb88] sm:$0xff]
    %v452 = vld [vmem:[#allocation7 + $0xb90] sm:$0xf]
    %v453 = vld [vmem:[#allocation7 + $0xb94] sm:$0xff]
    %v454 = vld [vmem:[#allocation7 + $0xb9c] sm:$0xff]
    %v455 = vld [vmem:[#allocation7 + $0xba4] sm:$0xff]
    %v456 = vld [vmem:[#allocation7 + $0xbac] sm:$0xff]
    %v457 = vld [vmem:[#allocation7 + $0xbb4] sm:$0xff]
    %v458 = vld [vmem:[#allocation7 + $0xbbc] sm:$0xff]
    %v459 = vld [vmem:[#allocation7 + $0xbc4] sm:$0xf]
    %v460 = vld [vmem:[#allocation7 + $0xbc8] sm:$0xff]
    %v461 = vld [vmem:[#allocation7 + $0xbd0] sm:$0xff]
    %v462 = vld [vmem:[#allocation7 + $0xbd8] sm:$0xff]
    %v463 = vld [vmem:[#allocation7 + $0xbe0] sm:$0xff]
    %v464 = vld [vmem:[#allocation7 + $0xbe8] sm:$0xff]
    %v465 = vld [vmem:[#allocation7 + $0xbf0] sm:$0xff]
    %v466 = vld [vmem:[#allocation7 + $0xbf8] sm:$0xf]
    %v467 = vld [vmem:[#allocation7 + $0xbfc] sm:$0xff]
    %v468 = vld [vmem:[#allocation7 + $0xc04] sm:$0xff]
    %v469 = vld [vmem:[#allocation7 + $0xc0c] sm:$0xff]
    %v470 = vld [vmem:[#allocation7 + $0xc14] sm:$0xff]
    %v471 = vld [vmem:[#allocation7 + $0xc1c] sm:$0xff]
    %v472 = vld [vmem:[#allocation7 + $0xc24] sm:$0xff]
    %v473 = vld [vmem:[#allocation7 + $0xc2c] sm:$0xf]
    %v474 = vld [vmem:[#allocation7 + $0xc30] sm:$0xff]
    %v475 = vld [vmem:[#allocation7 + $0xc38] sm:$0xff]
    %v476 = vld [vmem:[#allocation7 + $0xc40] sm:$0xff]
    %v477 = vld [vmem:[#allocation7 + $0xc48] sm:$0xff]
    %v478 = vld [vmem:[#allocation7 + $0xc50] sm:$0xff]
    %v479 = vld [vmem:[#allocation7 + $0xc58] sm:$0xff]
    %v480 = vld [vmem:[#allocation7 + $0xc60] sm:$0xf]
    %v481 = vld [vmem:[#allocation7 + $0xc64] sm:$0xff]
    %v482 = vld [vmem:[#allocation7 + $0xc6c] sm:$0xff]
    %v483 = vld [vmem:[#allocation7 + $0xc74] sm:$0xff]
    %v484 = vld [vmem:[#allocation7 + $0xc7c] sm:$0xff]
    %v485 = vld [vmem:[#allocation7 + $0xc84] sm:$0xff]
    %v486 = vld [vmem:[#allocation7 + $0xc8c] sm:$0xff]
    %v487 = vld [vmem:[#allocation7 + $0xc94] sm:$0xf]
    %v488 = vld [vmem:[#allocation7 + $0xc98] sm:$0xff]
    %v489 = vld [vmem:[#allocation7 + $0xca0] sm:$0xff]
    %v490 = vld [vmem:[#allocation7 + $0xca8] sm:$0xff]
    %v491 = vld [vmem:[#allocation7 + $0xcb0] sm:$0xff]
    %v492 = vld [vmem:[#allocation7 + $0xcb8] sm:$0xff]
    %v493 = vld [vmem:[#allocation7 + $0xcc0] sm:$0xff]
    %v494 = vld [vmem:[#allocation7 + $0xcc8] sm:$0xf]
    %v495 = vld [vmem:[#allocation7 + $0xccc] sm:$0xff]
    %v496 = vld [vmem:[#allocation7 + $0xcd4] sm:$0xff]
    %v497 = vld [vmem:[#allocation7 + $0xcdc] sm:$0xff]
    %v498 = vld [vmem:[#allocation7 + $0xce4] sm:$0xff]
    %v499 = vld [vmem:[#allocation7 + $0xcec] sm:$0xff]
    %v500 = vld [vmem:[#allocation7 + $0xcf4] sm:$0xff]
    %v501 = vld [vmem:[#allocation7 + $0xcfc] sm:$0xf]
    %v502 = vld [vmem:[#allocation7 + $0xd00] sm:$0xff]
    %v503 = vld [vmem:[#allocation7 + $0xd08] sm:$0xff]
    %v504 = vld [vmem:[#allocation7 + $0xd10] sm:$0xff]
    %v505 = vld [vmem:[#allocation7 + $0xd18] sm:$0xff]
    %v506 = vld [vmem:[#allocation7 + $0xd20] sm:$0xff]
    %v507 = vld [vmem:[#allocation7 + $0xd28] sm:$0xff]
    %v508 = vld [vmem:[#allocation7 + $0xd30] sm:$0xf]
    %v509 = vld [vmem:[#allocation7 + $0xd34] sm:$0xff]
    %v510 = vld [vmem:[#allocation7 + $0xd3c] sm:$0xff]
    %v511 = vld [vmem:[#allocation7 + $0xd44] sm:$0xff]
    %v512 = vld [vmem:[#allocation7 + $0xd4c] sm:$0xff]
    %v513 = vld [vmem:[#allocation7 + $0xd54] sm:$0xff]
    %v514 = vld [vmem:[#allocation7 + $0xd5c] sm:$0xff]
    %v515 = vld [vmem:[#allocation7 + $0xd64] sm:$0xf]
    %v516 = vld [vmem:[#allocation7 + $0xd68] sm:$0xff]
    %v517 = vld [vmem:[#allocation7 + $0xd70] sm:$0xff]
    %v518 = vld [vmem:[#allocation7 + $0xd78] sm:$0xff]
    %v519 = vld [vmem:[#allocation7 + $0xd80] sm:$0xff]
    %v520 = vld [vmem:[#allocation7 + $0xd88] sm:$0xff]
    %v521 = vld [vmem:[#allocation7 + $0xd90] sm:$0xff]
    %v522 = vld [vmem:[#allocation7 + $0xd98] sm:$0xf]
    %v523 = vld [vmem:[#allocation7 + $0xd9c] sm:$0xff]
    %v524 = vld [vmem:[#allocation7 + $0xda4] sm:$0xff]
    %v525 = vld [vmem:[#allocation7 + $0xdac] sm:$0xff]
    %v526 = vld [vmem:[#allocation7 + $0xdb4] sm:$0xff]
    %v527 = vld [vmem:[#allocation7 + $0xdbc] sm:$0xff]
    %v528 = vld [vmem:[#allocation7 + $0xdc4] sm:$0xff]
    %v529 = vld [vmem:[#allocation7 + $0xdcc] sm:$0xf]
    %v530 = vld [vmem:[#allocation7 + $0xdd0] sm:$0xff]
    %v531 = vld [vmem:[#allocation7 + $0xdd8] sm:$0xff]
    %v532 = vld [vmem:[#allocation7 + $0xde0] sm:$0xff]
    %v533 = vld [vmem:[#allocation7 + $0xde8] sm:$0xff]
    %v534 = vld [vmem:[#allocation7 + $0xdf0] sm:$0xff]
    %v535 = vld [vmem:[#allocation7 + $0xdf8] sm:$0xff]
    %v536 = vld [vmem:[#allocation7 + $0xe00] sm:$0xf]
    %v537 = vld [vmem:[#allocation7 + $0xe04] sm:$0xff]
    %v538 = vld [vmem:[#allocation7 + $0xe0c] sm:$0xff]
    %v539 = vld [vmem:[#allocation7 + $0xe14] sm:$0xff]
    %v540 = vld [vmem:[#allocation7 + $0xe1c] sm:$0xff]
    %v541 = vld [vmem:[#allocation7 + $0xe24] sm:$0xff]
    %v542 = vld [vmem:[#allocation7 + $0xe2c] sm:$0xff]
    %v543 = vld [vmem:[#allocation7 + $0xe34] sm:$0xf]
    %v544 = vld [vmem:[#allocation7 + $0xe38] sm:$0xff]
    %v545 = vld [vmem:[#allocation7 + $0xe40] sm:$0xff]
    %v546 = vld [vmem:[#allocation7 + $0xe48] sm:$0xff]
    %v547 = vld [vmem:[#allocation7 + $0xe50] sm:$0xff]
    %v548 = vld [vmem:[#allocation7 + $0xe58] sm:$0xff]
    %v549 = vld [vmem:[#allocation7 + $0xe60] sm:$0xff]
    %v550 = vld [vmem:[#allocation7 + $0xe68] sm:$0xf]
    %v551 = vld [vmem:[#allocation7 + $0xe6c] sm:$0xff]
    %v552 = vld [vmem:[#allocation7 + $0xe74] sm:$0xff]
    %v553 = vld [vmem:[#allocation7 + $0xe7c] sm:$0xff]
    %v554 = vld [vmem:[#allocation7 + $0xe84] sm:$0xff]
    %v555 = vld [vmem:[#allocation7 + $0xe8c] sm:$0xff]
    %v556 = vld [vmem:[#allocation7 + $0xe94] sm:$0xff]
    %v557 = vld [vmem:[#allocation7 + $0xe9c] sm:$0xf]
    %v558 = vld [vmem:[#allocation7 + $0xea0] sm:$0xff]
    %v559 = vld [vmem:[#allocation7 + $0xea8] sm:$0xff]
    %v560 = vld [vmem:[#allocation7 + $0xeb0] sm:$0xff]
    %v561 = vld [vmem:[#allocation7 + $0xeb8] sm:$0xff]
    %v562 = vld [vmem:[#allocation7 + $0xec0] sm:$0xff]
    %v563 = vld [vmem:[#allocation7 + $0xec8] sm:$0xff]
    %v564 = vld [vmem:[#allocation7 + $0xed0] sm:$0xf]
    %v565 = vld [vmem:[#allocation7 + $0xed4] sm:$0xff]
    %v566 = vld [vmem:[#allocation7 + $0xedc] sm:$0xff]
    %v567 = vld [vmem:[#allocation7 + $0xee4] sm:$0xff]
    %v568 = vld [vmem:[#allocation7 + $0xeec] sm:$0xff]
    %v569 = vld [vmem:[#allocation7 + $0xef4] sm:$0xff]
    %v570 = vld [vmem:[#allocation7 + $0xefc] sm:$0xff]
    %v571 = vld [vmem:[#allocation7 + $0xf04] sm:$0xf]
    %v572 = vld [vmem:[#allocation7 + $0xf08] sm:$0xff]
    %v573 = vld [vmem:[#allocation7 + $0xf10] sm:$0xff]
    %v574 = vld [vmem:[#allocation7 + $0xf18] sm:$0xff]
    %v575 = vld [vmem:[#allocation7 + $0xf20] sm:$0xff]
    %v576 = vld [vmem:[#allocation7 + $0xf28] sm:$0xff]
    %v577 = vld [vmem:[#allocation7 + $0xf30] sm:$0xff]
    %v578 = vld [vmem:[#allocation7 + $0xf38] sm:$0xf]
    %v579 = vld [vmem:[#allocation7 + $0xf3c] sm:$0xff]
    %v580 = vld [vmem:[#allocation7 + $0xf44] sm:$0xff]
    %v581 = vld [vmem:[#allocation7 + $0xf4c] sm:$0xff]
    %v582 = vld [vmem:[#allocation7 + $0xf54] sm:$0xff]
    %v583 = vld [vmem:[#allocation7 + $0xf5c] sm:$0xff]
    %v584 = vld [vmem:[#allocation7 + $0xf64] sm:$0xff]
    %v585 = vld [vmem:[#allocation7 + $0xf6c] sm:$0xf]
    %v586 = vld [vmem:[#allocation7 + $0xf70] sm:$0xff]
    %v587 = vld [vmem:[#allocation7 + $0xf78] sm:$0xff]
    %v588 = vld [vmem:[#allocation7 + $0xf80] sm:$0xff]
    %v589 = vld [vmem:[#allocation7 + $0xf88] sm:$0xff]
    %v590 = vld [vmem:[#allocation7 + $0xf90] sm:$0xff]
    %v591 = vld [vmem:[#allocation7 + $0xf98] sm:$0xff]
    %v592 = vld [vmem:[#allocation7 + $0xfa0] sm:$0xf]
    %v593 = vld [vmem:[#allocation7 + $0xfa4] sm:$0xff]
    %v594 = vld [vmem:[#allocation7 + $0xfac] sm:$0xff]
    %v595 = vld [vmem:[#allocation7 + $0xfb4] sm:$0xff]
    %v596 = vld [vmem:[#allocation7 + $0xfbc] sm:$0xff]
    %v597 = vld [vmem:[#allocation7 + $0xfc4] sm:$0xff]
    %v598 = vld [vmem:[#allocation7 + $0xfcc] sm:$0xff]
    %v599 = vld [vmem:[#allocation7 + $0xfd4] sm:$0xf]
    %v600 = vld [vmem:[#allocation7 + $0xfd8] sm:$0xff]
    %v601 = vld [vmem:[#allocation7 + $0xfe0] sm:$0xff]
    %v602 = vld [vmem:[#allocation7 + $0xfe8] sm:$0xff]
    %v603 = vld [vmem:[#allocation7 + $0xff0] sm:$0xff]
    %v604 = vld [vmem:[#allocation7 + $0xff8] sm:$0xff]
    %v605 = vld [vmem:[#allocation7 + $0x1000] sm:$0xff]
    %v606 = vld [vmem:[#allocation7 + $0x1008] sm:$0xf]
    %v607 = vld [vmem:[#allocation7 + $0x100c] sm:$0xff]
    %v608 = vld [vmem:[#allocation7 + $0x1014] sm:$0xff]
    %v609 = vld [vmem:[#allocation7 + $0x101c] sm:$0xff]
    %v610 = vld [vmem:[#allocation7 + $0x1024] sm:$0xff]
    %v611 = vld [vmem:[#allocation7 + $0x102c] sm:$0xff]
    %v612 = vld [vmem:[#allocation7 + $0x1034] sm:$0xff]
    %v613 = vld [vmem:[#allocation7 + $0x103c] sm:$0xf]
    %v615 = vcombine.high %v53, %v53
    %v617 = vunpack.c.l.s4 1966171168
    %v618 = vunpack.c.0.s8 %v617
    %v619 = vlaneseq
    %v620 = vshrl.u32 %v619, 7
    %v621 = vsub.s32 %v618, %v620
    %v622 = vrot.slane %v53, %v621
    %v624 = vunpack.c.l.s4 1966171168
    %v625 = vunpack.c.0.s8 %v624
    %v626 = vlaneseq
    %v627 = vshrl.u32 %v626, 7
    %v628 = vsub.s32 %v625, %v627
    %v629 = vrot.slane %v615, %v628
    %v630 = vcombine.high %v622, %v622
    %v632 = vunpack.c.l.s4 1966171168
    %v633 = vunpack.c.0.s8 %v632
    %v634 = vlaneseq
    %v635 = vshrl.u32 %v634, 7
    %v636 = vsub.s32 %v633, %v635
    %v637 = vrot.slane %v622, %v636
    %v639 = vunpack.c.l.s4 1966171168
    %v640 = vunpack.c.0.s8 %v639
    %v641 = vlaneseq
    %v642 = vshrl.u32 %v641, 7
    %v643 = vsub.s32 %v640, %v642
    %v644 = vrot.slane %v629, %v643
    %v646 = vunpack.c.l.s4 1966171168
    %v647 = vunpack.c.0.s8 %v646
    %v648 = vlaneseq
    %v649 = vshrl.u32 %v648, 7
    %v650 = vsub.s32 %v647, %v649
    %v651 = vrot.slane %v630, %v650
    %v652 = vcombine.high %v637, %v637
    %v653 = vcombine.high %v651, %v651
    %v1219 = vunpack.c.l.b16 %v54
    %v1220 = vunpack.c.h.b16 %v54
    %v1221 = vunpack.c.l.b16 %v55
    %v1222 = vunpack.c.h.b16 %v55
    %v1223 = vunpack.c.l.b16 %v56
    %v1224 = vunpack.c.h.b16 %v56
    %v1225 = vunpack.c.l.b16 %v57
    %v1226 = vunpack.c.h.b16 %v57
    %v1227 = vunpack.c.l.b16 %v58
    %v1228 = vunpack.c.h.b16 %v58
    %v1229 = vunpack.c.l.b16 %v59
    %v1230 = vunpack.c.h.b16 %v59
    %v1231 = vunpack.c.l.b16 %v60
    %v1232 = vunpack.c.l.b16 %v61
    %v1233 = vunpack.c.h.b16 %v61
    %v1234 = vunpack.c.l.b16 %v62
    %v1235 = vunpack.c.h.b16 %v62
    %v1236 = vunpack.c.l.b16 %v63
    %v1237 = vunpack.c.h.b16 %v63
    %v1238 = vunpack.c.l.b16 %v64
    %v1239 = vunpack.c.h.b16 %v64
    %v1240 = vunpack.c.l.b16 %v65
    %v1241 = vunpack.c.h.b16 %v65
    %v1242 = vunpack.c.l.b16 %v66
    %v1243 = vunpack.c.h.b16 %v66
    %v1244 = vunpack.c.l.b16 %v67
    %v1245 = vunpack.c.l.b16 %v68
    %v1246 = vunpack.c.h.b16 %v68
    %v1247 = vunpack.c.l.b16 %v69
    %v1248 = vunpack.c.h.b16 %v69
    %v1249 = vunpack.c.l.b16 %v70
    %v1250 = vunpack.c.h.b16 %v70
    %v1251 = vunpack.c.l.b16 %v71
    %v1252 = vunpack.c.h.b16 %v71
    %v1253 = vunpack.c.l.b16 %v72
    %v1254 = vunpack.c.h.b16 %v72
    %v1255 = vunpack.c.l.b16 %v73
    %v1256 = vunpack.c.h.b16 %v73
    %v1257 = vunpack.c.l.b16 %v74
    %v1258 = vunpack.c.l.b16 %v75
    %v1259 = vunpack.c.h.b16 %v75
    %v1260 = vunpack.c.l.b16 %v76
    %v1261 = vunpack.c.h.b16 %v76
    %v1262 = vunpack.c.l.b16 %v77
    %v1263 = vunpack.c.h.b16 %v77
    %v1264 = vunpack.c.l.b16 %v78
    %v1265 = vunpack.c.h.b16 %v78
    %v1266 = vunpack.c.l.b16 %v79
    %v1267 = vunpack.c.h.b16 %v79
    %v1268 = vunpack.c.l.b16 %v80
    %v1269 = vunpack.c.h.b16 %v80
    %v1270 = vunpack.c.l.b16 %v81
    %v1271 = vunpack.c.l.b16 %v82
    %v1272 = vunpack.c.h.b16 %v82
    %v1273 = vunpack.c.l.b16 %v83
    %v1274 = vunpack.c.h.b16 %v83
    %v1275 = vunpack.c.l.b16 %v84
    %v1276 = vunpack.c.h.b16 %v84
    %v1277 = vunpack.c.l.b16 %v85
    %v1278 = vunpack.c.h.b16 %v85
    %v1279 = vunpack.c.l.b16 %v86
    %v1280 = vunpack.c.h.b16 %v86
    %v1281 = vunpack.c.l.b16 %v87
    %v1282 = vunpack.c.h.b16 %v87
    %v1283 = vunpack.c.l.b16 %v88
    %v1284 = vunpack.c.l.b16 %v89
    %v1285 = vunpack.c.h.b16 %v89
    %v1286 = vunpack.c.l.b16 %v90
    %v1287 = vunpack.c.h.b16 %v90
    %v1288 = vunpack.c.l.b16 %v91
    %v1289 = vunpack.c.h.b16 %v91
    %v1290 = vunpack.c.l.b16 %v92
    %v1291 = vunpack.c.h.b16 %v92
    %v1292 = vunpack.c.l.b16 %v93
    %v1293 = vunpack.c.h.b16 %v93
    %v1294 = vunpack.c.l.b16 %v94
    %v1295 = vunpack.c.h.b16 %v94
    %v1296 = vunpack.c.l.b16 %v95
    %v1297 = vunpack.c.l.b16 %v96
    %v1298 = vunpack.c.h.b16 %v96
    %v1299 = vunpack.c.l.b16 %v97
    %v1300 = vunpack.c.h.b16 %v97
    %v1301 = vunpack.c.l.b16 %v98
    %v1302 = vunpack.c.h.b16 %v98
    %v1303 = vunpack.c.l.b16 %v99
    %v1304 = vunpack.c.h.b16 %v99
    %v1305 = vunpack.c.l.b16 %v100
    %v1306 = vunpack.c.h.b16 %v100
    %v1307 = vunpack.c.l.b16 %v101
    %v1308 = vunpack.c.h.b16 %v101
    %v1309 = vunpack.c.l.b16 %v102
    %v1310 = vunpack.c.l.b16 %v103
    %v1311 = vunpack.c.h.b16 %v103
    %v1312 = vunpack.c.l.b16 %v104
    %v1313 = vunpack.c.h.b16 %v104
    %v1314 = vunpack.c.l.b16 %v105
    %v1315 = vunpack.c.h.b16 %v105
    %v1316 = vunpack.c.l.b16 %v106
    %v1317 = vunpack.c.h.b16 %v106
    %v1318 = vunpack.c.l.b16 %v107
    %v1319 = vunpack.c.h.b16 %v107
    %v1320 = vunpack.c.l.b16 %v108
    %v1321 = vunpack.c.h.b16 %v108
    %v1322 = vunpack.c.l.b16 %v109
    %v1323 = vunpack.c.l.b16 %v110
    %v1324 = vunpack.c.h.b16 %v110
    %v1325 = vunpack.c.l.b16 %v111
    %v1326 = vunpack.c.h.b16 %v111
    %v1327 = vunpack.c.l.b16 %v112
    %v1328 = vunpack.c.h.b16 %v112
    %v1329 = vunpack.c.l.b16 %v113
    %v1330 = vunpack.c.h.b16 %v113
    %v1331 = vunpack.c.l.b16 %v114
    %v1332 = vunpack.c.h.b16 %v114
    %v1333 = vunpack.c.l.b16 %v115
    %v1334 = vunpack.c.h.b16 %v115
    %v1335 = vunpack.c.l.b16 %v116
    %v1336 = vunpack.c.l.b16 %v117
    %v1337 = vunpack.c.h.b16 %v117
    %v1338 = vunpack.c.l.b16 %v118
    %v1339 = vunpack.c.h.b16 %v118
    %v1340 = vunpack.c.l.b16 %v119
    %v1341 = vunpack.c.h.b16 %v119
    %v1342 = vunpack.c.l.b16 %v120
    %v1343 = vunpack.c.h.b16 %v120
    %v1344 = vunpack.c.l.b16 %v121
    %v1345 = vunpack.c.h.b16 %v121
    %v1346 = vunpack.c.l.b16 %v122
    %v1347 = vunpack.c.h.b16 %v122
    %v1348 = vunpack.c.l.b16 %v123
    %v1349 = vunpack.c.l.b16 %v124
    %v1350 = vunpack.c.h.b16 %v124
    %v1351 = vunpack.c.l.b16 %v125
    %v1352 = vunpack.c.h.b16 %v125
    %v1353 = vunpack.c.l.b16 %v126
    %v1354 = vunpack.c.h.b16 %v126
    %v1355 = vunpack.c.l.b16 %v127
    %v1356 = vunpack.c.h.b16 %v127
    %v1357 = vunpack.c.l.b16 %v128
    %v1358 = vunpack.c.h.b16 %v128
    %v1359 = vunpack.c.l.b16 %v129
    %v1360 = vunpack.c.h.b16 %v129
    %v1361 = vunpack.c.l.b16 %v130
    %v1362 = vunpack.c.l.b16 %v131
    %v1363 = vunpack.c.h.b16 %v131
    %v1364 = vunpack.c.l.b16 %v132
    %v1365 = vunpack.c.h.b16 %v132
    %v1366 = vunpack.c.l.b16 %v133
    %v1367 = vunpack.c.h.b16 %v133
    %v1368 = vunpack.c.l.b16 %v134
    %v1369 = vunpack.c.h.b16 %v134
    %v1370 = vunpack.c.l.b16 %v135
    %v1371 = vunpack.c.h.b16 %v135
    %v1372 = vunpack.c.l.b16 %v136
    %v1373 = vunpack.c.h.b16 %v136
    %v1374 = vunpack.c.l.b16 %v137
    %v1375 = vunpack.c.l.b16 %v138
    %v1376 = vunpack.c.h.b16 %v138
    %v1377 = vunpack.c.l.b16 %v139
    %v1378 = vunpack.c.h.b16 %v139
    %v1379 = vunpack.c.l.b16 %v140
    %v1380 = vunpack.c.h.b16 %v140
    %v1381 = vunpack.c.l.b16 %v141
    %v1382 = vunpack.c.h.b16 %v141
    %v1383 = vunpack.c.l.b16 %v142
    %v1384 = vunpack.c.h.b16 %v142
    %v1385 = vunpack.c.l.b16 %v143
    %v1386 = vunpack.c.h.b16 %v143
    %v1387 = vunpack.c.l.b16 %v144
    %v1388 = vunpack.c.l.b16 %v145
    %v1389 = vunpack.c.h.b16 %v145
    %v1390 = vunpack.c.l.b16 %v146
    %v1391 = vunpack.c.h.b16 %v146
    %v1392 = vunpack.c.l.b16 %v147
    %v1393 = vunpack.c.h.b16 %v147
    %v1394 = vunpack.c.l.b16 %v148
    %v1395 = vunpack.c.h.b16 %v148
    %v1396 = vunpack.c.l.b16 %v149
    %v1397 = vunpack.c.h.b16 %v149
    %v1398 = vunpack.c.l.b16 %v150
    %v1399 = vunpack.c.h.b16 %v150
    %v1400 = vunpack.c.l.b16 %v151
    %v1401 = vunpack.c.l.b16 %v152
    %v1402 = vunpack.c.h.b16 %v152
    %v1403 = vunpack.c.l.b16 %v153
    %v1404 = vunpack.c.h.b16 %v153
    %v1405 = vunpack.c.l.b16 %v154
    %v1406 = vunpack.c.h.b16 %v154
    %v1407 = vunpack.c.l.b16 %v155
    %v1408 = vunpack.c.h.b16 %v155
    %v1409 = vunpack.c.l.b16 %v156
    %v1410 = vunpack.c.h.b16 %v156
    %v1411 = vunpack.c.l.b16 %v157
    %v1412 = vunpack.c.h.b16 %v157
    %v1413 = vunpack.c.l.b16 %v158
    %v1414 = vunpack.c.l.b16 %v159
    %v1415 = vunpack.c.h.b16 %v159
    %v1416 = vunpack.c.l.b16 %v160
    %v1417 = vunpack.c.h.b16 %v160
    %v1418 = vunpack.c.l.b16 %v161
    %v1419 = vunpack.c.h.b16 %v161
    %v1420 = vunpack.c.l.b16 %v162
    %v1421 = vunpack.c.h.b16 %v162
    %v1422 = vunpack.c.l.b16 %v163
    %v1423 = vunpack.c.h.b16 %v163
    %v1424 = vunpack.c.l.b16 %v164
    %v1425 = vunpack.c.h.b16 %v164
    %v1426 = vunpack.c.l.b16 %v165
    %v1427 = vunpack.c.l.b16 %v166
    %v1428 = vunpack.c.h.b16 %v166
    %v1429 = vunpack.c.l.b16 %v167
    %v1430 = vunpack.c.h.b16 %v167
    %v1431 = vunpack.c.l.b16 %v168
    %v1432 = vunpack.c.h.b16 %v168
    %v1433 = vunpack.c.l.b16 %v169
    %v1434 = vunpack.c.h.b16 %v169
    %v1435 = vunpack.c.l.b16 %v170
    %v1436 = vunpack.c.h.b16 %v170
    %v1437 = vunpack.c.l.b16 %v171
    %v1438 = vunpack.c.h.b16 %v171
    %v1439 = vunpack.c.l.b16 %v172
    %v1440 = vunpack.c.l.b16 %v173
    %v1441 = vunpack.c.h.b16 %v173
    %v1442 = vunpack.c.l.b16 %v174
    %v1443 = vunpack.c.h.b16 %v174
    %v1444 = vunpack.c.l.b16 %v175
    %v1445 = vunpack.c.h.b16 %v175
    %v1446 = vunpack.c.l.b16 %v176
    %v1447 = vunpack.c.h.b16 %v176
    %v1448 = vunpack.c.l.b16 %v177
    %v1449 = vunpack.c.h.b16 %v177
    %v1450 = vunpack.c.l.b16 %v178
    %v1451 = vunpack.c.h.b16 %v178
    %v1452 = vunpack.c.l.b16 %v179
    %v1453 = vunpack.c.l.b16 %v180
    %v1454 = vunpack.c.h.b16 %v180
    %v1455 = vunpack.c.l.b16 %v181
    %v1456 = vunpack.c.h.b16 %v181
    %v1457 = vunpack.c.l.b16 %v182
    %v1458 = vunpack.c.h.b16 %v182
    %v1459 = vunpack.c.l.b16 %v183
    %v1460 = vunpack.c.h.b16 %v183
    %v1461 = vunpack.c.l.b16 %v184
    %v1462 = vunpack.c.h.b16 %v184
    %v1463 = vunpack.c.l.b16 %v185
    %v1464 = vunpack.c.h.b16 %v185
    %v1465 = vunpack.c.l.b16 %v186
    %v1466 = vunpack.c.l.b16 %v187
    %v1467 = vunpack.c.h.b16 %v187
    %v1468 = vunpack.c.l.b16 %v188
    %v1469 = vunpack.c.h.b16 %v188
    %v1470 = vunpack.c.l.b16 %v189
    %v1471 = vunpack.c.h.b16 %v189
    %v1472 = vunpack.c.l.b16 %v190
    %v1473 = vunpack.c.h.b16 %v190
    %v1474 = vunpack.c.l.b16 %v191
    %v1475 = vunpack.c.h.b16 %v191
    %v1476 = vunpack.c.l.b16 %v192
    %v1477 = vunpack.c.h.b16 %v192
    %v1478 = vunpack.c.l.b16 %v193
    %v1479 = vunpack.c.l.b16 %v194
    %v1480 = vunpack.c.h.b16 %v194
    %v1481 = vunpack.c.l.b16 %v195
    %v1482 = vunpack.c.h.b16 %v195
    %v1483 = vunpack.c.l.b16 %v196
    %v1484 = vunpack.c.h.b16 %v196
    %v1485 = vunpack.c.l.b16 %v197
    %v1486 = vunpack.c.h.b16 %v197
    %v1487 = vunpack.c.l.b16 %v198
    %v1488 = vunpack.c.h.b16 %v198
    %v1489 = vunpack.c.l.b16 %v199
    %v1490 = vunpack.c.h.b16 %v199
    %v1491 = vunpack.c.l.b16 %v200
    %v1492 = vunpack.c.l.b16 %v201
    %v1493 = vunpack.c.h.b16 %v201
    %v1494 = vunpack.c.l.b16 %v202
    %v1495 = vunpack.c.h.b16 %v202
    %v1496 = vunpack.c.l.b16 %v203
    %v1497 = vunpack.c.h.b16 %v203
    %v1498 = vunpack.c.l.b16 %v204
    %v1499 = vunpack.c.h.b16 %v204
    %v1500 = vunpack.c.l.b16 %v205
    %v1501 = vunpack.c.h.b16 %v205
    %v1502 = vunpack.c.l.b16 %v206
    %v1503 = vunpack.c.h.b16 %v206
    %v1504 = vunpack.c.l.b16 %v207
    %v1505 = vunpack.c.l.b16 %v208
    %v1506 = vunpack.c.h.b16 %v208
    %v1507 = vunpack.c.l.b16 %v209
    %v1508 = vunpack.c.h.b16 %v209
    %v1509 = vunpack.c.l.b16 %v210
    %v1510 = vunpack.c.h.b16 %v210
    %v1511 = vunpack.c.l.b16 %v211
    %v1512 = vunpack.c.h.b16 %v211
    %v1513 = vunpack.c.l.b16 %v212
    %v1514 = vunpack.c.h.b16 %v212
    %v1515 = vunpack.c.l.b16 %v213
    %v1516 = vunpack.c.h.b16 %v213
    %v1517 = vunpack.c.l.b16 %v214
    %v1518 = vunpack.c.l.b16 %v215
    %v1519 = vunpack.c.h.b16 %v215
    %v1520 = vunpack.c.l.b16 %v216
    %v1521 = vunpack.c.h.b16 %v216
    %v1522 = vunpack.c.l.b16 %v217
    %v1523 = vunpack.c.h.b16 %v217
    %v1524 = vunpack.c.l.b16 %v218
    %v1525 = vunpack.c.h.b16 %v218
    %v1526 = vunpack.c.l.b16 %v219
    %v1527 = vunpack.c.h.b16 %v219
    %v1528 = vunpack.c.l.b16 %v220
    %v1529 = vunpack.c.h.b16 %v220
    %v1530 = vunpack.c.l.b16 %v221
    %v1531 = vunpack.c.l.b16 %v222
    %v1532 = vunpack.c.h.b16 %v222
    %v1533 = vunpack.c.l.b16 %v223
    %v1534 = vunpack.c.h.b16 %v223
    %v1535 = vunpack.c.l.b16 %v224
    %v1536 = vunpack.c.h.b16 %v224
    %v1537 = vunpack.c.l.b16 %v225
    %v1538 = vunpack.c.h.b16 %v225
    %v1539 = vunpack.c.l.b16 %v226
    %v1540 = vunpack.c.h.b16 %v226
    %v1541 = vunpack.c.l.b16 %v227
    %v1542 = vunpack.c.h.b16 %v227
    %v1543 = vunpack.c.l.b16 %v228
    %v1544 = vunpack.c.l.b16 %v229
    %v1545 = vunpack.c.h.b16 %v229
    %v1546 = vunpack.c.l.b16 %v230
    %v1547 = vunpack.c.h.b16 %v230
    %v1548 = vunpack.c.l.b16 %v231
    %v1549 = vunpack.c.h.b16 %v231
    %v1550 = vunpack.c.l.b16 %v232
    %v1551 = vunpack.c.h.b16 %v232
    %v1552 = vunpack.c.l.b16 %v233
    %v1553 = vunpack.c.h.b16 %v233
    %v1554 = vunpack.c.l.b16 %v234
    %v1555 = vunpack.c.h.b16 %v234
    %v1556 = vunpack.c.l.b16 %v235
    %v1557 = vunpack.c.l.b16 %v236
    %v1558 = vunpack.c.h.b16 %v236
    %v1559 = vunpack.c.l.b16 %v237
    %v1560 = vunpack.c.h.b16 %v237
    %v1561 = vunpack.c.l.b16 %v238
    %v1562 = vunpack.c.h.b16 %v238
    %v1563 = vunpack.c.l.b16 %v239
    %v1564 = vunpack.c.h.b16 %v239
    %v1565 = vunpack.c.l.b16 %v240
    %v1566 = vunpack.c.h.b16 %v240
    %v1567 = vunpack.c.l.b16 %v241
    %v1568 = vunpack.c.h.b16 %v241
    %v1569 = vunpack.c.l.b16 %v242
    %v1570 = vunpack.c.l.b16 %v243
    %v1571 = vunpack.c.h.b16 %v243
    %v1572 = vunpack.c.l.b16 %v244
    %v1573 = vunpack.c.h.b16 %v244
    %v1574 = vunpack.c.l.b16 %v245
    %v1575 = vunpack.c.h.b16 %v245
    %v1576 = vunpack.c.l.b16 %v246
    %v1577 = vunpack.c.h.b16 %v246
    %v1578 = vunpack.c.l.b16 %v247
    %v1579 = vunpack.c.h.b16 %v247
    %v1580 = vunpack.c.l.b16 %v248
    %v1581 = vunpack.c.h.b16 %v248
    %v1582 = vunpack.c.l.b16 %v249
    %v1583 = vunpack.c.l.b16 %v250
    %v1584 = vunpack.c.h.b16 %v250
    %v1585 = vunpack.c.l.b16 %v251
    %v1586 = vunpack.c.h.b16 %v251
    %v1587 = vunpack.c.l.b16 %v252
    %v1588 = vunpack.c.h.b16 %v252
    %v1589 = vunpack.c.l.b16 %v253
    %v1590 = vunpack.c.h.b16 %v253
    %v1591 = vunpack.c.l.b16 %v254
    %v1592 = vunpack.c.h.b16 %v254
    %v1593 = vunpack.c.l.b16 %v255
    %v1594 = vunpack.c.h.b16 %v255
    %v1595 = vunpack.c.l.b16 %v256
    %v1596 = vunpack.c.l.b16 %v257
    %v1597 = vunpack.c.h.b16 %v257
    %v1598 = vunpack.c.l.b16 %v258
    %v1599 = vunpack.c.h.b16 %v258
    %v1600 = vunpack.c.l.b16 %v259
    %v1601 = vunpack.c.h.b16 %v259
    %v1602 = vunpack.c.l.b16 %v260
    %v1603 = vunpack.c.h.b16 %v260
    %v1604 = vunpack.c.l.b16 %v261
    %v1605 = vunpack.c.h.b16 %v261
    %v1606 = vunpack.c.l.b16 %v262
    %v1607 = vunpack.c.h.b16 %v262
    %v1608 = vunpack.c.l.b16 %v263
    %v1609 = vunpack.c.l.b16 %v264
    %v1610 = vunpack.c.h.b16 %v264
    %v1611 = vunpack.c.l.b16 %v265
    %v1612 = vunpack.c.h.b16 %v265
    %v1613 = vunpack.c.l.b16 %v266
    %v1614 = vunpack.c.h.b16 %v266
    %v1615 = vunpack.c.l.b16 %v267
    %v1616 = vunpack.c.h.b16 %v267
    %v1617 = vunpack.c.l.b16 %v268
    %v1618 = vunpack.c.h.b16 %v268
    %v1619 = vunpack.c.l.b16 %v269
    %v1620 = vunpack.c.h.b16 %v269
    %v1621 = vunpack.c.l.b16 %v270
    %v1622 = vunpack.c.l.b16 %v271
    %v1623 = vunpack.c.h.b16 %v271
    %v1624 = vunpack.c.l.b16 %v272
    %v1625 = vunpack.c.h.b16 %v272
    %v1626 = vunpack.c.l.b16 %v273
    %v1627 = vunpack.c.h.b16 %v273
    %v1628 = vunpack.c.l.b16 %v274
    %v1629 = vunpack.c.h.b16 %v274
    %v1630 = vunpack.c.l.b16 %v275
    %v1631 = vunpack.c.h.b16 %v275
    %v1632 = vunpack.c.l.b16 %v276
    %v1633 = vunpack.c.h.b16 %v276
    %v1634 = vunpack.c.l.b16 %v277
    %v1635 = vunpack.c.l.b16 %v278
    %v1636 = vunpack.c.h.b16 %v278
    %v1637 = vunpack.c.l.b16 %v279
    %v1638 = vunpack.c.h.b16 %v279
    %v1639 = vunpack.c.l.b16 %v280
    %v1640 = vunpack.c.h.b16 %v280
    %v1641 = vunpack.c.l.b16 %v281
    %v1642 = vunpack.c.h.b16 %v281
    %v1643 = vunpack.c.l.b16 %v282
    %v1644 = vunpack.c.h.b16 %v282
    %v1645 = vunpack.c.l.b16 %v283
    %v1646 = vunpack.c.h.b16 %v283
    %v1647 = vunpack.c.l.b16 %v284
    %v1648 = vunpack.c.l.b16 %v285
    %v1649 = vunpack.c.h.b16 %v285
    %v1650 = vunpack.c.l.b16 %v286
    %v1651 = vunpack.c.h.b16 %v286
    %v1652 = vunpack.c.l.b16 %v287
    %v1653 = vunpack.c.h.b16 %v287
    %v1654 = vunpack.c.l.b16 %v288
    %v1655 = vunpack.c.h.b16 %v288
    %v1656 = vunpack.c.l.b16 %v289
    %v1657 = vunpack.c.h.b16 %v289
    %v1658 = vunpack.c.l.b16 %v290
    %v1659 = vunpack.c.h.b16 %v290
    %v1660 = vunpack.c.l.b16 %v291
    %v1661 = vunpack.c.l.b16 %v292
    %v1662 = vunpack.c.h.b16 %v292
    %v1663 = vunpack.c.l.b16 %v293
    %v1664 = vunpack.c.h.b16 %v293
    %v1665 = vunpack.c.l.b16 %v294
    %v1666 = vunpack.c.h.b16 %v294
    %v1667 = vunpack.c.l.b16 %v295
    %v1668 = vunpack.c.h.b16 %v295
    %v1669 = vunpack.c.l.b16 %v296
    %v1670 = vunpack.c.h.b16 %v296
    %v1671 = vunpack.c.l.b16 %v297
    %v1672 = vunpack.c.h.b16 %v297
    %v1673 = vunpack.c.l.b16 %v298
    %v1674 = vunpack.c.l.b16 %v299
    %v1675 = vunpack.c.h.b16 %v299
    %v1676 = vunpack.c.l.b16 %v300
    %v1677 = vunpack.c.h.b16 %v300
    %v1678 = vunpack.c.l.b16 %v301
    %v1679 = vunpack.c.h.b16 %v301
    %v1680 = vunpack.c.l.b16 %v302
    %v1681 = vunpack.c.h.b16 %v302
    %v1682 = vunpack.c.l.b16 %v303
    %v1683 = vunpack.c.h.b16 %v303
    %v1684 = vunpack.c.l.b16 %v304
    %v1685 = vunpack.c.h.b16 %v304
    %v1686 = vunpack.c.l.b16 %v305
    %v1687 = vunpack.c.l.b16 %v306
    %v1688 = vunpack.c.h.b16 %v306
    %v1689 = vunpack.c.l.b16 %v307
    %v1690 = vunpack.c.h.b16 %v307
    %v1691 = vunpack.c.l.b16 %v308
    %v1692 = vunpack.c.h.b16 %v308
    %v1693 = vunpack.c.l.b16 %v309
    %v1694 = vunpack.c.h.b16 %v309
    %v1695 = vunpack.c.l.b16 %v310
    %v1696 = vunpack.c.h.b16 %v310
    %v1697 = vunpack.c.l.b16 %v311
    %v1698 = vunpack.c.h.b16 %v311
    %v1699 = vunpack.c.l.b16 %v312
    %v1700 = vunpack.c.l.b16 %v313
    %v1701 = vunpack.c.h.b16 %v313
    %v1702 = vunpack.c.l.b16 %v314
    %v1703 = vunpack.c.h.b16 %v314
    %v1704 = vunpack.c.l.b16 %v315
    %v1705 = vunpack.c.h.b16 %v315
    %v1706 = vunpack.c.l.b16 %v316
    %v1707 = vunpack.c.h.b16 %v316
    %v1708 = vunpack.c.l.b16 %v317
    %v1709 = vunpack.c.h.b16 %v317
    %v1710 = vunpack.c.l.b16 %v318
    %v1711 = vunpack.c.h.b16 %v318
    %v1712 = vunpack.c.l.b16 %v319
    %v1713 = vunpack.c.l.b16 %v320
    %v1714 = vunpack.c.h.b16 %v320
    %v1715 = vunpack.c.l.b16 %v321
    %v1716 = vunpack.c.h.b16 %v321
    %v1717 = vunpack.c.l.b16 %v322
    %v1718 = vunpack.c.h.b16 %v322
    %v1719 = vunpack.c.l.b16 %v323
    %v1720 = vunpack.c.h.b16 %v323
    %v1721 = vunpack.c.l.b16 %v324
    %v1722 = vunpack.c.h.b16 %v324
    %v1723 = vunpack.c.l.b16 %v325
    %v1724 = vunpack.c.h.b16 %v325
    %v1725 = vunpack.c.l.b16 %v326
    %v1726 = vunpack.c.l.b16 %v327
    %v1727 = vunpack.c.h.b16 %v327
    %v1728 = vunpack.c.l.b16 %v328
    %v1729 = vunpack.c.h.b16 %v328
    %v1730 = vunpack.c.l.b16 %v329
    %v1731 = vunpack.c.h.b16 %v329
    %v1732 = vunpack.c.l.b16 %v330
    %v1733 = vunpack.c.h.b16 %v330
    %v1734 = vunpack.c.l.b16 %v331
    %v1735 = vunpack.c.h.b16 %v331
    %v1736 = vunpack.c.l.b16 %v332
    %v1737 = vunpack.c.h.b16 %v332
    %v1738 = vunpack.c.l.b16 %v333
    %v1739 = vunpack.c.l.b16 %v334
    %v1740 = vunpack.c.h.b16 %v334
    %v1741 = vunpack.c.l.b16 %v335
    %v1742 = vunpack.c.h.b16 %v335
    %v1743 = vunpack.c.l.b16 %v336
    %v1744 = vunpack.c.h.b16 %v336
    %v1745 = vunpack.c.l.b16 %v337
    %v1746 = vunpack.c.h.b16 %v337
    %v1747 = vunpack.c.l.b16 %v338
    %v1748 = vunpack.c.h.b16 %v338
    %v1749 = vunpack.c.l.b16 %v339
    %v1750 = vunpack.c.h.b16 %v339
    %v1751 = vunpack.c.l.b16 %v340
    %v1752 = vunpack.c.l.b16 %v341
    %v1753 = vunpack.c.h.b16 %v341
    %v1754 = vunpack.c.l.b16 %v342
    %v1755 = vunpack.c.h.b16 %v342
    %v1756 = vunpack.c.l.b16 %v343
    %v1757 = vunpack.c.h.b16 %v343
    %v1758 = vunpack.c.l.b16 %v344
    %v1759 = vunpack.c.h.b16 %v344
    %v1760 = vunpack.c.l.b16 %v345
    %v1761 = vunpack.c.h.b16 %v345
    %v1762 = vunpack.c.l.b16 %v346
    %v1763 = vunpack.c.h.b16 %v346
    %v1764 = vunpack.c.l.b16 %v347
    %v1765 = vunpack.c.l.b16 %v348
    %v1766 = vunpack.c.h.b16 %v348
    %v1767 = vunpack.c.l.b16 %v349
    %v1768 = vunpack.c.h.b16 %v349
    %v1769 = vunpack.c.l.b16 %v350
    %v1770 = vunpack.c.h.b16 %v350
    %v1771 = vunpack.c.l.b16 %v351
    %v1772 = vunpack.c.h.b16 %v351
    %v1773 = vunpack.c.l.b16 %v352
    %v1774 = vunpack.c.h.b16 %v352
    %v1775 = vunpack.c.l.b16 %v353
    %v1776 = vunpack.c.h.b16 %v353
    %v1777 = vunpack.c.l.b16 %v354
    %v1778 = vunpack.c.l.b16 %v355
    %v1779 = vunpack.c.h.b16 %v355
    %v1780 = vunpack.c.l.b16 %v356
    %v1781 = vunpack.c.h.b16 %v356
    %v1782 = vunpack.c.l.b16 %v357
    %v1783 = vunpack.c.h.b16 %v357
    %v1784 = vunpack.c.l.b16 %v358
    %v1785 = vunpack.c.h.b16 %v358
    %v1786 = vunpack.c.l.b16 %v359
    %v1787 = vunpack.c.h.b16 %v359
    %v1788 = vunpack.c.l.b16 %v360
    %v1789 = vunpack.c.h.b16 %v360
    %v1790 = vunpack.c.l.b16 %v361
    %v1791 = vunpack.c.l.b16 %v362
    %v1792 = vunpack.c.h.b16 %v362
    %v1793 = vunpack.c.l.b16 %v363
    %v1794 = vunpack.c.h.b16 %v363
    %v1795 = vunpack.c.l.b16 %v364
    %v1796 = vunpack.c.h.b16 %v364
    %v1797 = vunpack.c.l.b16 %v365
    %v1798 = vunpack.c.h.b16 %v365
    %v1799 = vunpack.c.l.b16 %v366
    %v1800 = vunpack.c.h.b16 %v366
    %v1801 = vunpack.c.l.b16 %v367
    %v1802 = vunpack.c.h.b16 %v367
    %v1803 = vunpack.c.l.b16 %v368
    %v1804 = vunpack.c.l.b16 %v369
    %v1805 = vunpack.c.h.b16 %v369
    %v1806 = vunpack.c.l.b16 %v370
    %v1807 = vunpack.c.h.b16 %v370
    %v1808 = vunpack.c.l.b16 %v371
    %v1809 = vunpack.c.h.b16 %v371
    %v1810 = vunpack.c.l.b16 %v372
    %v1811 = vunpack.c.h.b16 %v372
    %v1812 = vunpack.c.l.b16 %v373
    %v1813 = vunpack.c.h.b16 %v373
    %v1814 = vunpack.c.l.b16 %v374
    %v1815 = vunpack.c.h.b16 %v374
    %v1816 = vunpack.c.l.b16 %v375
    %v1817 = vunpack.c.l.b16 %v376
    %v1818 = vunpack.c.h.b16 %v376
    %v1819 = vunpack.c.l.b16 %v377
    %v1820 = vunpack.c.h.b16 %v377
    %v1821 = vunpack.c.l.b16 %v378
    %v1822 = vunpack.c.h.b16 %v378
    %v1823 = vunpack.c.l.b16 %v379
    %v1824 = vunpack.c.h.b16 %v379
    %v1825 = vunpack.c.l.b16 %v380
    %v1826 = vunpack.c.h.b16 %v380
    %v1827 = vunpack.c.l.b16 %v381
    %v1828 = vunpack.c.h.b16 %v381
    %v1829 = vunpack.c.l.b16 %v382
    %v1830 = vunpack.c.l.b16 %v383
    %v1831 = vunpack.c.h.b16 %v383
    %v1832 = vunpack.c.l.b16 %v384
    %v1833 = vunpack.c.h.b16 %v384
    %v1834 = vunpack.c.l.b16 %v385
    %v1835 = vunpack.c.h.b16 %v385
    %v1836 = vunpack.c.l.b16 %v386
    %v1837 = vunpack.c.h.b16 %v386
    %v1838 = vunpack.c.l.b16 %v387
    %v1839 = vunpack.c.h.b16 %v387
    %v1840 = vunpack.c.l.b16 %v388
    %v1841 = vunpack.c.h.b16 %v388
    %v1842 = vunpack.c.l.b16 %v389
    %v1843 = vunpack.c.l.b16 %v390
    %v1844 = vunpack.c.h.b16 %v390
    %v1845 = vunpack.c.l.b16 %v391
    %v1846 = vunpack.c.h.b16 %v391
    %v1847 = vunpack.c.l.b16 %v392
    %v1848 = vunpack.c.h.b16 %v392
    %v1849 = vunpack.c.l.b16 %v393
    %v1850 = vunpack.c.h.b16 %v393
    %v1851 = vunpack.c.l.b16 %v394
    %v1852 = vunpack.c.h.b16 %v394
    %v1853 = vunpack.c.l.b16 %v395
    %v1854 = vunpack.c.h.b16 %v395
    %v1855 = vunpack.c.l.b16 %v396
    %v1856 = vunpack.c.l.b16 %v397
    %v1857 = vunpack.c.h.b16 %v397
    %v1858 = vunpack.c.l.b16 %v398
    %v1859 = vunpack.c.h.b16 %v398
    %v1860 = vunpack.c.l.b16 %v399
    %v1861 = vunpack.c.h.b16 %v399
    %v1862 = vunpack.c.l.b16 %v400
    %v1863 = vunpack.c.h.b16 %v400
    %v1864 = vunpack.c.l.b16 %v401
    %v1865 = vunpack.c.h.b16 %v401
    %v1866 = vunpack.c.l.b16 %v402
    %v1867 = vunpack.c.h.b16 %v402
    %v1868 = vunpack.c.l.b16 %v403
    %v1869 = vunpack.c.l.b16 %v404
    %v1870 = vunpack.c.h.b16 %v404
    %v1871 = vunpack.c.l.b16 %v405
    %v1872 = vunpack.c.h.b16 %v405
    %v1873 = vunpack.c.l.b16 %v406
    %v1874 = vunpack.c.h.b16 %v406
    %v1875 = vunpack.c.l.b16 %v407
    %v1876 = vunpack.c.h.b16 %v407
    %v1877 = vunpack.c.l.b16 %v408
    %v1878 = vunpack.c.h.b16 %v408
    %v1879 = vunpack.c.l.b16 %v409
    %v1880 = vunpack.c.h.b16 %v409
    %v1881 = vunpack.c.l.b16 %v410
    %v1882 = vunpack.c.l.b16 %v411
    %v1883 = vunpack.c.h.b16 %v411
    %v1884 = vunpack.c.l.b16 %v412
    %v1885 = vunpack.c.h.b16 %v412
    %v1886 = vunpack.c.l.b16 %v413
    %v1887 = vunpack.c.h.b16 %v413
    %v1888 = vunpack.c.l.b16 %v414
    %v1889 = vunpack.c.h.b16 %v414
    %v1890 = vunpack.c.l.b16 %v415
    %v1891 = vunpack.c.h.b16 %v415
    %v1892 = vunpack.c.l.b16 %v416
    %v1893 = vunpack.c.h.b16 %v416
    %v1894 = vunpack.c.l.b16 %v417
    %v1895 = vunpack.c.l.b16 %v418
    %v1896 = vunpack.c.h.b16 %v418
    %v1897 = vunpack.c.l.b16 %v419
    %v1898 = vunpack.c.h.b16 %v419
    %v1899 = vunpack.c.l.b16 %v420
    %v1900 = vunpack.c.h.b16 %v420
    %v1901 = vunpack.c.l.b16 %v421
    %v1902 = vunpack.c.h.b16 %v421
    %v1903 = vunpack.c.l.b16 %v422
    %v1904 = vunpack.c.h.b16 %v422
    %v1905 = vunpack.c.l.b16 %v423
    %v1906 = vunpack.c.h.b16 %v423
    %v1907 = vunpack.c.l.b16 %v424
    %v1908 = vunpack.c.l.b16 %v425
    %v1909 = vunpack.c.h.b16 %v425
    %v1910 = vunpack.c.l.b16 %v426
    %v1911 = vunpack.c.h.b16 %v426
    %v1912 = vunpack.c.l.b16 %v427
    %v1913 = vunpack.c.h.b16 %v427
    %v1914 = vunpack.c.l.b16 %v428
    %v1915 = vunpack.c.h.b16 %v428
    %v1916 = vunpack.c.l.b16 %v429
    %v1917 = vunpack.c.h.b16 %v429
    %v1918 = vunpack.c.l.b16 %v430
    %v1919 = vunpack.c.h.b16 %v430
    %v1920 = vunpack.c.l.b16 %v431
    %v1921 = vunpack.c.l.b16 %v432
    %v1922 = vunpack.c.h.b16 %v432
    %v1923 = vunpack.c.l.b16 %v433
    %v1924 = vunpack.c.h.b16 %v433
    %v1925 = vunpack.c.l.b16 %v434
    %v1926 = vunpack.c.h.b16 %v434
    %v1927 = vunpack.c.l.b16 %v435
    %v1928 = vunpack.c.h.b16 %v435
    %v1929 = vunpack.c.l.b16 %v436
    %v1930 = vunpack.c.h.b16 %v436
    %v1931 = vunpack.c.l.b16 %v437
    %v1932 = vunpack.c.h.b16 %v437
    %v1933 = vunpack.c.l.b16 %v438
    %v1934 = vunpack.c.l.b16 %v439
    %v1935 = vunpack.c.h.b16 %v439
    %v1936 = vunpack.c.l.b16 %v440
    %v1937 = vunpack.c.h.b16 %v440
    %v1938 = vunpack.c.l.b16 %v441
    %v1939 = vunpack.c.h.b16 %v441
    %v1940 = vunpack.c.l.b16 %v442
    %v1941 = vunpack.c.h.b16 %v442
    %v1942 = vunpack.c.l.b16 %v443
    %v1943 = vunpack.c.h.b16 %v443
    %v1944 = vunpack.c.l.b16 %v444
    %v1945 = vunpack.c.h.b16 %v444
    %v1946 = vunpack.c.l.b16 %v445
    %v1947 = vunpack.c.l.b16 %v446
    %v1948 = vunpack.c.h.b16 %v446
    %v1949 = vunpack.c.l.b16 %v447
    %v1950 = vunpack.c.h.b16 %v447
    %v1951 = vunpack.c.l.b16 %v448
    %v1952 = vunpack.c.h.b16 %v448
    %v1953 = vunpack.c.l.b16 %v449
    %v1954 = vunpack.c.h.b16 %v449
    %v1955 = vunpack.c.l.b16 %v450
    %v1956 = vunpack.c.h.b16 %v450
    %v1957 = vunpack.c.l.b16 %v451
    %v1958 = vunpack.c.h.b16 %v451
    %v1959 = vunpack.c.l.b16 %v452
    %v1960 = vunpack.c.l.b16 %v453
    %v1961 = vunpack.c.h.b16 %v453
    %v1962 = vunpack.c.l.b16 %v454
    %v1963 = vunpack.c.h.b16 %v454
    %v1964 = vunpack.c.l.b16 %v455
    %v1965 = vunpack.c.h.b16 %v455
    %v1966 = vunpack.c.l.b16 %v456
    %v1967 = vunpack.c.h.b16 %v456
    %v1968 = vunpack.c.l.b16 %v457
    %v1969 = vunpack.c.h.b16 %v457
    %v1970 = vunpack.c.l.b16 %v458
    %v1971 = vunpack.c.h.b16 %v458
    %v1972 = vunpack.c.l.b16 %v459
    %v1973 = vunpack.c.l.b16 %v460
    %v1974 = vunpack.c.h.b16 %v460
    %v1975 = vunpack.c.l.b16 %v461
    %v1976 = vunpack.c.h.b16 %v461
    %v1977 = vunpack.c.l.b16 %v462
    %v1978 = vunpack.c.h.b16 %v462
    %v1979 = vunpack.c.l.b16 %v463
    %v1980 = vunpack.c.h.b16 %v463
    %v1981 = vunpack.c.l.b16 %v464
    %v1982 = vunpack.c.h.b16 %v464
    %v1983 = vunpack.c.l.b16 %v465
    %v1984 = vunpack.c.h.b16 %v465
    %v1985 = vunpack.c.l.b16 %v466
    %v1986 = vunpack.c.l.b16 %v467
    %v1987 = vunpack.c.h.b16 %v467
    %v1988 = vunpack.c.l.b16 %v468
    %v1989 = vunpack.c.h.b16 %v468
    %v1990 = vunpack.c.l.b16 %v469
    %v1991 = vunpack.c.h.b16 %v469
    %v1992 = vunpack.c.l.b16 %v470
    %v1993 = vunpack.c.h.b16 %v470
    %v1994 = vunpack.c.l.b16 %v471
    %v1995 = vunpack.c.h.b16 %v471
    %v1996 = vunpack.c.l.b16 %v472
    %v1997 = vunpack.c.h.b16 %v472
    %v1998 = vunpack.c.l.b16 %v473
    %v1999 = vunpack.c.l.b16 %v474
    %v2000 = vunpack.c.h.b16 %v474
    %v2001 = vunpack.c.l.b16 %v475
    %v2002 = vunpack.c.h.b16 %v475
    %v2003 = vunpack.c.l.b16 %v476
    %v2004 = vunpack.c.h.b16 %v476
    %v2005 = vunpack.c.l.b16 %v477
    %v2006 = vunpack.c.h.b16 %v477
    %v2007 = vunpack.c.l.b16 %v478
    %v2008 = vunpack.c.h.b16 %v478
    %v2009 = vunpack.c.l.b16 %v479
    %v2010 = vunpack.c.h.b16 %v479
    %v2011 = vunpack.c.l.b16 %v480
    %v2012 = vunpack.c.l.b16 %v481
    %v2013 = vunpack.c.h.b16 %v481
    %v2014 = vunpack.c.l.b16 %v482
    %v2015 = vunpack.c.h.b16 %v482
    %v2016 = vunpack.c.l.b16 %v483
    %v2017 = vunpack.c.h.b16 %v483
    %v2018 = vunpack.c.l.b16 %v484
    %v2019 = vunpack.c.h.b16 %v484
    %v2020 = vunpack.c.l.b16 %v485
    %v2021 = vunpack.c.h.b16 %v485
    %v2022 = vunpack.c.l.b16 %v486
    %v2023 = vunpack.c.h.b16 %v486
    %v2024 = vunpack.c.l.b16 %v487
    %v2025 = vunpack.c.l.b16 %v488
    %v2026 = vunpack.c.h.b16 %v488
    %v2027 = vunpack.c.l.b16 %v489
    %v2028 = vunpack.c.h.b16 %v489
    %v2029 = vunpack.c.l.b16 %v490
    %v2030 = vunpack.c.h.b16 %v490
    %v2031 = vunpack.c.l.b16 %v491
    %v2032 = vunpack.c.h.b16 %v491
    %v2033 = vunpack.c.l.b16 %v492
    %v2034 = vunpack.c.h.b16 %v492
    %v2035 = vunpack.c.l.b16 %v493
    %v2036 = vunpack.c.h.b16 %v493
    %v2037 = vunpack.c.l.b16 %v494
    %v2038 = vunpack.c.l.b16 %v495
    %v2039 = vunpack.c.h.b16 %v495
    %v2040 = vunpack.c.l.b16 %v496
    %v2041 = vunpack.c.h.b16 %v496
    %v2042 = vunpack.c.l.b16 %v497
    %v2043 = vunpack.c.h.b16 %v497
    %v2044 = vunpack.c.l.b16 %v498
    %v2045 = vunpack.c.h.b16 %v498
    %v2046 = vunpack.c.l.b16 %v499
    %v2047 = vunpack.c.h.b16 %v499
    %v2048 = vunpack.c.l.b16 %v500
    %v2049 = vunpack.c.h.b16 %v500
    %v2050 = vunpack.c.l.b16 %v501
    %v2051 = vunpack.c.l.b16 %v502
    %v2052 = vunpack.c.h.b16 %v502
    %v2053 = vunpack.c.l.b16 %v503
    %v2054 = vunpack.c.h.b16 %v503
    %v2055 = vunpack.c.l.b16 %v504
    %v2056 = vunpack.c.h.b16 %v504
    %v2057 = vunpack.c.l.b16 %v505
    %v2058 = vunpack.c.h.b16 %v505
    %v2059 = vunpack.c.l.b16 %v506
    %v2060 = vunpack.c.h.b16 %v506
    %v2061 = vunpack.c.l.b16 %v507
    %v2062 = vunpack.c.h.b16 %v507
    %v2063 = vunpack.c.l.b16 %v508
    %v2064 = vunpack.c.l.b16 %v509
    %v2065 = vunpack.c.h.b16 %v509
    %v2066 = vunpack.c.l.b16 %v510
    %v2067 = vunpack.c.h.b16 %v510
    %v2068 = vunpack.c.l.b16 %v511
    %v2069 = vunpack.c.h.b16 %v511
    %v2070 = vunpack.c.l.b16 %v512
    %v2071 = vunpack.c.h.b16 %v512
    %v2072 = vunpack.c.l.b16 %v513
    %v2073 = vunpack.c.h.b16 %v513
    %v2074 = vunpack.c.l.b16 %v514
    %v2075 = vunpack.c.h.b16 %v514
    %v2076 = vunpack.c.l.b16 %v515
    %v2077 = vunpack.c.l.b16 %v516
    %v2078 = vunpack.c.h.b16 %v516
    %v2079 = vunpack.c.l.b16 %v517
    %v2080 = vunpack.c.h.b16 %v517
    %v2081 = vunpack.c.l.b16 %v518
    %v2082 = vunpack.c.h.b16 %v518
    %v2083 = vunpack.c.l.b16 %v519
    %v2084 = vunpack.c.h.b16 %v519
    %v2085 = vunpack.c.l.b16 %v520
    %v2086 = vunpack.c.h.b16 %v520
    %v2087 = vunpack.c.l.b16 %v521
    %v2088 = vunpack.c.h.b16 %v521
    %v2089 = vunpack.c.l.b16 %v522
    %v2090 = vunpack.c.l.b16 %v523
    %v2091 = vunpack.c.h.b16 %v523
    %v2092 = vunpack.c.l.b16 %v524
    %v2093 = vunpack.c.h.b16 %v524
    %v2094 = vunpack.c.l.b16 %v525
    %v2095 = vunpack.c.h.b16 %v525
    %v2096 = vunpack.c.l.b16 %v526
    %v2097 = vunpack.c.h.b16 %v526
    %v2098 = vunpack.c.l.b16 %v527
    %v2099 = vunpack.c.h.b16 %v527
    %v2100 = vunpack.c.l.b16 %v528
    %v2101 = vunpack.c.h.b16 %v528
    %v2102 = vunpack.c.l.b16 %v529
    %v2103 = vunpack.c.l.b16 %v530
    %v2104 = vunpack.c.h.b16 %v530
    %v2105 = vunpack.c.l.b16 %v531
    %v2106 = vunpack.c.h.b16 %v531
    %v2107 = vunpack.c.l.b16 %v532
    %v2108 = vunpack.c.h.b16 %v532
    %v2109 = vunpack.c.l.b16 %v533
    %v2110 = vunpack.c.h.b16 %v533
    %v2111 = vunpack.c.l.b16 %v534
    %v2112 = vunpack.c.h.b16 %v534
    %v2113 = vunpack.c.l.b16 %v535
    %v2114 = vunpack.c.h.b16 %v535
    %v2115 = vunpack.c.l.b16 %v536
    %v2116 = vunpack.c.l.b16 %v537
    %v2117 = vunpack.c.h.b16 %v537
    %v2118 = vunpack.c.l.b16 %v538
    %v2119 = vunpack.c.h.b16 %v538
    %v2120 = vunpack.c.l.b16 %v539
    %v2121 = vunpack.c.h.b16 %v539
    %v2122 = vunpack.c.l.b16 %v540
    %v2123 = vunpack.c.h.b16 %v540
    %v2124 = vunpack.c.l.b16 %v541
    %v2125 = vunpack.c.h.b16 %v541
    %v2126 = vunpack.c.l.b16 %v542
    %v2127 = vunpack.c.h.b16 %v542
    %v2128 = vunpack.c.l.b16 %v543
    %v2129 = vunpack.c.l.b16 %v544
    %v2130 = vunpack.c.h.b16 %v544
    %v2131 = vunpack.c.l.b16 %v545
    %v2132 = vunpack.c.h.b16 %v545
    %v2133 = vunpack.c.l.b16 %v546
    %v2134 = vunpack.c.h.b16 %v546
    %v2135 = vunpack.c.l.b16 %v547
    %v2136 = vunpack.c.h.b16 %v547
    %v2137 = vunpack.c.l.b16 %v548
    %v2138 = vunpack.c.h.b16 %v548
    %v2139 = vunpack.c.l.b16 %v549
    %v2140 = vunpack.c.h.b16 %v549
    %v2141 = vunpack.c.l.b16 %v550
    %v2142 = vunpack.c.l.b16 %v551
    %v2143 = vunpack.c.h.b16 %v551
    %v2144 = vunpack.c.l.b16 %v552
    %v2145 = vunpack.c.h.b16 %v552
    %v2146 = vunpack.c.l.b16 %v553
    %v2147 = vunpack.c.h.b16 %v553
    %v2148 = vunpack.c.l.b16 %v554
    %v2149 = vunpack.c.h.b16 %v554
    %v2150 = vunpack.c.l.b16 %v555
    %v2151 = vunpack.c.h.b16 %v555
    %v2152 = vunpack.c.l.b16 %v556
    %v2153 = vunpack.c.h.b16 %v556
    %v2154 = vunpack.c.l.b16 %v557
    %v2155 = vunpack.c.l.b16 %v558
    %v2156 = vunpack.c.h.b16 %v558
    %v2157 = vunpack.c.l.b16 %v559
    %v2158 = vunpack.c.h.b16 %v559
    %v2159 = vunpack.c.l.b16 %v560
    %v2160 = vunpack.c.h.b16 %v560
    %v2161 = vunpack.c.l.b16 %v561
    %v2162 = vunpack.c.h.b16 %v561
    %v2163 = vunpack.c.l.b16 %v562
    %v2164 = vunpack.c.h.b16 %v562
    %v2165 = vunpack.c.l.b16 %v563
    %v2166 = vunpack.c.h.b16 %v563
    %v2167 = vunpack.c.l.b16 %v564
    %v2168 = vunpack.c.l.b16 %v565
    %v2169 = vunpack.c.h.b16 %v565
    %v2170 = vunpack.c.l.b16 %v566
    %v2171 = vunpack.c.h.b16 %v566
    %v2172 = vunpack.c.l.b16 %v567
    %v2173 = vunpack.c.h.b16 %v567
    %v2174 = vunpack.c.l.b16 %v568
    %v2175 = vunpack.c.h.b16 %v568
    %v2176 = vunpack.c.l.b16 %v569
    %v2177 = vunpack.c.h.b16 %v569
    %v2178 = vunpack.c.l.b16 %v570
    %v2179 = vunpack.c.h.b16 %v570
    %v2180 = vunpack.c.l.b16 %v571
    %v2181 = vunpack.c.l.b16 %v572
    %v2182 = vunpack.c.h.b16 %v572
    %v2183 = vunpack.c.l.b16 %v573
    %v2184 = vunpack.c.h.b16 %v573
    %v2185 = vunpack.c.l.b16 %v574
    %v2186 = vunpack.c.h.b16 %v574
    %v2187 = vunpack.c.l.b16 %v575
    %v2188 = vunpack.c.h.b16 %v575
    %v2189 = vunpack.c.l.b16 %v576
    %v2190 = vunpack.c.h.b16 %v576
    %v2191 = vunpack.c.l.b16 %v577
    %v2192 = vunpack.c.h.b16 %v577
    %v2193 = vunpack.c.l.b16 %v578
    %v2194 = vunpack.c.l.b16 %v579
    %v2195 = vunpack.c.h.b16 %v579
    %v2196 = vunpack.c.l.b16 %v580
    %v2197 = vunpack.c.h.b16 %v580
    %v2198 = vunpack.c.l.b16 %v581
    %v2199 = vunpack.c.h.b16 %v581
    %v2200 = vunpack.c.l.b16 %v582
    %v2201 = vunpack.c.h.b16 %v582
    %v2202 = vunpack.c.l.b16 %v583
    %v2203 = vunpack.c.h.b16 %v583
    %v2204 = vunpack.c.l.b16 %v584
    %v2205 = vunpack.c.h.b16 %v584
    %v2206 = vunpack.c.l.b16 %v585
    %v2207 = vunpack.c.l.b16 %v586
    %v2208 = vunpack.c.h.b16 %v586
    %v2209 = vunpack.c.l.b16 %v587
    %v2210 = vunpack.c.h.b16 %v587
    %v2211 = vunpack.c.l.b16 %v588
    %v2212 = vunpack.c.h.b16 %v588
    %v2213 = vunpack.c.l.b16 %v589
    %v2214 = vunpack.c.h.b16 %v589
    %v2215 = vunpack.c.l.b16 %v590
    %v2216 = vunpack.c.h.b16 %v590
    %v2217 = vunpack.c.l.b16 %v591
    %v2218 = vunpack.c.h.b16 %v591
    %v2219 = vunpack.c.l.b16 %v592
    %v2220 = vunpack.c.l.b16 %v593
    %v2221 = vunpack.c.h.b16 %v593
    %v2222 = vunpack.c.l.b16 %v594
    %v2223 = vunpack.c.h.b16 %v594
    %v2224 = vunpack.c.l.b16 %v595
    %v2225 = vunpack.c.h.b16 %v595
    %v2226 = vunpack.c.l.b16 %v596
    %v2227 = vunpack.c.h.b16 %v596
    %v2228 = vunpack.c.l.b16 %v597
    %v2229 = vunpack.c.h.b16 %v597
    %v2230 = vunpack.c.l.b16 %v598
    %v2231 = vunpack.c.h.b16 %v598
    %v2232 = vunpack.c.l.b16 %v599
    %v2233 = vunpack.c.l.b16 %v600
    %v2234 = vunpack.c.h.b16 %v600
    %v2235 = vunpack.c.l.b16 %v601
    %v2236 = vunpack.c.h.b16 %v601
    %v2237 = vunpack.c.l.b16 %v602
    %v2238 = vunpack.c.h.b16 %v602
    %v2239 = vunpack.c.l.b16 %v603
    %v2240 = vunpack.c.h.b16 %v603
    %v2241 = vunpack.c.l.b16 %v604
    %v2242 = vunpack.c.h.b16 %v604
    %v2243 = vunpack.c.l.b16 %v605
    %v2244 = vunpack.c.h.b16 %v605
    %v2245 = vunpack.c.l.b16 %v606
    %v2246 = vunpack.c.l.b16 %v607
    %v2247 = vunpack.c.h.b16 %v607
    %v2248 = vunpack.c.l.b16 %v608
    %v2249 = vunpack.c.h.b16 %v608
    %v2250 = vunpack.c.l.b16 %v609
    %v2251 = vunpack.c.h.b16 %v609
    %v2252 = vunpack.c.l.b16 %v610
    %v2253 = vunpack.c.h.b16 %v610
    %v2254 = vunpack.c.l.b16 %v611
    %v2255 = vunpack.c.h.b16 %v611
    %v2256 = vunpack.c.l.b16 %v612
    %v2257 = vunpack.c.h.b16 %v612
    %v2258 = vunpack.c.l.b16 %v613
    %v2259 = vpack.c.b16 %v1232, %v1219
    %v2260 = vpack.c.b16 %v1233, %v1220
    %v2261 = vpack.c.b16 %v1234, %v1221
    %v2262 = vpack.c.b16 %v1235, %v1222
    %v2263 = vpack.c.b16 %v1236, %v1223
    %v2264 = vpack.c.b16 %v1237, %v1224
    %v2265 = vpack.c.b16 %v1238, %v1225
    %v2266 = vpack.c.b16 %v1239, %v1226
    %v2267 = vpack.c.b16 %v1240, %v1227
    %v2268 = vpack.c.b16 %v1241, %v1228
    %v2269 = vpack.c.b16 %v1242, %v1229
    %v2270 = vpack.c.b16 %v1243, %v1230
    %v2271 = vpack.c.b16 %v1244, %v1231
    %v2272 = vpack.c.b16 %v1258, %v1245
    %v2273 = vpack.c.b16 %v1259, %v1246
    %v2274 = vpack.c.b16 %v1260, %v1247
    %v2275 = vpack.c.b16 %v1261, %v1248
    %v2276 = vpack.c.b16 %v1262, %v1249
    %v2277 = vpack.c.b16 %v1263, %v1250
    %v2278 = vpack.c.b16 %v1264, %v1251
    %v2279 = vpack.c.b16 %v1265, %v1252
    %v2280 = vpack.c.b16 %v1266, %v1253
    %v2281 = vpack.c.b16 %v1267, %v1254
    %v2282 = vpack.c.b16 %v1268, %v1255
    %v2283 = vpack.c.b16 %v1269, %v1256
    %v2284 = vpack.c.b16 %v1270, %v1257
    %v2285 = vpack.c.b16 %v1284, %v1271
    %v2286 = vpack.c.b16 %v1285, %v1272
    %v2287 = vpack.c.b16 %v1286, %v1273
    %v2288 = vpack.c.b16 %v1287, %v1274
    %v2289 = vpack.c.b16 %v1288, %v1275
    %v2290 = vpack.c.b16 %v1289, %v1276
    %v2291 = vpack.c.b16 %v1290, %v1277
    %v2292 = vpack.c.b16 %v1291, %v1278
    %v2293 = vpack.c.b16 %v1292, %v1279
    %v2294 = vpack.c.b16 %v1293, %v1280
    %v2295 = vpack.c.b16 %v1294, %v1281
    %v2296 = vpack.c.b16 %v1295, %v1282
    %v2297 = vpack.c.b16 %v1296, %v1283
    %v2298 = vpack.c.b16 %v1310, %v1297
    %v2299 = vpack.c.b16 %v1311, %v1298
    %v2300 = vpack.c.b16 %v1312, %v1299
    %v2301 = vpack.c.b16 %v1313, %v1300
    %v2302 = vpack.c.b16 %v1314, %v1301
    %v2303 = vpack.c.b16 %v1315, %v1302
    %v2304 = vpack.c.b16 %v1316, %v1303
    %v2305 = vpack.c.b16 %v1317, %v1304
    %v2306 = vpack.c.b16 %v1318, %v1305
    %v2307 = vpack.c.b16 %v1319, %v1306
    %v2308 = vpack.c.b16 %v1320, %v1307
    %v2309 = vpack.c.b16 %v1321, %v1308
    %v2310 = vpack.c.b16 %v1322, %v1309
    %v2311 = vpack.c.b16 %v1336, %v1323
    %v2312 = vpack.c.b16 %v1337, %v1324
    %v2313 = vpack.c.b16 %v1338, %v1325
    %v2314 = vpack.c.b16 %v1339, %v1326
    %v2315 = vpack.c.b16 %v1340, %v1327
    %v2316 = vpack.c.b16 %v1341, %v1328
    %v2317 = vpack.c.b16 %v1342, %v1329
    %v2318 = vpack.c.b16 %v1343, %v1330
    %v2319 = vpack.c.b16 %v1344, %v1331
    %v2320 = vpack.c.b16 %v1345, %v1332
    %v2321 = vpack.c.b16 %v1346, %v1333
    %v2322 = vpack.c.b16 %v1347, %v1334
    %v2323 = vpack.c.b16 %v1348, %v1335
    %v2324 = vpack.c.b16 %v1362, %v1349
    %v2325 = vpack.c.b16 %v1363, %v1350
    %v2326 = vpack.c.b16 %v1364, %v1351
    %v2327 = vpack.c.b16 %v1365, %v1352
    %v2328 = vpack.c.b16 %v1366, %v1353
    %v2329 = vpack.c.b16 %v1367, %v1354
    %v2330 = vpack.c.b16 %v1368, %v1355
    %v2331 = vpack.c.b16 %v1369, %v1356
    %v2332 = vpack.c.b16 %v1370, %v1357
    %v2333 = vpack.c.b16 %v1371, %v1358
    %v2334 = vpack.c.b16 %v1372, %v1359
    %v2335 = vpack.c.b16 %v1373, %v1360
    %v2336 = vpack.c.b16 %v1374, %v1361
    %v2337 = vpack.c.b16 %v1388, %v1375
    %v2338 = vpack.c.b16 %v1389, %v1376
    %v2339 = vpack.c.b16 %v1390, %v1377
    %v2340 = vpack.c.b16 %v1391, %v1378
    %v2341 = vpack.c.b16 %v1392, %v1379
    %v2342 = vpack.c.b16 %v1393, %v1380
    %v2343 = vpack.c.b16 %v1394, %v1381
    %v2344 = vpack.c.b16 %v1395, %v1382
    %v2345 = vpack.c.b16 %v1396, %v1383
    %v2346 = vpack.c.b16 %v1397, %v1384
    %v2347 = vpack.c.b16 %v1398, %v1385
    %v2348 = vpack.c.b16 %v1399, %v1386
    %v2349 = vpack.c.b16 %v1400, %v1387
    %v2350 = vpack.c.b16 %v1414, %v1401
    %v2351 = vpack.c.b16 %v1415, %v1402
    %v2352 = vpack.c.b16 %v1416, %v1403
    %v2353 = vpack.c.b16 %v1417, %v1404
    %v2354 = vpack.c.b16 %v1418, %v1405
    %v2355 = vpack.c.b16 %v1419, %v1406
    %v2356 = vpack.c.b16 %v1420, %v1407
    %v2357 = vpack.c.b16 %v1421, %v1408
    %v2358 = vpack.c.b16 %v1422, %v1409
    %v2359 = vpack.c.b16 %v1423, %v1410
    %v2360 = vpack.c.b16 %v1424, %v1411
    %v2361 = vpack.c.b16 %v1425, %v1412
    %v2362 = vpack.c.b16 %v1426, %v1413
    %v2363 = vpack.c.b16 %v1440, %v1427
    %v2364 = vpack.c.b16 %v1441, %v1428
    %v2365 = vpack.c.b16 %v1442, %v1429
    %v2366 = vpack.c.b16 %v1443, %v1430
    %v2367 = vpack.c.b16 %v1444, %v1431
    %v2368 = vpack.c.b16 %v1445, %v1432
    %v2369 = vpack.c.b16 %v1446, %v1433
    %v2370 = vpack.c.b16 %v1447, %v1434
    %v2371 = vpack.c.b16 %v1448, %v1435
    %v2372 = vpack.c.b16 %v1449, %v1436
    %v2373 = vpack.c.b16 %v1450, %v1437
    %v2374 = vpack.c.b16 %v1451, %v1438
    %v2375 = vpack.c.b16 %v1452, %v1439
    %v2376 = vpack.c.b16 %v1466, %v1453
    %v2377 = vpack.c.b16 %v1467, %v1454
    %v2378 = vpack.c.b16 %v1468, %v1455
    %v2379 = vpack.c.b16 %v1469, %v1456
    %v2380 = vpack.c.b16 %v1470, %v1457
    %v2381 = vpack.c.b16 %v1471, %v1458
    %v2382 = vpack.c.b16 %v1472, %v1459
    %v2383 = vpack.c.b16 %v1473, %v1460
    %v2384 = vpack.c.b16 %v1474, %v1461
    %v2385 = vpack.c.b16 %v1475, %v1462
    %v2386 = vpack.c.b16 %v1476, %v1463
    %v2387 = vpack.c.b16 %v1477, %v1464
    %v2388 = vpack.c.b16 %v1478, %v1465
    %v2389 = vpack.c.b16 %v1492, %v1479
    %v2390 = vpack.c.b16 %v1493, %v1480
    %v2391 = vpack.c.b16 %v1494, %v1481
    %v2392 = vpack.c.b16 %v1495, %v1482
    %v2393 = vpack.c.b16 %v1496, %v1483
    %v2394 = vpack.c.b16 %v1497, %v1484
    %v2395 = vpack.c.b16 %v1498, %v1485
    %v2396 = vpack.c.b16 %v1499, %v1486
    %v2397 = vpack.c.b16 %v1500, %v1487
    %v2398 = vpack.c.b16 %v1501, %v1488
    %v2399 = vpack.c.b16 %v1502, %v1489
    %v2400 = vpack.c.b16 %v1503, %v1490
    %v2401 = vpack.c.b16 %v1504, %v1491
    %v2402 = vpack.c.b16 %v1518, %v1505
    %v2403 = vpack.c.b16 %v1519, %v1506
    %v2404 = vpack.c.b16 %v1520, %v1507
    %v2405 = vpack.c.b16 %v1521, %v1508
    %v2406 = vpack.c.b16 %v1522, %v1509
    %v2407 = vpack.c.b16 %v1523, %v1510
    %v2408 = vpack.c.b16 %v1524, %v1511
    %v2409 = vpack.c.b16 %v1525, %v1512
    %v2410 = vpack.c.b16 %v1526, %v1513
    %v2411 = vpack.c.b16 %v1527, %v1514
    %v2412 = vpack.c.b16 %v1528, %v1515
    %v2413 = vpack.c.b16 %v1529, %v1516
    %v2414 = vpack.c.b16 %v1530, %v1517
    %v2415 = vpack.c.b16 %v1544, %v1531
    %v2416 = vpack.c.b16 %v1545, %v1532
    %v2417 = vpack.c.b16 %v1546, %v1533
    %v2418 = vpack.c.b16 %v1547, %v1534
    %v2419 = vpack.c.b16 %v1548, %v1535
    %v2420 = vpack.c.b16 %v1549, %v1536
    %v2421 = vpack.c.b16 %v1550, %v1537
    %v2422 = vpack.c.b16 %v1551, %v1538
    %v2423 = vpack.c.b16 %v1552, %v1539
    %v2424 = vpack.c.b16 %v1553, %v1540
    %v2425 = vpack.c.b16 %v1554, %v1541
    %v2426 = vpack.c.b16 %v1555, %v1542
    %v2427 = vpack.c.b16 %v1556, %v1543
    %v2428 = vpack.c.b16 %v1570, %v1557
    %v2429 = vpack.c.b16 %v1571, %v1558
    %v2430 = vpack.c.b16 %v1572, %v1559
    %v2431 = vpack.c.b16 %v1573, %v1560
    %v2432 = vpack.c.b16 %v1574, %v1561
    %v2433 = vpack.c.b16 %v1575, %v1562
    %v2434 = vpack.c.b16 %v1576, %v1563
    %v2435 = vpack.c.b16 %v1577, %v1564
    %v2436 = vpack.c.b16 %v1578, %v1565
    %v2437 = vpack.c.b16 %v1579, %v1566
    %v2438 = vpack.c.b16 %v1580, %v1567
    %v2439 = vpack.c.b16 %v1581, %v1568
    %v2440 = vpack.c.b16 %v1582, %v1569
    %v2441 = vpack.c.b16 %v1596, %v1583
    %v2442 = vpack.c.b16 %v1597, %v1584
    %v2443 = vpack.c.b16 %v1598, %v1585
    %v2444 = vpack.c.b16 %v1599, %v1586
    %v2445 = vpack.c.b16 %v1600, %v1587
    %v2446 = vpack.c.b16 %v1601, %v1588
    %v2447 = vpack.c.b16 %v1602, %v1589
    %v2448 = vpack.c.b16 %v1603, %v1590
    %v2449 = vpack.c.b16 %v1604, %v1591
    %v2450 = vpack.c.b16 %v1605, %v1592
    %v2451 = vpack.c.b16 %v1606, %v1593
    %v2452 = vpack.c.b16 %v1607, %v1594
    %v2453 = vpack.c.b16 %v1608, %v1595
    %v2454 = vpack.c.b16 %v1622, %v1609
    %v2455 = vpack.c.b16 %v1623, %v1610
    %v2456 = vpack.c.b16 %v1624, %v1611
    %v2457 = vpack.c.b16 %v1625, %v1612
    %v2458 = vpack.c.b16 %v1626, %v1613
    %v2459 = vpack.c.b16 %v1627, %v1614
    %v2460 = vpack.c.b16 %v1628, %v1615
    %v2461 = vpack.c.b16 %v1629, %v1616
    %v2462 = vpack.c.b16 %v1630, %v1617
    %v2463 = vpack.c.b16 %v1631, %v1618
    %v2464 = vpack.c.b16 %v1632, %v1619
    %v2465 = vpack.c.b16 %v1633, %v1620
    %v2466 = vpack.c.b16 %v1634, %v1621
    %v2467 = vpack.c.b16 %v1648, %v1635
    %v2468 = vpack.c.b16 %v1649, %v1636
    %v2469 = vpack.c.b16 %v1650, %v1637
    %v2470 = vpack.c.b16 %v1651, %v1638
    %v2471 = vpack.c.b16 %v1652, %v1639
    %v2472 = vpack.c.b16 %v1653, %v1640
    %v2473 = vpack.c.b16 %v1654, %v1641
    %v2474 = vpack.c.b16 %v1655, %v1642
    %v2475 = vpack.c.b16 %v1656, %v1643
    %v2476 = vpack.c.b16 %v1657, %v1644
    %v2477 = vpack.c.b16 %v1658, %v1645
    %v2478 = vpack.c.b16 %v1659, %v1646
    %v2479 = vpack.c.b16 %v1660, %v1647
    %v2480 = vpack.c.b16 %v1674, %v1661
    %v2481 = vpack.c.b16 %v1675, %v1662
    %v2482 = vpack.c.b16 %v1676, %v1663
    %v2483 = vpack.c.b16 %v1677, %v1664
    %v2484 = vpack.c.b16 %v1678, %v1665
    %v2485 = vpack.c.b16 %v1679, %v1666
    %v2486 = vpack.c.b16 %v1680, %v1667
    %v2487 = vpack.c.b16 %v1681, %v1668
    %v2488 = vpack.c.b16 %v1682, %v1669
    %v2489 = vpack.c.b16 %v1683, %v1670
    %v2490 = vpack.c.b16 %v1684, %v1671
    %v2491 = vpack.c.b16 %v1685, %v1672
    %v2492 = vpack.c.b16 %v1686, %v1673
    %v2493 = vpack.c.b16 %v1700, %v1687
    %v2494 = vpack.c.b16 %v1701, %v1688
    %v2495 = vpack.c.b16 %v1702, %v1689
    %v2496 = vpack.c.b16 %v1703, %v1690
    %v2497 = vpack.c.b16 %v1704, %v1691
    %v2498 = vpack.c.b16 %v1705, %v1692
    %v2499 = vpack.c.b16 %v1706, %v1693
    %v2500 = vpack.c.b16 %v1707, %v1694
    %v2501 = vpack.c.b16 %v1708, %v1695
    %v2502 = vpack.c.b16 %v1709, %v1696
    %v2503 = vpack.c.b16 %v1710, %v1697
    %v2504 = vpack.c.b16 %v1711, %v1698
    %v2505 = vpack.c.b16 %v1712, %v1699
    %v2506 = vpack.c.b16 %v1726, %v1713
    %v2507 = vpack.c.b16 %v1727, %v1714
    %v2508 = vpack.c.b16 %v1728, %v1715
    %v2509 = vpack.c.b16 %v1729, %v1716
    %v2510 = vpack.c.b16 %v1730, %v1717
    %v2511 = vpack.c.b16 %v1731, %v1718
    %v2512 = vpack.c.b16 %v1732, %v1719
    %v2513 = vpack.c.b16 %v1733, %v1720
    %v2514 = vpack.c.b16 %v1734, %v1721
    %v2515 = vpack.c.b16 %v1735, %v1722
    %v2516 = vpack.c.b16 %v1736, %v1723
    %v2517 = vpack.c.b16 %v1737, %v1724
    %v2518 = vpack.c.b16 %v1738, %v1725
    %v2519 = vpack.c.b16 %v1752, %v1739
    %v2520 = vpack.c.b16 %v1753, %v1740
    %v2521 = vpack.c.b16 %v1754, %v1741
    %v2522 = vpack.c.b16 %v1755, %v1742
    %v2523 = vpack.c.b16 %v1756, %v1743
    %v2524 = vpack.c.b16 %v1757, %v1744
    %v2525 = vpack.c.b16 %v1758, %v1745
    %v2526 = vpack.c.b16 %v1759, %v1746
    %v2527 = vpack.c.b16 %v1760, %v1747
    %v2528 = vpack.c.b16 %v1761, %v1748
    %v2529 = vpack.c.b16 %v1762, %v1749
    %v2530 = vpack.c.b16 %v1763, %v1750
    %v2531 = vpack.c.b16 %v1764, %v1751
    %v2532 = vpack.c.b16 %v1778, %v1765
    %v2533 = vpack.c.b16 %v1779, %v1766
    %v2534 = vpack.c.b16 %v1780, %v1767
    %v2535 = vpack.c.b16 %v1781, %v1768
    %v2536 = vpack.c.b16 %v1782, %v1769
    %v2537 = vpack.c.b16 %v1783, %v1770
    %v2538 = vpack.c.b16 %v1784, %v1771
    %v2539 = vpack.c.b16 %v1785, %v1772
    %v2540 = vpack.c.b16 %v1786, %v1773
    %v2541 = vpack.c.b16 %v1787, %v1774
    %v2542 = vpack.c.b16 %v1788, %v1775
    %v2543 = vpack.c.b16 %v1789, %v1776
    %v2544 = vpack.c.b16 %v1790, %v1777
    %v2545 = vpack.c.b16 %v1804, %v1791
    %v2546 = vpack.c.b16 %v1805, %v1792
    %v2547 = vpack.c.b16 %v1806, %v1793
    %v2548 = vpack.c.b16 %v1807, %v1794
    %v2549 = vpack.c.b16 %v1808, %v1795
    %v2550 = vpack.c.b16 %v1809, %v1796
    %v2551 = vpack.c.b16 %v1810, %v1797
    %v2552 = vpack.c.b16 %v1811, %v1798
    %v2553 = vpack.c.b16 %v1812, %v1799
    %v2554 = vpack.c.b16 %v1813, %v1800
    %v2555 = vpack.c.b16 %v1814, %v1801
    %v2556 = vpack.c.b16 %v1815, %v1802
    %v2557 = vpack.c.b16 %v1816, %v1803
    %v2558 = vpack.c.b16 %v1830, %v1817
    %v2559 = vpack.c.b16 %v1831, %v1818
    %v2560 = vpack.c.b16 %v1832, %v1819
    %v2561 = vpack.c.b16 %v1833, %v1820
    %v2562 = vpack.c.b16 %v1834, %v1821
    %v2563 = vpack.c.b16 %v1835, %v1822
    %v2564 = vpack.c.b16 %v1836, %v1823
    %v2565 = vpack.c.b16 %v1837, %v1824
    %v2566 = vpack.c.b16 %v1838, %v1825
    %v2567 = vpack.c.b16 %v1839, %v1826
    %v2568 = vpack.c.b16 %v1840, %v1827
    %v2569 = vpack.c.b16 %v1841, %v1828
    %v2570 = vpack.c.b16 %v1842, %v1829
    %v2571 = vpack.c.b16 %v1856, %v1843
    %v2572 = vpack.c.b16 %v1857, %v1844
    %v2573 = vpack.c.b16 %v1858, %v1845
    %v2574 = vpack.c.b16 %v1859, %v1846
    %v2575 = vpack.c.b16 %v1860, %v1847
    %v2576 = vpack.c.b16 %v1861, %v1848
    %v2577 = vpack.c.b16 %v1862, %v1849
    %v2578 = vpack.c.b16 %v1863, %v1850
    %v2579 = vpack.c.b16 %v1864, %v1851
    %v2580 = vpack.c.b16 %v1865, %v1852
    %v2581 = vpack.c.b16 %v1866, %v1853
    %v2582 = vpack.c.b16 %v1867, %v1854
    %v2583 = vpack.c.b16 %v1868, %v1855
    %v2584 = vpack.c.b16 %v1882, %v1869
    %v2585 = vpack.c.b16 %v1883, %v1870
    %v2586 = vpack.c.b16 %v1884, %v1871
    %v2587 = vpack.c.b16 %v1885, %v1872
    %v2588 = vpack.c.b16 %v1886, %v1873
    %v2589 = vpack.c.b16 %v1887, %v1874
    %v2590 = vpack.c.b16 %v1888, %v1875
    %v2591 = vpack.c.b16 %v1889, %v1876
    %v2592 = vpack.c.b16 %v1890, %v1877
    %v2593 = vpack.c.b16 %v1891, %v1878
    %v2594 = vpack.c.b16 %v1892, %v1879
    %v2595 = vpack.c.b16 %v1893, %v1880
    %v2596 = vpack.c.b16 %v1894, %v1881
    %v2597 = vpack.c.b16 %v1908, %v1895
    %v2598 = vpack.c.b16 %v1909, %v1896
    %v2599 = vpack.c.b16 %v1910, %v1897
    %v2600 = vpack.c.b16 %v1911, %v1898
    %v2601 = vpack.c.b16 %v1912, %v1899
    %v2602 = vpack.c.b16 %v1913, %v1900
    %v2603 = vpack.c.b16 %v1914, %v1901
    %v2604 = vpack.c.b16 %v1915, %v1902
    %v2605 = vpack.c.b16 %v1916, %v1903
    %v2606 = vpack.c.b16 %v1917, %v1904
    %v2607 = vpack.c.b16 %v1918, %v1905
    %v2608 = vpack.c.b16 %v1919, %v1906
    %v2609 = vpack.c.b16 %v1920, %v1907
    %v2610 = vpack.c.b16 %v1934, %v1921
    %v2611 = vpack.c.b16 %v1935, %v1922
    %v2612 = vpack.c.b16 %v1936, %v1923
    %v2613 = vpack.c.b16 %v1937, %v1924
    %v2614 = vpack.c.b16 %v1938, %v1925
    %v2615 = vpack.c.b16 %v1939, %v1926
    %v2616 = vpack.c.b16 %v1940, %v1927
    %v2617 = vpack.c.b16 %v1941, %v1928
    %v2618 = vpack.c.b16 %v1942, %v1929
    %v2619 = vpack.c.b16 %v1943, %v1930
    %v2620 = vpack.c.b16 %v1944, %v1931
    %v2621 = vpack.c.b16 %v1945, %v1932
    %v2622 = vpack.c.b16 %v1946, %v1933
    %v2623 = vpack.c.b16 %v1960, %v1947
    %v2624 = vpack.c.b16 %v1961, %v1948
    %v2625 = vpack.c.b16 %v1962, %v1949
    %v2626 = vpack.c.b16 %v1963, %v1950
    %v2627 = vpack.c.b16 %v1964, %v1951
    %v2628 = vpack.c.b16 %v1965, %v1952
    %v2629 = vpack.c.b16 %v1966, %v1953
    %v2630 = vpack.c.b16 %v1967, %v1954
    %v2631 = vpack.c.b16 %v1968, %v1955
    %v2632 = vpack.c.b16 %v1969, %v1956
    %v2633 = vpack.c.b16 %v1970, %v1957
    %v2634 = vpack.c.b16 %v1971, %v1958
    %v2635 = vpack.c.b16 %v1972, %v1959
    %v2636 = vpack.c.b16 %v1986, %v1973
    %v2637 = vpack.c.b16 %v1987, %v1974
    %v2638 = vpack.c.b16 %v1988, %v1975
    %v2639 = vpack.c.b16 %v1989, %v1976
    %v2640 = vpack.c.b16 %v1990, %v1977
    %v2641 = vpack.c.b16 %v1991, %v1978
    %v2642 = vpack.c.b16 %v1992, %v1979
    %v2643 = vpack.c.b16 %v1993, %v1980
    %v2644 = vpack.c.b16 %v1994, %v1981
    %v2645 = vpack.c.b16 %v1995, %v1982
    %v2646 = vpack.c.b16 %v1996, %v1983
    %v2647 = vpack.c.b16 %v1997, %v1984
    %v2648 = vpack.c.b16 %v1998, %v1985
    %v2649 = vpack.c.b16 %v2012, %v1999
    %v2650 = vpack.c.b16 %v2013, %v2000
    %v2651 = vpack.c.b16 %v2014, %v2001
    %v2652 = vpack.c.b16 %v2015, %v2002
    %v2653 = vpack.c.b16 %v2016, %v2003
    %v2654 = vpack.c.b16 %v2017, %v2004
    %v2655 = vpack.c.b16 %v2018, %v2005
    %v2656 = vpack.c.b16 %v2019, %v2006
    %v2657 = vpack.c.b16 %v2020, %v2007
    %v2658 = vpack.c.b16 %v2021, %v2008
    %v2659 = vpack.c.b16 %v2022, %v2009
    %v2660 = vpack.c.b16 %v2023, %v2010
    %v2661 = vpack.c.b16 %v2024, %v2011
    %v2662 = vpack.c.b16 %v2038, %v2025
    %v2663 = vpack.c.b16 %v2039, %v2026
    %v2664 = vpack.c.b16 %v2040, %v2027
    %v2665 = vpack.c.b16 %v2041, %v2028
    %v2666 = vpack.c.b16 %v2042, %v2029
    %v2667 = vpack.c.b16 %v2043, %v2030
    %v2668 = vpack.c.b16 %v2044, %v2031
    %v2669 = vpack.c.b16 %v2045, %v2032
    %v2670 = vpack.c.b16 %v2046, %v2033
    %v2671 = vpack.c.b16 %v2047, %v2034
    %v2672 = vpack.c.b16 %v2048, %v2035
    %v2673 = vpack.c.b16 %v2049, %v2036
    %v2674 = vpack.c.b16 %v2050, %v2037
    %v2675 = vpack.c.b16 %v2064, %v2051
    %v2676 = vpack.c.b16 %v2065, %v2052
    %v2677 = vpack.c.b16 %v2066, %v2053
    %v2678 = vpack.c.b16 %v2067, %v2054
    %v2679 = vpack.c.b16 %v2068, %v2055
    %v2680 = vpack.c.b16 %v2069, %v2056
    %v2681 = vpack.c.b16 %v2070, %v2057
    %v2682 = vpack.c.b16 %v2071, %v2058
    %v2683 = vpack.c.b16 %v2072, %v2059
    %v2684 = vpack.c.b16 %v2073, %v2060
    %v2685 = vpack.c.b16 %v2074, %v2061
    %v2686 = vpack.c.b16 %v2075, %v2062
    %v2687 = vpack.c.b16 %v2076, %v2063
    %v2688 = vpack.c.b16 %v2090, %v2077
    %v2689 = vpack.c.b16 %v2091, %v2078
    %v2690 = vpack.c.b16 %v2092, %v2079
    %v2691 = vpack.c.b16 %v2093, %v2080
    %v2692 = vpack.c.b16 %v2094, %v2081
    %v2693 = vpack.c.b16 %v2095, %v2082
    %v2694 = vpack.c.b16 %v2096, %v2083
    %v2695 = vpack.c.b16 %v2097, %v2084
    %v2696 = vpack.c.b16 %v2098, %v2085
    %v2697 = vpack.c.b16 %v2099, %v2086
    %v2698 = vpack.c.b16 %v2100, %v2087
    %v2699 = vpack.c.b16 %v2101, %v2088
    %v2700 = vpack.c.b16 %v2102, %v2089
    %v2701 = vpack.c.b16 %v2116, %v2103
    %v2702 = vpack.c.b16 %v2117, %v2104
    %v2703 = vpack.c.b16 %v2118, %v2105
    %v2704 = vpack.c.b16 %v2119, %v2106
    %v2705 = vpack.c.b16 %v2120, %v2107
    %v2706 = vpack.c.b16 %v2121, %v2108
    %v2707 = vpack.c.b16 %v2122, %v2109
    %v2708 = vpack.c.b16 %v2123, %v2110
    %v2709 = vpack.c.b16 %v2124, %v2111
    %v2710 = vpack.c.b16 %v2125, %v2112
    %v2711 = vpack.c.b16 %v2126, %v2113
    %v2712 = vpack.c.b16 %v2127, %v2114
    %v2713 = vpack.c.b16 %v2128, %v2115
    %v2714 = vpack.c.b16 %v2142, %v2129
    %v2715 = vpack.c.b16 %v2143, %v2130
    %v2716 = vpack.c.b16 %v2144, %v2131
    %v2717 = vpack.c.b16 %v2145, %v2132
    %v2718 = vpack.c.b16 %v2146, %v2133
    %v2719 = vpack.c.b16 %v2147, %v2134
    %v2720 = vpack.c.b16 %v2148, %v2135
    %v2721 = vpack.c.b16 %v2149, %v2136
    %v2722 = vpack.c.b16 %v2150, %v2137
    %v2723 = vpack.c.b16 %v2151, %v2138
    %v2724 = vpack.c.b16 %v2152, %v2139
    %v2725 = vpack.c.b16 %v2153, %v2140
    %v2726 = vpack.c.b16 %v2154, %v2141
    %v2727 = vpack.c.b16 %v2168, %v2155
    %v2728 = vpack.c.b16 %v2169, %v2156
    %v2729 = vpack.c.b16 %v2170, %v2157
    %v2730 = vpack.c.b16 %v2171, %v2158
    %v2731 = vpack.c.b16 %v2172, %v2159
    %v2732 = vpack.c.b16 %v2173, %v2160
    %v2733 = vpack.c.b16 %v2174, %v2161
    %v2734 = vpack.c.b16 %v2175, %v2162
    %v2735 = vpack.c.b16 %v2176, %v2163
    %v2736 = vpack.c.b16 %v2177, %v2164
    %v2737 = vpack.c.b16 %v2178, %v2165
    %v2738 = vpack.c.b16 %v2179, %v2166
    %v2739 = vpack.c.b16 %v2180, %v2167
    %v2740 = vpack.c.b16 %v2194, %v2181
    %v2741 = vpack.c.b16 %v2195, %v2182
    %v2742 = vpack.c.b16 %v2196, %v2183
    %v2743 = vpack.c.b16 %v2197, %v2184
    %v2744 = vpack.c.b16 %v2198, %v2185
    %v2745 = vpack.c.b16 %v2199, %v2186
    %v2746 = vpack.c.b16 %v2200, %v2187
    %v2747 = vpack.c.b16 %v2201, %v2188
    %v2748 = vpack.c.b16 %v2202, %v2189
    %v2749 = vpack.c.b16 %v2203, %v2190
    %v2750 = vpack.c.b16 %v2204, %v2191
    %v2751 = vpack.c.b16 %v2205, %v2192
    %v2752 = vpack.c.b16 %v2206, %v2193
    %v2753 = vpack.c.b16 %v2220, %v2207
    %v2754 = vpack.c.b16 %v2221, %v2208
    %v2755 = vpack.c.b16 %v2222, %v2209
    %v2756 = vpack.c.b16 %v2223, %v2210
    %v2757 = vpack.c.b16 %v2224, %v2211
    %v2758 = vpack.c.b16 %v2225, %v2212
    %v2759 = vpack.c.b16 %v2226, %v2213
    %v2760 = vpack.c.b16 %v2227, %v2214
    %v2761 = vpack.c.b16 %v2228, %v2215
    %v2762 = vpack.c.b16 %v2229, %v2216
    %v2763 = vpack.c.b16 %v2230, %v2217
    %v2764 = vpack.c.b16 %v2231, %v2218
    %v2765 = vpack.c.b16 %v2232, %v2219
    %v2766 = vpack.c.b16 %v2246, %v2233
    %v2767 = vpack.c.b16 %v2247, %v2234
    %v2768 = vpack.c.b16 %v2248, %v2235
    %v2769 = vpack.c.b16 %v2249, %v2236
    %v2770 = vpack.c.b16 %v2250, %v2237
    %v2771 = vpack.c.b16 %v2251, %v2238
    %v2772 = vpack.c.b16 %v2252, %v2239
    %v2773 = vpack.c.b16 %v2253, %v2240
    %v2774 = vpack.c.b16 %v2254, %v2241
    %v2775 = vpack.c.b16 %v2255, %v2242
    %v2776 = vpack.c.b16 %v2256, %v2243
    %v2777 = vpack.c.b16 %v2257, %v2244
    %v2778 = vpack.c.b16 %v2258, %v2245
    %3299 = vmatprep.subr.bf16.mxu0 %v2260
    %3300 = vmatpush1.bf16.msra.mxu0 %v2259
    %3301 = vmatprep.subr.bf16.mxu0 %v2273
    %3302 = vmatpush1.bf16.msra.mxu0 %v2272
    %3303 = vmatprep.subr.bf16.mxu0 %v2286
    %3304 = vmatpush1.bf16.msra.mxu0 %v2285
    %3305 = vmatprep.subr.bf16.mxu0 %v2299
    %3306 = vmatpush1.bf16.msra.mxu0 %v2298
    %3307 = vmatprep.subr.bf16.mxu0 %v2312
    %3308 = vmatpush1.bf16.msra.mxu0 %v2311
    %3309 = vmatprep.subr.bf16.mxu0 %v2325
    %3310 = vmatpush1.bf16.msra.mxu0 %v2324
    %3311 = vmatprep.subr.bf16.mxu0 %v2338
    %3312 = vmatpush1.bf16.msra.mxu0 %v2337
    %3313 = vmatprep.subr.bf16.mxu0 %v2351
    %3314 = vmatpush1.bf16.msra.mxu0 %v2350
    %3315 = vmatprep.subr.bf16.mxu0 %v2364
    %3316 = vmatpush1.bf16.msra.mxu0 %v2363
    %3317 = vmatprep.subr.bf16.mxu0 %v2377
    %3318 = vmatpush1.bf16.msra.mxu0 %v2376
    %3319 = vmatprep.subr.bf16.mxu0 %v2390
    %3320 = vmatpush1.bf16.msra.mxu0 %v2389
    %3321 = vmatprep.subr.bf16.mxu0 %v2403
    %3322 = vmatpush1.bf16.msra.mxu0 %v2402
    %3323 = vmatprep.subr.bf16.mxu0 %v2416
    %3324 = vmatpush1.bf16.msra.mxu0 %v2415
    %3325 = vmatprep.subr.bf16.mxu0 %v2429
    %3326 = vmatpush1.bf16.msra.mxu0 %v2428
    %3327 = vmatprep.subr.bf16.mxu0 %v2442
    %3328 = vmatpush1.bf16.msra.mxu0 %v2441
    %3329 = vmatprep.subr.bf16.mxu0 %v2455
    %3330 = vmatpush1.bf16.msra.mxu0 %v2454
    %3331 = vmatprep.mubr.bf16.mxu0 %v651
    %3332 = vmatmul.mubr.bf16.gmra.mrb[0].mxu0 %v637
    %v3333 = vpop.f32.mrb[0].mxu0
    %v3334 = vadd.f32 0.0, %v3333
    %v3335 = vpop.f32.mrb[0].mxu0
    %v3336 = vadd.f32 0.0, %v3335
    %v3337 = vpop.f32.mrb[0].mxu0
    %v3338 = vpop.f32.mrb[0].mxu0
    %3339 = vdwg.mxu0
    %3340 = vmatprep.subr.bf16.mxu0 %v2468
    %3341 = vmatpush1.bf16.msra.mxu0 %v2467
    %3342 = vmatprep.subr.bf16.mxu0 %v2481
    %3343 = vmatpush1.bf16.msra.mxu0 %v2480
    %3344 = vmatprep.subr.bf16.mxu0 %v2494
    %3345 = vmatpush1.bf16.msra.mxu0 %v2493
    %3346 = vmatprep.subr.bf16.mxu0 %v2507
    %3347 = vmatpush1.bf16.msra.mxu0 %v2506
    %3348 = vmatprep.subr.bf16.mxu0 %v2520
    %3349 = vmatpush1.bf16.msra.mxu0 %v2519
    %3350 = vmatprep.subr.bf16.mxu0 %v2533
    %3351 = vmatpush1.bf16.msra.mxu0 %v2532
    %3352 = vmatprep.subr.bf16.mxu0 %v2546
    %3353 = vmatpush1.bf16.msra.mxu0 %v2545
    %3354 = vmatprep.subr.bf16.mxu0 %v2559
    %3355 = vmatpush1.bf16.msra.mxu0 %v2558
    %3356 = vmatprep.subr.bf16.mxu0 %v2572
    %3357 = vmatpush1.bf16.msra.mxu0 %v2571
    %3358 = vmatprep.subr.bf16.mxu0 %v2585
    %3359 = vmatpush1.bf16.msra.mxu0 %v2584
    %3360 = vmatprep.subr.bf16.mxu0 %v2598
    %3361 = vmatpush1.bf16.msra.mxu0 %v2597
    %3362 = vmatprep.subr.bf16.mxu0 %v2611
    %3363 = vmatpush1.bf16.msra.mxu0 %v2610
    %3364 = vmatprep.subr.bf16.mxu0 %v2624
    %3365 = vmatpush1.bf16.msra.mxu0 %v2623
    %3366 = vmatprep.subr.bf16.mxu0 %v2637
    %3367 = vmatpush1.bf16.msra.mxu0 %v2636
    %3368 = vmatprep.subr.bf16.mxu0 %v2650
    %3369 = vmatpush1.bf16.msra.mxu0 %v2649
    %3370 = vmatprep.subr.bf16.mxu0 %v2663
    %3371 = vmatpush1.bf16.msra.mxu0 %v2662
    %3372 = vmatprep.mubr.bf16.mxu0 %v653
    %3373 = vmatmul.mubr.bf16.gmra.mrb[0].mxu0 %v652
    %v3374 = vpop.f32.mrb[0].mxu0
    %v3375 = vadd.f32 %v3334, %v3374
    %v3376 = vpop.f32.mrb[0].mxu0
    %v3377 = vadd.f32 %v3336, %v3376
    %v3378 = vpop.f32.mrb[0].mxu0
    %v3379 = vpop.f32.mrb[0].mxu0
    %3380 = vdwg.mxu0
    %3381 = vmatprep.subr.bf16.mxu0 %v2676
    %3382 = vmatpush1.bf16.msra.mxu0 %v2675
    %3383 = vmatprep.subr.bf16.mxu0 %v2689
    %3384 = vmatpush1.bf16.msra.mxu0 %v2688
    %3385 = vmatprep.subr.bf16.mxu0 %v2702
    %3386 = vmatpush1.bf16.msra.mxu0 %v2701
    %3387 = vmatprep.subr.bf16.mxu0 %v2715
    %3388 = vmatpush1.bf16.msra.mxu0 %v2714
    %3389 = vmatprep.subr.bf16.mxu0 %v2728
    %3390 = vmatpush1.bf16.msra.mxu0 %v2727
    %3391 = vmatprep.subr.bf16.mxu0 %v2741
    %3392 = vmatpush1.bf16.msra.mxu0 %v2740
    %3393 = vmatprep.subr.bf16.mxu0 %v2754
    %3394 = vmatpush1.bf16.msra.mxu0 %v2753
    %3395 = vmatprep.subr.bf16.mxu0 %v2767
    %3396 = vmatpush1.bf16.msra.mxu0 %v2766
    %3397 = vmatprep.subr.bf16.mxu0 0
    %3398 = vmatpush1.bf16.msra.mxu0 0
    %3399 = vmatprep.subr.bf16.mxu0 0
    %3400 = vmatpush1.bf16.msra.mxu0 0
    %3401 = vmatprep.subr.bf16.mxu0 0
    %3402 = vmatpush1.bf16.msra.mxu0 0
    %3403 = vmatprep.subr.bf16.mxu0 0
    %3404 = vmatpush1.bf16.msra.mxu0 0
    %3405 = vmatprep.subr.bf16.mxu0 0
    %3406 = vmatpush1.bf16.msra.mxu0 0
    %3407 = vmatprep.subr.bf16.mxu0 0
    %3408 = vmatpush1.bf16.msra.mxu0 0
    %3409 = vmatprep.subr.bf16.mxu0 0
    %3410 = vmatpush1.bf16.msra.mxu0 0
    %3411 = vmatprep.subr.bf16.mxu0 0
    %3412 = vmatpush1.bf16.msra.mxu0 0
    %3413 = vmatprep.mubr.bf16.mxu0 0
    %3414 = vmatmul.mubr.bf16.gmra.mrb[0].mxu0 %v644
    %v3415 = vpop.f32.mrb[0].mxu0
    %v3416 = vadd.f32 %v3375, %v3415
    %v3417 = vpop.f32.mrb[0].mxu0
    %v3418 = vadd.f32 %v3377, %v3417
    %v3419 = vpop.f32.mrb[0].mxu0
    %v3420 = vpop.f32.mrb[0].mxu0
    %3421 = vdwg.mxu0
    %3422 = vmatprep.subr.bf16.mxu0 %v2262
    %3423 = vmatpush1.bf16.msra.mxu0 %v2261
    %3424 = vmatprep.subr.bf16.mxu0 %v2275
    %3425 = vmatpush1.bf16.msra.mxu0 %v2274
    %3426 = vmatprep.subr.bf16.mxu0 %v2288
    %3427 = vmatpush1.bf16.msra.mxu0 %v2287
    %3428 = vmatprep.subr.bf16.mxu0 %v2301
    %3429 = vmatpush1.bf16.msra.mxu0 %v2300
    %3430 = vmatprep.subr.bf16.mxu0 %v2314
    %3431 = vmatpush1.bf16.msra.mxu0 %v2313
    %3432 = vmatprep.subr.bf16.mxu0 %v2327
    %3433 = vmatpush1.bf16.msra.mxu0 %v2326
    %3434 = vmatprep.subr.bf16.mxu0 %v2340
    %3435 = vmatpush1.bf16.msra.mxu0 %v2339
    %3436 = vmatprep.subr.bf16.mxu0 %v2353
    %3437 = vmatpush1.bf16.msra.mxu0 %v2352
    %3438 = vmatprep.subr.bf16.mxu0 %v2366
    %3439 = vmatpush1.bf16.msra.mxu0 %v2365
    %3440 = vmatprep.subr.bf16.mxu0 %v2379
    %3441 = vmatpush1.bf16.msra.mxu0 %v2378
    %3442 = vmatprep.subr.bf16.mxu0 %v2392
    %3443 = vmatpush1.bf16.msra.mxu0 %v2391
    %3444 = vmatprep.subr.bf16.mxu0 %v2405
    %3445 = vmatpush1.bf16.msra.mxu0 %v2404
    %3446 = vmatprep.subr.bf16.mxu0 %v2418
    %3447 = vmatpush1.bf16.msra.mxu0 %v2417
    %3448 = vmatprep.subr.bf16.mxu0 %v2431
    %3449 = vmatpush1.bf16.msra.mxu0 %v2430
    %3450 = vmatprep.subr.bf16.mxu0 %v2444
    %3451 = vmatpush1.bf16.msra.mxu0 %v2443
    %3452 = vmatprep.subr.bf16.mxu0 %v2457
    %3453 = vmatpush1.bf16.msra.mxu0 %v2456
    %3454 = vmatprep.mubr.bf16.mxu0 %v651
    %3455 = vmatmul.mubr.bf16.gmra.mrb[0].mxu0 %v637
    %v3456 = vpop.f32.mrb[0].mxu0
    %v3457 = vadd.f32 0.0, %v3456
    %v3458 = vpop.f32.mrb[0].mxu0
    %v3459 = vadd.f32 0.0, %v3458
    %v3460 = vpop.f32.mrb[0].mxu0
    %v3461 = vpop.f32.mrb[0].mxu0
    %3462 = vdwg.mxu0
    %3463 = vmatprep.subr.bf16.mxu0 %v2470
    %3464 = vmatpush1.bf16.msra.mxu0 %v2469
    %3465 = vmatprep.subr.bf16.mxu0 %v2483
    %3466 = vmatpush1.bf16.msra.mxu0 %v2482
    %3467 = vmatprep.subr.bf16.mxu0 %v2496
    %3468 = vmatpush1.bf16.msra.mxu0 %v2495
    %3469 = vmatprep.subr.bf16.mxu0 %v2509
    %3470 = vmatpush1.bf16.msra.mxu0 %v2508
    %3471 = vmatprep.subr.bf16.mxu0 %v2522
    %3472 = vmatpush1.bf16.msra.mxu0 %v2521
    %3473 = vmatprep.subr.bf16.mxu0 %v2535
    %3474 = vmatpush1.bf16.msra.mxu0 %v2534
    %3475 = vmatprep.subr.bf16.mxu0 %v2548
    %3476 = vmatpush1.bf16.msra.mxu0 %v2547
    %3477 = vmatprep.subr.bf16.mxu0 %v2561
    %3478 = vmatpush1.bf16.msra.mxu0 %v2560
    %3479 = vmatprep.subr.bf16.mxu0 %v2574
    %3480 = vmatpush1.bf16.msra.mxu0 %v2573
    %3481 = vmatprep.subr.bf16.mxu0 %v2587
    %3482 = vmatpush1.bf16.msra.mxu0 %v2586
    %3483 = vmatprep.subr.bf16.mxu0 %v2600
    %3484 = vmatpush1.bf16.msra.mxu0 %v2599
    %3485 = vmatprep.subr.bf16.mxu0 %v2613
    %3486 = vmatpush1.bf16.msra.mxu0 %v2612
    %3487 = vmatprep.subr.bf16.mxu0 %v2626
    %3488 = vmatpush1.bf16.msra.mxu0 %v2625
    %3489 = vmatprep.subr.bf16.mxu0 %v2639
    %3490 = vmatpush1.bf16.msra.mxu0 %v2638
    %3491 = vmatprep.subr.bf16.mxu0 %v2652
    %3492 = vmatpush1.bf16.msra.mxu0 %v2651
    %3493 = vmatprep.subr.bf16.mxu0 %v2665
    %3494 = vmatpush1.bf16.msra.mxu0 %v2664
    %3495 = vmatprep.mubr.bf16.mxu0 %v653
    %3496 = vmatmul.mubr.bf16.gmra.mrb[0].mxu0 %v652
    %v3497 = vpop.f32.mrb[0].mxu0
    %v3498 = vadd.f32 %v3457, %v3497
    %v3499 = vpop.f32.mrb[0].mxu0
    %v3500 = vadd.f32 %v3459, %v3499
    %v3501 = vpop.f32.mrb[0].mxu0
    %v3502 = vpop.f32.mrb[0].mxu0
    %3503 = vdwg.mxu0
    %3504 = vmatprep.subr.bf16.mxu0 %v2678
    %3505 = vmatpush1.bf16.msra.mxu0 %v2677
    %3506 = vmatprep.subr.bf16.mxu0 %v2691
    %3507 = vmatpush1.bf16.msra.mxu0 %v2690
    %3508 = vmatprep.subr.bf16.mxu0 %v2704
    %3509 = vmatpush1.bf16.msra.mxu0 %v2703
    %3510 = vmatprep.subr.bf16.mxu0 %v2717
    %3511 = vmatpush1.bf16.msra.mxu0 %v2716
    %3512 = vmatprep.subr.bf16.mxu0 %v2730
    %3513 = vmatpush1.bf16.msra.mxu0 %v2729
    %3514 = vmatprep.subr.bf16.mxu0 %v2743
    %3515 = vmatpush1.bf16.msra.mxu0 %v2742
    %3516 = vmatprep.subr.bf16.mxu0 %v2756
    %3517 = vmatpush1.bf16.msra.mxu0 %v2755
    %3518 = vmatprep.subr.bf16.mxu0 %v2769
    %3519 = vmatpush1.bf16.msra.mxu0 %v2768
    %3520 = vmatprep.subr.bf16.mxu0 0
    %3521 = vmatpush1.bf16.msra.mxu0 0
    %3522 = vmatprep.subr.bf16.mxu0 0
    %3523 = vmatpush1.bf16.msra.mxu0 0
    %3524 = vmatprep.subr.bf16.mxu0 0
    %3525 = vmatpush1.bf16.msra.mxu0 0
    %3526 = vmatprep.subr.bf16.mxu0 0
    %3527 = vmatpush1.bf16.msra.mxu0 0
    %3528 = vmatprep.subr.bf16.mxu0 0
    %3529 = vmatpush1.bf16.msra.mxu0 0
    %3530 = vmatprep.subr.bf16.mxu0 0
    %3531 = vmatpush1.bf16.msra.mxu0 0
    %3532 = vmatprep.subr.bf16.mxu0 0
    %3533 = vmatpush1.bf16.msra.mxu0 0
    %3534 = vmatprep.subr.bf16.mxu0 0
    %3535 = vmatpush1.bf16.msra.mxu0 0
    %3536 = vmatprep.mubr.bf16.mxu0 0
    %3537 = vmatmul.mubr.bf16.gmra.mrb[0].mxu0 %v644
    %v3538 = vpop.f32.mrb[0].mxu0
    %v3539 = vadd.f32 %v3498, %v3538
    %v3540 = vpop.f32.mrb[0].mxu0
    %v3541 = vadd.f32 %v3500, %v3540
    %v3542 = vpop.f32.mrb[0].mxu0
    %v3543 = vpop.f32.mrb[0].mxu0
    %3544 = vdwg.mxu0
    %3545 = vmatprep.subr.bf16.mxu0 %v2264
    %3546 = vmatpush1.bf16.msra.mxu0 %v2263
    %3547 = vmatprep.subr.bf16.mxu0 %v2277
    %3548 = vmatpush1.bf16.msra.mxu0 %v2276
    %3549 = vmatprep.subr.bf16.mxu0 %v2290
    %3550 = vmatpush1.bf16.msra.mxu0 %v2289
    %3551 = vmatprep.subr.bf16.mxu0 %v2303
    %3552 = vmatpush1.bf16.msra.mxu0 %v2302
    %3553 = vmatprep.subr.bf16.mxu0 %v2316
    %3554 = vmatpush1.bf16.msra.mxu0 %v2315
    %3555 = vmatprep.subr.bf16.mxu0 %v2329
    %3556 = vmatpush1.bf16.msra.mxu0 %v2328
    %3557 = vmatprep.subr.bf16.mxu0 %v2342
    %3558 = vmatpush1.bf16.msra.mxu0 %v2341
    %3559 = vmatprep.subr.bf16.mxu0 %v2355
    %3560 = vmatpush1.bf16.msra.mxu0 %v2354
    %3561 = vmatprep.subr.bf16.mxu0 %v2368
    %3562 = vmatpush1.bf16.msra.mxu0 %v2367
    %3563 = vmatprep.subr.bf16.mxu0 %v2381
    %3564 = vmatpush1.bf16.msra.mxu0 %v2380
    %3565 = vmatprep.subr.bf16.mxu0 %v2394
    %3566 = vmatpush1.bf16.msra.mxu0 %v2393
    %3567 = vmatprep.subr.bf16.mxu0 %v2407
    %3568 = vmatpush1.bf16.msra.mxu0 %v2406
    %3569 = vmatprep.subr.bf16.mxu0 %v2420
    %3570 = vmatpush1.bf16.msra.mxu0 %v2419
    %3571 = vmatprep.subr.bf16.mxu0 %v2433
    %3572 = vmatpush1.bf16.msra.mxu0 %v2432
    %3573 = vmatprep.subr.bf16.mxu0 %v2446
    %3574 = vmatpush1.bf16.msra.mxu0 %v2445
    %3575 = vmatprep.subr.bf16.mxu0 %v2459
    %3576 = vmatpush1.bf16.msra.mxu0 %v2458
    %3577 = vmatprep.mubr.bf16.mxu0 %v651
    %3578 = vmatmul.mubr.bf16.gmra.mrb[0].mxu0 %v637
    %v3579 = vpop.f32.mrb[0].mxu0
    %v3580 = vadd.f32 0.0, %v3579
    %v3581 = vpop.f32.mrb[0].mxu0
    %v3582 = vadd.f32 0.0, %v3581
    %v3583 = vpop.f32.mrb[0].mxu0
    %v3584 = vpop.f32.mrb[0].mxu0
    %3585 = vdwg.mxu0
    %3586 = vmatprep.subr.bf16.mxu0 %v2472
    %3587 = vmatpush1.bf16.msra.mxu0 %v2471
    %3588 = vmatprep.subr.bf16.mxu0 %v2485
    %3589 = vmatpush1.bf16.msra.mxu0 %v2484
    %3590 = vmatprep.subr.bf16.mxu0 %v2498
    %3591 = vmatpush1.bf16.msra.mxu0 %v2497
    %3592 = vmatprep.subr.bf16.mxu0 %v2511
    %3593 = vmatpush1.bf16.msra.mxu0 %v2510
    %3594 = vmatprep.subr.bf16.mxu0 %v2524
    %3595 = vmatpush1.bf16.msra.mxu0 %v2523
    %3596 = vmatprep.subr.bf16.mxu0 %v2537
    %3597 = vmatpush1.bf16.msra.mxu0 %v2536
    %3598 = vmatprep.subr.bf16.mxu0 %v2550
    %3599 = vmatpush1.bf16.msra.mxu0 %v2549
    %3600 = vmatprep.subr.bf16.mxu0 %v2563
    %3601 = vmatpush1.bf16.msra.mxu0 %v2562
    %3602 = vmatprep.subr.bf16.mxu0 %v2576
    %3603 = vmatpush1.bf16.msra.mxu0 %v2575
    %3604 = vmatprep.subr.bf16.mxu0 %v2589
    %3605 = vmatpush1.bf16.msra.mxu0 %v2588
    %3606 = vmatprep.subr.bf16.mxu0 %v2602
    %3607 = vmatpush1.bf16.msra.mxu0 %v2601
    %3608 = vmatprep.subr.bf16.mxu0 %v2615
    %3609 = vmatpush1.bf16.msra.mxu0 %v2614
    %3610 = vmatprep.subr.bf16.mxu0 %v2628
    %3611 = vmatpush1.bf16.msra.mxu0 %v2627
    %3612 = vmatprep.subr.bf16.mxu0 %v2641
    %3613 = vmatpush1.bf16.msra.mxu0 %v2640
    %3614 = vmatprep.subr.bf16.mxu0 %v2654
    %3615 = vmatpush1.bf16.msra.mxu0 %v2653
    %3616 = vmatprep.subr.bf16.mxu0 %v2667
    %3617 = vmatpush1.bf16.msra.mxu0 %v2666
    %3618 = vmatprep.mubr.bf16.mxu0 %v653
    %3619 = vmatmul.mubr.bf16.gmra.mrb[0].mxu0 %v652
    %v3620 = vpop.f32.mrb[0].mxu0
    %v3621 = vadd.f32 %v3580, %v3620
    %v3622 = vpop.f32.mrb[0].mxu0
    %v3623 = vadd.f32 %v3582, %v3622
    %v3624 = vpop.f32.mrb[0].mxu0
    %v3625 = vpop.f32.mrb[0].mxu0
    %3626 = vdwg.mxu0
    %3627 = vmatprep.subr.bf16.mxu0 %v2680
    %3628 = vmatpush1.bf16.msra.mxu0 %v2679
    %3629 = vmatprep.subr.bf16.mxu0 %v2693
    %3630 = vmatpush1.bf16.msra.mxu0 %v2692
    %3631 = vmatprep.subr.bf16.mxu0 %v2706
    %3632 = vmatpush1.bf16.msra.mxu0 %v2705
    %3633 = vmatprep.subr.bf16.mxu0 %v2719
    %3634 = vmatpush1.bf16.msra.mxu0 %v2718
    %3635 = vmatprep.subr.bf16.mxu0 %v2732
    %3636 = vmatpush1.bf16.msra.mxu0 %v2731
    %3637 = vmatprep.subr.bf16.mxu0 %v2745
    %3638 = vmatpush1.bf16.msra.mxu0 %v2744
    %3639 = vmatprep.subr.bf16.mxu0 %v2758
    %3640 = vmatpush1.bf16.msra.mxu0 %v2757
    %3641 = vmatprep.subr.bf16.mxu0 %v2771
    %3642 = vmatpush1.bf16.msra.mxu0 %v2770
    %3643 = vmatprep.subr.bf16.mxu0 0
    %3644 = vmatpush1.bf16.msra.mxu0 0
    %3645 = vmatprep.subr.bf16.mxu0 0
    %3646 = vmatpush1.bf16.msra.mxu0 0
    %3647 = vmatprep.subr.bf16.mxu0 0
    %3648 = vmatpush1.bf16.msra.mxu0 0
    %3649 = vmatprep.subr.bf16.mxu0 0
    %3650 = vmatpush1.bf16.msra.mxu0 0
    %3651 = vmatprep.subr.bf16.mxu0 0
    %3652 = vmatpush1.bf16.msra.mxu0 0
    %3653 = vmatprep.subr.bf16.mxu0 0
    %3654 = vmatpush1.bf16.msra.mxu0 0
    %3655 = vmatprep.subr.bf16.mxu0 0
    %3656 = vmatpush1.bf16.msra.mxu0 0
    %3657 = vmatprep.subr.bf16.mxu0 0
    %3658 = vmatpush1.bf16.msra.mxu0 0
    %3659 = vmatprep.mubr.bf16.mxu0 0
    %3660 = vmatmul.mubr.bf16.gmra.mrb[0].mxu0 %v644
    %v3661 = vpop.f32.mrb[0].mxu0
    %v3662 = vadd.f32 %v3621, %v3661
    %v3663 = vpop.f32.mrb[0].mxu0
    %v3664 = vadd.f32 %v3623, %v3663
    %v3665 = vpop.f32.mrb[0].mxu0
    %v3666 = vpop.f32.mrb[0].mxu0
    %3667 = vdwg.mxu0
    %3668 = vmatprep.subr.bf16.mxu0 %v2266
    %3669 = vmatpush1.bf16.msra.mxu0 %v2265
    %3670 = vmatprep.subr.bf16.mxu0 %v2279
    %3671 = vmatpush1.bf16.msra.mxu0 %v2278
    %3672 = vmatprep.subr.bf16.mxu0 %v2292
    %3673 = vmatpush1.bf16.msra.mxu0 %v2291
    %3674 = vmatprep.subr.bf16.mxu0 %v2305
    %3675 = vmatpush1.bf16.msra.mxu0 %v2304
    %3676 = vmatprep.subr.bf16.mxu0 %v2318
    %3677 = vmatpush1.bf16.msra.mxu0 %v2317
    %3678 = vmatprep.subr.bf16.mxu0 %v2331
    %3679 = vmatpush1.bf16.msra.mxu0 %v2330
    %3680 = vmatprep.subr.bf16.mxu0 %v2344
    %3681 = vmatpush1.bf16.msra.mxu0 %v2343
    %3682 = vmatprep.subr.bf16.mxu0 %v2357
    %3683 = vmatpush1.bf16.msra.mxu0 %v2356
    %3684 = vmatprep.subr.bf16.mxu0 %v2370
    %3685 = vmatpush1.bf16.msra.mxu0 %v2369
    %3686 = vmatprep.subr.bf16.mxu0 %v2383
    %3687 = vmatpush1.bf16.msra.mxu0 %v2382
    %3688 = vmatprep.subr.bf16.mxu0 %v2396
    %3689 = vmatpush1.bf16.msra.mxu0 %v2395
    %3690 = vmatprep.subr.bf16.mxu0 %v2409
    %3691 = vmatpush1.bf16.msra.mxu0 %v2408
    %3692 = vmatprep.subr.bf16.mxu0 %v2422
    %3693 = vmatpush1.bf16.msra.mxu0 %v2421
    %3694 = vmatprep.subr.bf16.mxu0 %v2435
    %3695 = vmatpush1.bf16.msra.mxu0 %v2434
    %3696 = vmatprep.subr.bf16.mxu0 %v2448
    %3697 = vmatpush1.bf16.msra.mxu0 %v2447
    %3698 = vmatprep.subr.bf16.mxu0 %v2461
    %3699 = vmatpush1.bf16.msra.mxu0 %v2460
    %3700 = vmatprep.mubr.bf16.mxu0 %v651
    %3701 = vmatmul.mubr.bf16.gmra.mrb[0].mxu0 %v637
    %v3702 = vpop.f32.mrb[0].mxu0
    %v3703 = vadd.f32 0.0, %v3702
    %v3704 = vpop.f32.mrb[0].mxu0
    %v3705 = vadd.f32 0.0, %v3704
    %v3706 = vpop.f32.mrb[0].mxu0
    %v3707 = vpop.f32.mrb[0].mxu0
    %3708 = vdwg.mxu0
    %3709 = vmatprep.subr.bf16.mxu0 %v2474
    %3710 = vmatpush1.bf16.msra.mxu0 %v2473
    %3711 = vmatprep.subr.bf16.mxu0 %v2487
    %3712 = vmatpush1.bf16.msra.mxu0 %v2486
    %3713 = vmatprep.subr.bf16.mxu0 %v2500
    %3714 = vmatpush1.bf16.msra.mxu0 %v2499
    %3715 = vmatprep.subr.bf16.mxu0 %v2513
    %3716 = vmatpush1.bf16.msra.mxu0 %v2512
    %3717 = vmatprep.subr.bf16.mxu0 %v2526
    %3718 = vmatpush1.bf16.msra.mxu0 %v2525
    %3719 = vmatprep.subr.bf16.mxu0 %v2539
    %3720 = vmatpush1.bf16.msra.mxu0 %v2538
    %3721 = vmatprep.subr.bf16.mxu0 %v2552
    %3722 = vmatpush1.bf16.msra.mxu0 %v2551
    %3723 = vmatprep.subr.bf16.mxu0 %v2565
    %3724 = vmatpush1.bf16.msra.mxu0 %v2564
    %3725 = vmatprep.subr.bf16.mxu0 %v2578
    %3726 = vmatpush1.bf16.msra.mxu0 %v2577
    %3727 = vmatprep.subr.bf16.mxu0 %v2591
    %3728 = vmatpush1.bf16.msra.mxu0 %v2590
    %3729 = vmatprep.subr.bf16.mxu0 %v2604
    %3730 = vmatpush1.bf16.msra.mxu0 %v2603
    %3731 = vmatprep.subr.bf16.mxu0 %v2617
    %3732 = vmatpush1.bf16.msra.mxu0 %v2616
    %3733 = vmatprep.subr.bf16.mxu0 %v2630
    %3734 = vmatpush1.bf16.msra.mxu0 %v2629
    %3735 = vmatprep.subr.bf16.mxu0 %v2643
    %3736 = vmatpush1.bf16.msra.mxu0 %v2642
    %3737 = vmatprep.subr.bf16.mxu0 %v2656
    %3738 = vmatpush1.bf16.msra.mxu0 %v2655
    %3739 = vmatprep.subr.bf16.mxu0 %v2669
    %3740 = vmatpush1.bf16.msra.mxu0 %v2668
    %3741 = vmatprep.mubr.bf16.mxu0 %v653
    %3742 = vmatmul.mubr.bf16.gmra.mrb[0].mxu0 %v652
    %v3743 = vpop.f32.mrb[0].mxu0
    %v3744 = vadd.f32 %v3703, %v3743
    %v3745 = vpop.f32.mrb[0].mxu0
    %v3746 = vadd.f32 %v3705, %v3745
    %v3747 = vpop.f32.mrb[0].mxu0
    %v3748 = vpop.f32.mrb[0].mxu0
    %3749 = vdwg.mxu0
    %3750 = vmatprep.subr.bf16.mxu0 %v2682
    %3751 = vmatpush1.bf16.msra.mxu0 %v2681
    %3752 = vmatprep.subr.bf16.mxu0 %v2695
    %3753 = vmatpush1.bf16.msra.mxu0 %v2694
    %3754 = vmatprep.subr.bf16.mxu0 %v2708
    %3755 = vmatpush1.bf16.msra.mxu0 %v2707
    %3756 = vmatprep.subr.bf16.mxu0 %v2721
    %3757 = vmatpush1.bf16.msra.mxu0 %v2720
    %3758 = vmatprep.subr.bf16.mxu0 %v2734
    %3759 = vmatpush1.bf16.msra.mxu0 %v2733
    %3760 = vmatprep.subr.bf16.mxu0 %v2747
    %3761 = vmatpush1.bf16.msra.mxu0 %v2746
    %3762 = vmatprep.subr.bf16.mxu0 %v2760
    %3763 = vmatpush1.bf16.msra.mxu0 %v2759
    %3764 = vmatprep.subr.bf16.mxu0 %v2773
    %3765 = vmatpush1.bf16.msra.mxu0 %v2772
    %3766 = vmatprep.subr.bf16.mxu0 0
    %3767 = vmatpush1.bf16.msra.mxu0 0
    %3768 = vmatprep.subr.bf16.mxu0 0
    %3769 = vmatpush1.bf16.msra.mxu0 0
    %3770 = vmatprep.subr.bf16.mxu0 0
    %3771 = vmatpush1.bf16.msra.mxu0 0
    %3772 = vmatprep.subr.bf16.mxu0 0
    %3773 = vmatpush1.bf16.msra.mxu0 0
    %3774 = vmatprep.subr.bf16.mxu0 0
    %3775 = vmatpush1.bf16.msra.mxu0 0
    %3776 = vmatprep.subr.bf16.mxu0 0
    %3777 = vmatpush1.bf16.msra.mxu0 0
    %3778 = vmatprep.subr.bf16.mxu0 0
    %3779 = vmatpush1.bf16.msra.mxu0 0
    %3780 = vmatprep.subr.bf16.mxu0 0
    %3781 = vmatpush1.bf16.msra.mxu0 0
    %3782 = vmatprep.mubr.bf16.mxu0 0
    %3783 = vmatmul.mubr.bf16.gmra.mrb[0].mxu0 %v644
    %v3784 = vpop.f32.mrb[0].mxu0
    %v3785 = vadd.f32 %v3744, %v3784
    %v3786 = vpop.f32.mrb[0].mxu0
    %v3787 = vadd.f32 %v3746, %v3786
    %v3788 = vpop.f32.mrb[0].mxu0
    %v3789 = vpop.f32.mrb[0].mxu0
    %3790 = vdwg.mxu0
    %3791 = vmatprep.subr.bf16.mxu0 %v2268
    %3792 = vmatpush1.bf16.msra.mxu0 %v2267
    %3793 = vmatprep.subr.bf16.mxu0 %v2281
    %3794 = vmatpush1.bf16.msra.mxu0 %v2280
    %3795 = vmatprep.subr.bf16.mxu0 %v2294
    %3796 = vmatpush1.bf16.msra.mxu0 %v2293
    %3797 = vmatprep.subr.bf16.mxu0 %v2307
    %3798 = vmatpush1.bf16.msra.mxu0 %v2306
    %3799 = vmatprep.subr.bf16.mxu0 %v2320
    %3800 = vmatpush1.bf16.msra.mxu0 %v2319
    %3801 = vmatprep.subr.bf16.mxu0 %v2333
    %3802 = vmatpush1.bf16.msra.mxu0 %v2332
    %3803 = vmatprep.subr.bf16.mxu0 %v2346
    %3804 = vmatpush1.bf16.msra.mxu0 %v2345
    %3805 = vmatprep.subr.bf16.mxu0 %v2359
    %3806 = vmatpush1.bf16.msra.mxu0 %v2358
    %3807 = vmatprep.subr.bf16.mxu0 %v2372
    %3808 = vmatpush1.bf16.msra.mxu0 %v2371
    %3809 = vmatprep.subr.bf16.mxu0 %v2385
    %3810 = vmatpush1.bf16.msra.mxu0 %v2384
    %3811 = vmatprep.subr.bf16.mxu0 %v2398
    %3812 = vmatpush1.bf16.msra.mxu0 %v2397
    %3813 = vmatprep.subr.bf16.mxu0 %v2411
    %3814 = vmatpush1.bf16.msra.mxu0 %v2410
    %3815 = vmatprep.subr.bf16.mxu0 %v2424
    %3816 = vmatpush1.bf16.msra.mxu0 %v2423
    %3817 = vmatprep.subr.bf16.mxu0 %v2437
    %3818 = vmatpush1.bf16.msra.mxu0 %v2436
    %3819 = vmatprep.subr.bf16.mxu0 %v2450
    %3820 = vmatpush1.bf16.msra.mxu0 %v2449
    %3821 = vmatprep.subr.bf16.mxu0 %v2463
    %3822 = vmatpush1.bf16.msra.mxu0 %v2462
    %3823 = vmatprep.mubr.bf16.mxu0 %v651
    %3824 = vmatmul.mubr.bf16.gmra.mrb[0].mxu0 %v637
    %v3825 = vpop.f32.mrb[0].mxu0
    %v3826 = vadd.f32 0.0, %v3825
    %v3827 = vpop.f32.mrb[0].mxu0
    %v3828 = vadd.f32 0.0, %v3827
    %v3829 = vpop.f32.mrb[0].mxu0
    %v3830 = vpop.f32.mrb[0].mxu0
    %3831 = vdwg.mxu0
    %3832 = vmatprep.subr.bf16.mxu0 %v2476
    %3833 = vmatpush1.bf16.msra.mxu0 %v2475
    %3834 = vmatprep.subr.bf16.mxu0 %v2489
    %3835 = vmatpush1.bf16.msra.mxu0 %v2488
    %3836 = vmatprep.subr.bf16.mxu0 %v2502
    %3837 = vmatpush1.bf16.msra.mxu0 %v2501
    %3838 = vmatprep.subr.bf16.mxu0 %v2515
    %3839 = vmatpush1.bf16.msra.mxu0 %v2514
    %3840 = vmatprep.subr.bf16.mxu0 %v2528
    %3841 = vmatpush1.bf16.msra.mxu0 %v2527
    %3842 = vmatprep.subr.bf16.mxu0 %v2541
    %3843 = vmatpush1.bf16.msra.mxu0 %v2540
    %3844 = vmatprep.subr.bf16.mxu0 %v2554
    %3845 = vmatpush1.bf16.msra.mxu0 %v2553
    %3846 = vmatprep.subr.bf16.mxu0 %v2567
    %3847 = vmatpush1.bf16.msra.mxu0 %v2566
    %3848 = vmatprep.subr.bf16.mxu0 %v2580
    %3849 = vmatpush1.bf16.msra.mxu0 %v2579
    %3850 = vmatprep.subr.bf16.mxu0 %v2593
    %3851 = vmatpush1.bf16.msra.mxu0 %v2592
    %3852 = vmatprep.subr.bf16.mxu0 %v2606
    %3853 = vmatpush1.bf16.msra.mxu0 %v2605
    %3854 = vmatprep.subr.bf16.mxu0 %v2619
    %3855 = vmatpush1.bf16.msra.mxu0 %v2618
    %3856 = vmatprep.subr.bf16.mxu0 %v2632
    %3857 = vmatpush1.bf16.msra.mxu0 %v2631
    %3858 = vmatprep.subr.bf16.mxu0 %v2645
    %3859 = vmatpush1.bf16.msra.mxu0 %v2644
    %3860 = vmatprep.subr.bf16.mxu0 %v2658
    %3861 = vmatpush1.bf16.msra.mxu0 %v2657
    %3862 = vmatprep.subr.bf16.mxu0 %v2671
    %3863 = vmatpush1.bf16.msra.mxu0 %v2670
    %3864 = vmatprep.mubr.bf16.mxu0 %v653
    %3865 = vmatmul.mubr.bf16.gmra.mrb[0].mxu0 %v652
    %v3866 = vpop.f32.mrb[0].mxu0
    %v3867 = vadd.f32 %v3826, %v3866
    %v3868 = vpop.f32.mrb[0].mxu0
    %v3869 = vadd.f32 %v3828, %v3868
    %v3870 = vpop.f32.mrb[0].mxu0
    %v3871 = vpop.f32.mrb[0].mxu0
    %3872 = vdwg.mxu0
    %3873 = vmatprep.subr.bf16.mxu0 %v2684
    %3874 = vmatpush1.bf16.msra.mxu0 %v2683
    %3875 = vmatprep.subr.bf16.mxu0 %v2697
    %3876 = vmatpush1.bf16.msra.mxu0 %v2696
    %3877 = vmatprep.subr.bf16.mxu0 %v2710
    %3878 = vmatpush1.bf16.msra.mxu0 %v2709
    %3879 = vmatprep.subr.bf16.mxu0 %v2723
    %3880 = vmatpush1.bf16.msra.mxu0 %v2722
    %3881 = vmatprep.subr.bf16.mxu0 %v2736
    %3882 = vmatpush1.bf16.msra.mxu0 %v2735
    %3883 = vmatprep.subr.bf16.mxu0 %v2749
    %3884 = vmatpush1.bf16.msra.mxu0 %v2748
    %3885 = vmatprep.subr.bf16.mxu0 %v2762
    %3886 = vmatpush1.bf16.msra.mxu0 %v2761
    %3887 = vmatprep.subr.bf16.mxu0 %v2775
    %3888 = vmatpush1.bf16.msra.mxu0 %v2774
    %3889 = vmatprep.subr.bf16.mxu0 0
    %3890 = vmatpush1.bf16.msra.mxu0 0
    %3891 = vmatprep.subr.bf16.mxu0 0
    %3892 = vmatpush1.bf16.msra.mxu0 0
    %3893 = vmatprep.subr.bf16.mxu0 0
    %3894 = vmatpush1.bf16.msra.mxu0 0
    %3895 = vmatprep.subr.bf16.mxu0 0
    %3896 = vmatpush1.bf16.msra.mxu0 0
    %3897 = vmatprep.subr.bf16.mxu0 0
    %3898 = vmatpush1.bf16.msra.mxu0 0
    %3899 = vmatprep.subr.bf16.mxu0 0
    %3900 = vmatpush1.bf16.msra.mxu0 0
    %3901 = vmatprep.subr.bf16.mxu0 0
    %3902 = vmatpush1.bf16.msra.mxu0 0
    %3903 = vmatprep.subr.bf16.mxu0 0
    %3904 = vmatpush1.bf16.msra.mxu0 0
    %3905 = vmatprep.mubr.bf16.mxu0 0
    %3906 = vmatmul.mubr.bf16.gmra.mrb[0].mxu0 %v644
    %v3907 = vpop.f32.mrb[0].mxu0
    %v3908 = vadd.f32 %v3867, %v3907
    %v3909 = vpop.f32.mrb[0].mxu0
    %v3910 = vadd.f32 %v3869, %v3909
    %v3911 = vpop.f32.mrb[0].mxu0
    %v3912 = vpop.f32.mrb[0].mxu0
    %3913 = vdwg.mxu0
    %3914 = vmatprep.subr.bf16.mxu0 %v2270
    %3915 = vmatpush1.bf16.msra.mxu0 %v2269
    %3916 = vmatprep.subr.bf16.mxu0 %v2283
    %3917 = vmatpush1.bf16.msra.mxu0 %v2282
    %3918 = vmatprep.subr.bf16.mxu0 %v2296
    %3919 = vmatpush1.bf16.msra.mxu0 %v2295
    %3920 = vmatprep.subr.bf16.mxu0 %v2309
    %3921 = vmatpush1.bf16.msra.mxu0 %v2308
    %3922 = vmatprep.subr.bf16.mxu0 %v2322
    %3923 = vmatpush1.bf16.msra.mxu0 %v2321
    %3924 = vmatprep.subr.bf16.mxu0 %v2335
    %3925 = vmatpush1.bf16.msra.mxu0 %v2334
    %3926 = vmatprep.subr.bf16.mxu0 %v2348
    %3927 = vmatpush1.bf16.msra.mxu0 %v2347
    %3928 = vmatprep.subr.bf16.mxu0 %v2361
    %3929 = vmatpush1.bf16.msra.mxu0 %v2360
    %3930 = vmatprep.subr.bf16.mxu0 %v2374
    %3931 = vmatpush1.bf16.msra.mxu0 %v2373
    %3932 = vmatprep.subr.bf16.mxu0 %v2387
    %3933 = vmatpush1.bf16.msra.mxu0 %v2386
    %3934 = vmatprep.subr.bf16.mxu0 %v2400
    %3935 = vmatpush1.bf16.msra.mxu0 %v2399
    %3936 = vmatprep.subr.bf16.mxu0 %v2413
    %3937 = vmatpush1.bf16.msra.mxu0 %v2412
    %3938 = vmatprep.subr.bf16.mxu0 %v2426
    %3939 = vmatpush1.bf16.msra.mxu0 %v2425
    %3940 = vmatprep.subr.bf16.mxu0 %v2439
    %3941 = vmatpush1.bf16.msra.mxu0 %v2438
    %3942 = vmatprep.subr.bf16.mxu0 %v2452
    %3943 = vmatpush1.bf16.msra.mxu0 %v2451
    %3944 = vmatprep.subr.bf16.mxu0 %v2465
    %3945 = vmatpush1.bf16.msra.mxu0 %v2464
    %3946 = vmatprep.mubr.bf16.mxu0 %v651
    %3947 = vmatmul.mubr.bf16.gmra.mrb[0].mxu0 %v637
    %v3948 = vpop.f32.mrb[0].mxu0
    %v3949 = vadd.f32 0.0, %v3948
    %v3950 = vpop.f32.mrb[0].mxu0
    %v3951 = vadd.f32 0.0, %v3950
    %v3952 = vpop.f32.mrb[0].mxu0
    %v3953 = vpop.f32.mrb[0].mxu0
    %3954 = vdwg.mxu0
    %3955 = vmatprep.subr.bf16.mxu0 %v2478
    %3956 = vmatpush1.bf16.msra.mxu0 %v2477
    %3957 = vmatprep.subr.bf16.mxu0 %v2491
    %3958 = vmatpush1.bf16.msra.mxu0 %v2490
    %3959 = vmatprep.subr.bf16.mxu0 %v2504
    %3960 = vmatpush1.bf16.msra.mxu0 %v2503
    %3961 = vmatprep.subr.bf16.mxu0 %v2517
    %3962 = vmatpush1.bf16.msra.mxu0 %v2516
    %3963 = vmatprep.subr.bf16.mxu0 %v2530
    %3964 = vmatpush1.bf16.msra.mxu0 %v2529
    %3965 = vmatprep.subr.bf16.mxu0 %v2543
    %3966 = vmatpush1.bf16.msra.mxu0 %v2542
    %3967 = vmatprep.subr.bf16.mxu0 %v2556
    %3968 = vmatpush1.bf16.msra.mxu0 %v2555
    %3969 = vmatprep.subr.bf16.mxu0 %v2569
    %3970 = vmatpush1.bf16.msra.mxu0 %v2568
    %3971 = vmatprep.subr.bf16.mxu0 %v2582
    %3972 = vmatpush1.bf16.msra.mxu0 %v2581
    %3973 = vmatprep.subr.bf16.mxu0 %v2595
    %3974 = vmatpush1.bf16.msra.mxu0 %v2594
    %3975 = vmatprep.subr.bf16.mxu0 %v2608
    %3976 = vmatpush1.bf16.msra.mxu0 %v2607
    %3977 = vmatprep.subr.bf16.mxu0 %v2621
    %3978 = vmatpush1.bf16.msra.mxu0 %v2620
    %3979 = vmatprep.subr.bf16.mxu0 %v2634
    %3980 = vmatpush1.bf16.msra.mxu0 %v2633
    %3981 = vmatprep.subr.bf16.mxu0 %v2647
    %3982 = vmatpush1.bf16.msra.mxu0 %v2646
    %3983 = vmatprep.subr.bf16.mxu0 %v2660
    %3984 = vmatpush1.bf16.msra.mxu0 %v2659
    %3985 = vmatprep.subr.bf16.mxu0 %v2673
    %3986 = vmatpush1.bf16.msra.mxu0 %v2672
    %3987 = vmatprep.mubr.bf16.mxu0 %v653
    %3988 = vmatmul.mubr.bf16.gmra.mrb[0].mxu0 %v652
    %v3989 = vpop.f32.mrb[0].mxu0
    %v3990 = vadd.f32 %v3949, %v3989
    %v3991 = vpop.f32.mrb[0].mxu0
    %v3992 = vadd.f32 %v3951, %v3991
    %v3993 = vpop.f32.mrb[0].mxu0
    %v3994 = vpop.f32.mrb[0].mxu0
    %3995 = vdwg.mxu0
    %3996 = vmatprep.subr.bf16.mxu0 %v2686
    %3997 = vmatpush1.bf16.msra.mxu0 %v2685
    %3998 = vmatprep.subr.bf16.mxu0 %v2699
    %3999 = vmatpush1.bf16.msra.mxu0 %v2698
    %4000 = vmatprep.subr.bf16.mxu0 %v2712
    %4001 = vmatpush1.bf16.msra.mxu0 %v2711
    %4002 = vmatprep.subr.bf16.mxu0 %v2725
    %4003 = vmatpush1.bf16.msra.mxu0 %v2724
    %4004 = vmatprep.subr.bf16.mxu0 %v2738
    %4005 = vmatpush1.bf16.msra.mxu0 %v2737
    %4006 = vmatprep.subr.bf16.mxu0 %v2751
    %4007 = vmatpush1.bf16.msra.mxu0 %v2750
    %4008 = vmatprep.subr.bf16.mxu0 %v2764
    %4009 = vmatpush1.bf16.msra.mxu0 %v2763
    %4010 = vmatprep.subr.bf16.mxu0 %v2777
    %4011 = vmatpush1.bf16.msra.mxu0 %v2776
    %4012 = vmatprep.subr.bf16.mxu0 0
    %4013 = vmatpush1.bf16.msra.mxu0 0
    %4014 = vmatprep.subr.bf16.mxu0 0
    %4015 = vmatpush1.bf16.msra.mxu0 0
    %4016 = vmatprep.subr.bf16.mxu0 0
    %4017 = vmatpush1.bf16.msra.mxu0 0
    %4018 = vmatprep.subr.bf16.mxu0 0
    %4019 = vmatpush1.bf16.msra.mxu0 0
    %4020 = vmatprep.subr.bf16.mxu0 0
    %4021 = vmatpush1.bf16.msra.mxu0 0
    %4022 = vmatprep.subr.bf16.mxu0 0
    %4023 = vmatpush1.bf16.msra.mxu0 0
    %4024 = vmatprep.subr.bf16.mxu0 0
    %4025 = vmatpush1.bf16.msra.mxu0 0
    %4026 = vmatprep.subr.bf16.mxu0 0
    %4027 = vmatpush1.bf16.msra.mxu0 0
    %4028 = vmatprep.mubr.bf16.mxu0 0
    %4029 = vmatmul.mubr.bf16.gmra.mrb[0].mxu0 %v644
    %v4030 = vpop.f32.mrb[0].mxu0
    %v4031 = vadd.f32 %v3990, %v4030
    %v4032 = vpop.f32.mrb[0].mxu0
    %v4033 = vadd.f32 %v3992, %v4032
    %v4034 = vpop.f32.mrb[0].mxu0
    %v4035 = vpop.f32.mrb[0].mxu0
    %4036 = vdwg.mxu0
    %4037 = vmatprep.subr.bf16.mxu0 0
    %4038 = vmatpush1.bf16.msra.mxu0 %v2271
    %4039 = vmatprep.subr.bf16.mxu0 0
    %4040 = vmatpush1.bf16.msra.mxu0 %v2284
    %4041 = vmatprep.subr.bf16.mxu0 0
    %4042 = vmatpush1.bf16.msra.mxu0 %v2297
    %4043 = vmatprep.subr.bf16.mxu0 0
    %4044 = vmatpush1.bf16.msra.mxu0 %v2310
    %4045 = vmatprep.subr.bf16.mxu0 0
    %4046 = vmatpush1.bf16.msra.mxu0 %v2323
    %4047 = vmatprep.subr.bf16.mxu0 0
    %4048 = vmatpush1.bf16.msra.mxu0 %v2336
    %4049 = vmatprep.subr.bf16.mxu0 0
    %4050 = vmatpush1.bf16.msra.mxu0 %v2349
    %4051 = vmatprep.subr.bf16.mxu0 0
    %4052 = vmatpush1.bf16.msra.mxu0 %v2362
    %4053 = vmatprep.subr.bf16.mxu0 0
    %4054 = vmatpush1.bf16.msra.mxu0 %v2375
    %4055 = vmatprep.subr.bf16.mxu0 0
    %4056 = vmatpush1.bf16.msra.mxu0 %v2388
    %4057 = vmatprep.subr.bf16.mxu0 0
    %4058 = vmatpush1.bf16.msra.mxu0 %v2401
    %4059 = vmatprep.subr.bf16.mxu0 0
    %4060 = vmatpush1.bf16.msra.mxu0 %v2414
    %4061 = vmatprep.subr.bf16.mxu0 0
    %4062 = vmatpush1.bf16.msra.mxu0 %v2427
    %4063 = vmatprep.subr.bf16.mxu0 0
    %4064 = vmatpush1.bf16.msra.mxu0 %v2440
    %4065 = vmatprep.subr.bf16.mxu0 0
    %4066 = vmatpush1.bf16.msra.mxu0 %v2453
    %4067 = vmatprep.subr.bf16.mxu0 0
    %4068 = vmatpush1.bf16.msra.mxu0 %v2466
    %4069 = vmatprep.mubr.bf16.mxu0 %v651
    %4070 = vmatmul.mubr.bf16.gmra.mrb[0].mxu0 %v637
    %v4071 = vpop.f32.mrb[0].mxu0
    %v4072 = vadd.f32 0.0, %v4071
    %v4073 = vpop.f32.mrb[0].mxu0
    %v4074 = vpop.f32.mrb[0].mxu0
    %v4075 = vpop.f32.mrb[0].mxu0
    %4076 = vdwg.mxu0
    %4077 = vmatprep.subr.bf16.mxu0 0
    %4078 = vmatpush1.bf16.msra.mxu0 %v2479
    %4079 = vmatprep.subr.bf16.mxu0 0
    %4080 = vmatpush1.bf16.msra.mxu0 %v2492
    %4081 = vmatprep.subr.bf16.mxu0 0
    %4082 = vmatpush1.bf16.msra.mxu0 %v2505
    %4083 = vmatprep.subr.bf16.mxu0 0
    %4084 = vmatpush1.bf16.msra.mxu0 %v2518
    %4085 = vmatprep.subr.bf16.mxu0 0
    %4086 = vmatpush1.bf16.msra.mxu0 %v2531
    %4087 = vmatprep.subr.bf16.mxu0 0
    %4088 = vmatpush1.bf16.msra.mxu0 %v2544
    %4089 = vmatprep.subr.bf16.mxu0 0
    %4090 = vmatpush1.bf16.msra.mxu0 %v2557
    %4091 = vmatprep.subr.bf16.mxu0 0
    %4092 = vmatpush1.bf16.msra.mxu0 %v2570
    %4093 = vmatprep.subr.bf16.mxu0 0
    %4094 = vmatpush1.bf16.msra.mxu0 %v2583
    %4095 = vmatprep.subr.bf16.mxu0 0
    %4096 = vmatpush1.bf16.msra.mxu0 %v2596
    %4097 = vmatprep.subr.bf16.mxu0 0
    %4098 = vmatpush1.bf16.msra.mxu0 %v2609
    %4099 = vmatprep.subr.bf16.mxu0 0
    %4100 = vmatpush1.bf16.msra.mxu0 %v2622
    %4101 = vmatprep.subr.bf16.mxu0 0
    %4102 = vmatpush1.bf16.msra.mxu0 %v2635
    %4103 = vmatprep.subr.bf16.mxu0 0
    %4104 = vmatpush1.bf16.msra.mxu0 %v2648
    %4105 = vmatprep.subr.bf16.mxu0 0
    %4106 = vmatpush1.bf16.msra.mxu0 %v2661
    %4107 = vmatprep.subr.bf16.mxu0 0
    %4108 = vmatpush1.bf16.msra.mxu0 %v2674
    %4109 = vmatprep.mubr.bf16.mxu0 %v653
    %4110 = vmatmul.mubr.bf16.gmra.mrb[0].mxu0 %v652
    %v4111 = vpop.f32.mrb[0].mxu0
    %v4112 = vadd.f32 %v4072, %v4111
    %v4113 = vpop.f32.mrb[0].mxu0
    %v4114 = vpop.f32.mrb[0].mxu0
    %v4115 = vpop.f32.mrb[0].mxu0
    %4116 = vdwg.mxu0
    %4117 = vmatprep.subr.bf16.mxu0 0
    %4118 = vmatpush1.bf16.msra.mxu0 %v2687
    %4119 = vmatprep.subr.bf16.mxu0 0
    %4120 = vmatpush1.bf16.msra.mxu0 %v2700
    %4121 = vmatprep.subr.bf16.mxu0 0
    %4122 = vmatpush1.bf16.msra.mxu0 %v2713
    %4123 = vmatprep.subr.bf16.mxu0 0
    %4124 = vmatpush1.bf16.msra.mxu0 %v2726
    %4125 = vmatprep.subr.bf16.mxu0 0
    %4126 = vmatpush1.bf16.msra.mxu0 %v2739
    %4127 = vmatprep.subr.bf16.mxu0 0
    %4128 = vmatpush1.bf16.msra.mxu0 %v2752
    %4129 = vmatprep.subr.bf16.mxu0 0
    %4130 = vmatpush1.bf16.msra.mxu0 %v2765
    %4131 = vmatprep.subr.bf16.mxu0 0
    %4132 = vmatpush1.bf16.msra.mxu0 %v2778
    %4133 = vmatprep.subr.bf16.mxu0 0
    %4134 = vmatpush1.bf16.msra.mxu0 0
    %4135 = vmatprep.subr.bf16.mxu0 0
    %4136 = vmatpush1.bf16.msra.mxu0 0
    %4137 = vmatprep.subr.bf16.mxu0 0
    %4138 = vmatpush1.bf16.msra.mxu0 0
    %4139 = vmatprep.subr.bf16.mxu0 0
    %4140 = vmatpush1.bf16.msra.mxu0 0
    %4141 = vmatprep.subr.bf16.mxu0 0
    %4142 = vmatpush1.bf16.msra.mxu0 0
    %4143 = vmatprep.subr.bf16.mxu0 0
    %4144 = vmatpush1.bf16.msra.mxu0 0
    %4145 = vmatprep.subr.bf16.mxu0 0
    %4146 = vmatpush1.bf16.msra.mxu0 0
    %4147 = vmatprep.subr.bf16.mxu0 0
    %4148 = vmatpush1.bf16.msra.mxu0 0
    %4149 = vmatprep.mubr.bf16.mxu0 0
    %4150 = vmatmul.mubr.bf16.gmra.mrb[0].mxu0 %v644
    %v4151 = vpop.f32.mrb[0].mxu0
    %v4152 = vadd.f32 %v4112, %v4151
    %v4153 = vpop.f32.mrb[0].mxu0
    %v4154 = vpop.f32.mrb[0].mxu0
    %v4155 = vpop.f32.mrb[0].mxu0
    %4156 = vdwg.mxu0
    %v4157 = vmul.f32 %v3416, 2.0
    %v4158 = vmul.f32 %v3418, 2.0
    %v4159 = vmul.f32 %v3539, 2.0
    %v4160 = vmul.f32 %v3541, 2.0
    %v4161 = vmul.f32 %v3662, 2.0
    %v4162 = vmul.f32 %v3664, 2.0
    %v4163 = vmul.f32 %v3785, 2.0
    %v4164 = vmul.f32 %v3787, 2.0
    %v4165 = vmul.f32 %v3908, 2.0
    %v4166 = vmul.f32 %v3910, 2.0
    %v4167 = vmul.f32 %v4031, 2.0
    %v4168 = vmul.f32 %v4033, 2.0
    %v4169 = vmul.f32 %v4152, 2.0
    %v4170 = vld [vmem:[#allocation5] sm:$0xff]
    %v4171 = vld [vmem:[#allocation5 + $0x8] sm:$0xff]
    %v4172 = vld [vmem:[#allocation5 + $0x10] sm:$0xff]
    %v4173 = vld [vmem:[#allocation5 + $0x18] sm:$0x3]
    %v4187 = vcombine.low %v4157, %v4158
    %v4188 = vcombine.low %v4159, %v4160
    %v4190 = vunpack.c.l.s4 1983009808
    %v4191 = vunpack.c.0.s8 %v4190
    %v4192 = vlaneseq
    %v4193 = vshrl.u32 %v4192, 7
    %v4194 = vsub.s32 %v4191, %v4193
    %v4195 = vrot.slane %v4187, %v4194
    %v4197 = vunpack.c.l.s4 1983009808
    %v4198 = vunpack.c.0.s8 %v4197
    %v4199 = vlaneseq
    %v4200 = vshrl.u32 %v4199, 7
    %v4201 = vsub.s32 %v4198, %v4200
    %v4202 = vrot.slane %v4188, %v4201
    %v4203 = vcombine.low %v4195, %v4202
    %v4204 = vcombine.low %v4161, %v4162
    %v4205 = vcombine.low %v4163, %v4164
    %v4207 = vunpack.c.l.s4 1983009808
    %v4208 = vunpack.c.0.s8 %v4207
    %v4209 = vlaneseq
    %v4210 = vshrl.u32 %v4209, 7
    %v4211 = vsub.s32 %v4208, %v4210
    %v4212 = vrot.slane %v4204, %v4211
    %v4214 = vunpack.c.l.s4 1983009808
    %v4215 = vunpack.c.0.s8 %v4214
    %v4216 = vlaneseq
    %v4217 = vshrl.u32 %v4216, 7
    %v4218 = vsub.s32 %v4215, %v4217
    %v4219 = vrot.slane %v4205, %v4218
    %v4220 = vcombine.low %v4212, %v4219
    %v4221 = vcombine.low %v4165, %v4166
    %v4222 = vcombine.low %v4167, %v4168
    %v4224 = vunpack.c.l.s4 1983009808
    %v4225 = vunpack.c.0.s8 %v4224
    %v4226 = vlaneseq
    %v4227 = vshrl.u32 %v4226, 7
    %v4228 = vsub.s32 %v4225, %v4227
    %v4229 = vrot.slane %v4221, %v4228
    %v4231 = vunpack.c.l.s4 1983009808
    %v4232 = vunpack.c.0.s8 %v4231
    %v4233 = vlaneseq
    %v4234 = vshrl.u32 %v4233, 7
    %v4235 = vsub.s32 %v4232, %v4234
    %v4236 = vrot.slane %v4222, %v4235
    %v4237 = vcombine.low %v4229, %v4236
    %v4239 = vunpack.c.l.s4 1983009808
    %v4240 = vunpack.c.0.s8 %v4239
    %v4241 = vlaneseq
    %v4242 = vshrl.u32 %v4241, 7
    %v4243 = vsub.s32 %v4240, %v4242
    %v4244 = vrot.slane %v4169, %v4243
    %v4249 = vmul.f32 %v4170, %v4203
    %v4250 = vmul.f32 %v4171, %v4220
    %v4251 = vmul.f32 %v4172, %v4237
    %v4252 = vmul.f32 %v4173, %v4244
    %4253 = vst [vmem:[#allocation8] sm:$0xff] %v4249
    %4254 = vst [vmem:[#allocation8 + $0x8] sm:$0xff] %v4250
    %4255 = vst [vmem:[#allocation8 + $0x10] sm:$0xff] %v4251
    %4256 = vst [vmem:[#allocation8 + $0x18] sm:$0x3] %v4252
    // Predicated region
    $region26: #{tpu_custom_call.1} parent=1 // pred_check
      _
    $region27: #{tpu_custom_call.1} parent=1 // pred_check_branch
      %4258 = sbr.rel (0) target = $region29
    $region28: #{tpu_custom_call.1} parent=1 // pred_region
      %s4260 = ssub.s32 416, 416
      %4261 = vsyncadd [#allocation4], %s4260
      %s4263 = sshll.u32 [#allocation8], 4
      %s4264 = int_to_ptr.vmem [resolvable:$true] %s4263
      %4266 = dma.vmem_to_hbm [thread:$0]  %s4264, 416, %s3, [#allocation4]
    $region29: #{tpu_custom_call.1} parent=1 // pred_fallthru
      _
    // Predicated region
    $region30: #{tpu_custom_call.1} parent=1 // pred_check
      _
    $region31: #{tpu_custom_call.1} parent=1 // pred_check_branch
      %4268 = sbr.rel (0) target = $region33
    $region32: #{tpu_custom_call.1} parent=1 // pred_region
      %4269 = dma.done [#allocation4], 416
    $region33: #{tpu_custom_call.1} parent=1 // pred_fallthru
      _
    %4270 = vsyncpa [#allocation3], 1
    %4271 = vsyncpa [#allocation6], 1
    %4272 = vsyncpa [#allocation4], 1

</llo_original>
